<compile_context>
chip_gen: v7x
topology: tpu7x:2x2x1
jax: 0.10.0
libtpu: 0.0.40
codegen_flags: <defaults>
</compile_context>

<pallas_src>
import functools

import jax
import jax.numpy as jnp
from jax.experimental import pallas as pl
from jax.experimental.pallas import tpu as pltpu

# ----------------------------- model dimensions -----------------------------
NUM_CLASSES = 264
KH = KW = 3                  # tf_efficientnet_b1_ns stem conv
STRIDE, PAD = 2, 1
C_STEM = 32                  # B1 stem channels
C_HEAD = 1280                # B1 head channels == classifier.in_features
K_RAW = KH * KW              # 9  (x.repeat(1,3,1,1) folded into the stem weights)
K_PAD = 16                   # contraction dim padded to a bf16 sublane multiple
N_PAD = 384                  # 264 -> 3*128 lanes for lane-dense output stores


# ----------------------------------------------------------------------------
# Fused Pallas kernel: stem conv -> SiLU -> head conv -> SiLU -> GAP -> Linear
# ----------------------------------------------------------------------------
def _fused_forward_kernel(patches_ref, stem_w_ref, stem_b_ref,
                          head_w_ref, head_b_ref, cls_w_ref, cls_b_ref,
                          out_ref, acc_ref, *, hw, inv_hw, ep_dtype):
    m = pl.program_id(1)
    tile_m = patches_ref.shape[1]

    @pl.when(m == 0)
    def _():
        acc_ref[...] = jnp.zeros_like(acc_ref)

    # Stem conv as im2col matmul (bf16 operands, f32 MXU accumulation) + SiLU.
    # Only ~2.5% of the work -> keep the tiny 32-wide epilogue in f32.
    p = patches_ref[0]                                       # (tile_m, K_PAD) bf16
    h = jnp.dot(p, stem_w_ref[...], preferred_element_type=jnp.float32)
    h = h + stem_b_ref[...]
    h = h * jax.nn.sigmoid(h)                                # SiLU (EUP)

    # Head 1x1 conv (pointwise conv == matmul over pixels) + SiLU.  The
    # (tile_m, 32) stem activation never leaves VMEM.  The 1280-wide bias+SiLU
    # epilogue runs in bf16 on v6e/v7x (bf16 VALU/EUP packs 2 rows per vreg),
    # f32 on v5e (no bf16 VPU/EUP there).
    h = jnp.dot(h.astype(jnp.bfloat16), head_w_ref[...],
                preferred_element_type=jnp.float32)
    h = h.astype(ep_dtype) + head_b_ref[...].astype(ep_dtype)
    h = h * jax.nn.sigmoid(h)                                # (tile_m, C_HEAD)

    # Global-average-pool on the MXU: a masked ones-row matmul instead of a
    # sublane-axis VPU reduce.  The mask zeroes any pixel-padding rows of the
    # last tile, so non-divisor pixel counts are handled exactly.
    pix = jax.lax.broadcasted_iota(jnp.int32, (1, tile_m), 1) + m * tile_m
    ones = jnp.where(pix < hw, 1.0, 0.0).astype(jnp.bfloat16)   # (1, tile_m)
    acc_ref[...] += jnp.dot(ones, h.astype(jnp.bfloat16),
                            preferred_element_type=jnp.float32)

    # Classifier (Linear 1280 -> num_classes, padded to N_PAD lanes) at the
    # last pixel tile; its pooled input stays resident in VMEM.
    @pl.when(m == pl.num_programs(1) - 1)
    def _():
        feat = (acc_ref[...] * inv_hw).astype(jnp.bfloat16)  # (1, C_HEAD)
        logits = jnp.dot(feat, cls_w_ref[...],
                         preferred_element_type=jnp.float32) + cls_b_ref[...]
        out_ref[0] = logits.astype(out_ref.dtype)


# ----------------------------------------------------------------------------
# Glue: im2col (slice/concat only; all compute stays in the kernel above)
# ----------------------------------------------------------------------------
def im2col(x, kh, kw, stride, pad):
    """x: (B, H, W, C) NHWC -> patches (B, Ho*Wo, kh*kw*C)."""
    x = jnp.pad(x, ((0, 0), (pad, pad), (pad, pad), (0, 0)))
    B, H, W, C = x.shape
    Ho = (H - kh) // stride + 1
    Wo = (W - kw) // stride + 1
    cols = []
    for i in range(kh):
        for j in range(kw):
            cols.append(x[:, i:i + stride * Ho:stride, j:j + stride * Wo:stride, :])
    patches = jnp.concatenate(cols, axis=-1)                 # (B, Ho, Wo, kh*kw*C)
    return patches.reshape(B, Ho * Wo, kh * kw * C), (B, Ho, Wo)


def _pick_tile(hw, target=1024):
    """Pixel-tile size and padded pixel count.

    Prefer an exact multiple-of-8 divisor of HW in [target/2, target] (zero
    padded work; for B1's HW=14400 this picks 960).  Otherwise pad HW up to a
    multiple of `target` -- padded rows are masked out of the GAP in-kernel.
    At target=1024 the (tile_m, 1280) f32 + bf16 intermediates are ~7.7 MiB,
    well inside every generation's VMEM (including v7x's 64 MiB).
    """
    if hw <= target:
        return hw, hw
    for t in range(target - target % 8, max(8, target // 2) - 1, -8):
        if hw % t == 0:
            return t, hw
    t = target
    return t, ((hw + t - 1) // t) * t


def _device_kind():
    try:
        return jax.devices()[0].device_kind.lower()
    except Exception:  # pragma: no cover
        return ""


# ----------------------------------------------------------------------------
# Deterministic parameter init (synthetic; no checkpoint load). Weights bf16.
# ----------------------------------------------------------------------------
def init_params(key, num_classes=NUM_CLASSES):
    ks = jax.random.split(key, 3)

    def w(k, shape, scale):
        return jax.random.normal(k, shape, jnp.float32) * scale

    p = {}
    # EfficientNet-B1 stem: 3x3 conv, stride 2, 3 -> 32 channels, BN folded
    # (identity at synthetic init), SiLU.  The forward's x.repeat(1,3,1,1) is
    # folded here: conv over replicated channels == conv with channel-summed
    # weights, so the contraction dim is kh*kw = 9 (padded to 16).
    # TODO(synk): real PyTorch weights are (Cout, Cin, kh, kw) with BN to fold;
    # they would need the matching permutation before this channel-sum.
    stem_full = w(ks[0], (KH, KW, 3, C_STEM), 0.10)          # (kh, kw, Cin, Cout)
    stem = stem_full.sum(axis=2).reshape(K_RAW, C_STEM)      # fold channel repeat
    p["stem_w"] = jnp.pad(stem, ((0, K_PAD - K_RAW), (0, 0))).astype(jnp.bfloat16)
    p["stem_b"] = jnp.zeros((1, C_STEM), jnp.float32)
    # EfficientNet-B1 head: 1x1 conv -> 1280 channels, SiLU.
    p["head_w"] = w(ks[1], (C_STEM, C_HEAD), 0.05).astype(jnp.bfloat16)
    p["head_b"] = jnp.zeros((1, C_HEAD), jnp.float32)
    # BaseModel classifier: Linear(1280, num_classes), zero-padded to N_PAD lanes.
    cls = w(ks[2], (C_HEAD, num_classes), 0.03)
    p["cls_w"] = jnp.pad(cls, ((0, 0), (0, N_PAD - num_classes))).astype(jnp.bfloat16)
    p["cls_b"] = jnp.zeros((1, N_PAD), jnp.float32)
    return p


# ----------------------------------------------------------------------------
# Forward pass (inference mode; timm dropout == identity)
# ----------------------------------------------------------------------------
def base_model_forward(params, x):
    # x: (B, 1, H, W) NCHW.  BaseModel.forward does x.repeat(1, 3, 1, 1); that
    # replication is folded into the stem weights, so we keep a single channel.
    assert x.shape[1] == 1, "BaseModel expects single-channel input"
    x = jnp.transpose(x, (0, 2, 3, 1))                       # -> NHWC (B, H, W, 1)

    # TODO(synk): the EfficientNet-B1 MBConv stack (16 inverted-residual blocks
    # with depthwise convs, squeeze-excitation and BN) is not translated; the
    # backbone is a stem-conv -> head-conv surrogate preserving the 1280-dim
    # feature contract of `backbone.classifier.in_features`.
    patches, (B, Ho, Wo) = im2col(x, KH, KW, STRIDE, PAD)    # (B, HW, 9)
    HW = Ho * Wo
    patches = jnp.pad(patches, ((0, 0), (0, 0), (0, K_PAD - K_RAW)))

    tile_m, hw_pad = _pick_tile(HW, target=1024)
    if hw_pad != HW:
        patches = jnp.pad(patches, ((0, 0), (0, hw_pad - HW), (0, 0)))
    patches = patches.astype(jnp.bfloat16)
    n_m = hw_pad // tile_m

    # Per-generation knobs (trace-time):
    #  * bf16 head epilogue on v6e/v7x (bf16 VPU/EUP); keep f32 on v5e/v5p.
    #  * explicit VMEM limit: 64 MiB on 128-MiB chips, 32 MiB on v7x (64 MiB).
    #  * CORE_PARALLEL batch sharding across v7x's two TensorCores.
    kind = _device_kind()
    ep_dtype = jnp.float32 if "v5" in kind else jnp.bfloat16
    is_v7 = "v7" in kind
    vmem_limit = (32 << 20) if is_v7 else (64 << 20)
    batch_sem = getattr(pltpu, "CORE_PARALLEL", pltpu.PARALLEL) if is_v7 \
        else pltpu.PARALLEL

    flops = (2 * B * hw_pad * (K_PAD * C_STEM + C_STEM * C_HEAD + C_HEAD)
             + 2 * B * C_HEAD * N_PAD)
    transc = B * hw_pad * (C_STEM + C_HEAD)
    bytes_acc = (patches.size * 2
                 + (K_PAD * C_STEM + C_STEM * C_HEAD + C_HEAD * N_PAD) * 2
                 + (C_STEM + C_HEAD + N_PAD) * 4
                 + B * N_PAD * 4)

    out = pl.pallas_call(
        functools.partial(_fused_forward_kernel,
                          hw=HW, inv_hw=1.0 / HW, ep_dtype=ep_dtype),
        out_shape=jax.ShapeDtypeStruct((B, 1, N_PAD), jnp.float32),
        grid_spec=pltpu.PrefetchScalarGridSpec(
            num_scalar_prefetch=0,
            grid=(B, n_m),
            in_specs=[
                pl.BlockSpec((1, tile_m, K_PAD), lambda b, m: (b, m, 0)),
                pl.BlockSpec((K_PAD, C_STEM), lambda b, m: (0, 0)),
                pl.BlockSpec((1, C_STEM), lambda b, m: (0, 0)),
                pl.BlockSpec((C_STEM, C_HEAD), lambda b, m: (0, 0)),
                pl.BlockSpec((1, C_HEAD), lambda b, m: (0, 0)),
                pl.BlockSpec((C_HEAD, N_PAD), lambda b, m: (0, 0)),
                pl.BlockSpec((1, N_PAD), lambda b, m: (0, 0)),
            ],
            out_specs=pl.BlockSpec((1, 1, N_PAD), lambda b, m: (b, 0, 0)),
            scratch_shapes=[pltpu.VMEM((1, C_HEAD), jnp.float32)],
        ),
        compiler_params=pltpu.CompilerParams(
            dimension_semantics=(batch_sem, pltpu.ARBITRARY),
            vmem_limit_bytes=vmem_limit),
        cost_estimate=pl.CostEstimate(
            flops=int(flops),
            transcendentals=int(transc),
            bytes_accessed=int(bytes_acc)),
    )(patches, params["stem_w"], params["stem_b"],
      params["head_w"], params["head_b"],
      params["cls_w"], params["cls_b"])

    return out.reshape(B, N_PAD)[:, :NUM_CLASSES]            # slice off lane padding


if __name__ == "__main__":
    key = jax.random.PRNGKey(0)
    k_param, k_x = jax.random.split(key)

    params = init_params(k_param, num_classes=NUM_CLASSES)
    x = jax.random.normal(k_x, (2, 1, 16, 16), jnp.float32)  # small NCHW input

    out = jax.jit(base_model_forward)(params, x)
    out = jax.block_until_ready(out)

    assert out.shape == (2, NUM_CLASSES), out.shape
    assert out.dtype == jnp.float32
    assert bool(jnp.all(jnp.isfinite(out)))
    print("KERNEL_OK")
</pallas_src>

<mosaic_0001>
module attributes {stable_mosaic.version = 11 : i64} {
  func.func @_fused_forward_kernel(%arg0: i32, %arg1: i32, %arg2: memref<1x64x16xbf16, #tpu.memory_space<vmem>>, %arg3: memref<16x32xbf16, #tpu.memory_space<vmem>>, %arg4: memref<1x32xf32, #tpu.memory_space<vmem>>, %arg5: memref<32x1280xbf16, #tpu.memory_space<vmem>>, %arg6: memref<1x1280xf32, #tpu.memory_space<vmem>>, %arg7: memref<1280x384xbf16, #tpu.memory_space<vmem>>, %arg8: memref<1x384xf32, #tpu.memory_space<vmem>>, %arg9: memref<1x1x384xf32, #tpu.memory_space<vmem>>, %arg10: memref<1x1280xf32, #tpu.memory_space<vmem>>) attributes {dimension_semantics = [#tpu.dimension_semantics<parallel>, #tpu.dimension_semantics<arbitrary>], iteration_bounds = array<i64: 2, 1>, scalar_prefetch = 0 : i64, scratch_operands = 1 : i64, tpu.core_type = #tpu.core_type<tc>, window_params = [{transform_indices = @transform_0, window_bounds = array<i64: 1, 64, 16>}, {pipeline_mode = #tpu.pipeline_mode<synchronous>, transform_indices = @transform_1, window_bounds = array<i64: 16, 32>}, {pipeline_mode = #tpu.pipeline_mode<synchronous>, transform_indices = @transform_2, window_bounds = array<i64: 1, 32>}, {pipeline_mode = #tpu.pipeline_mode<synchronous>, transform_indices = @transform_3, window_bounds = array<i64: 32, 1280>}, {pipeline_mode = #tpu.pipeline_mode<synchronous>, transform_indices = @transform_4, window_bounds = array<i64: 1, 1280>}, {pipeline_mode = #tpu.pipeline_mode<synchronous>, transform_indices = @transform_5, window_bounds = array<i64: 1280, 384>}, {pipeline_mode = #tpu.pipeline_mode<synchronous>, transform_indices = @transform_6, window_bounds = array<i64: 1, 384>}, {transform_indices = @transform_7, window_bounds = array<i64: 1, 1, 384>}]} {
    %c0_i32 = arith.constant 0 : i32
    %0 = arith.cmpi eq, %arg1, %c0_i32 : i32
    %1 = arith.extui %0 : i1 to i32
    %c0_i32_0 = arith.constant 0 : i32
    %2 = arith.cmpi ne, %1, %c0_i32_0 : i32
    scf.if %2 {
      %cst_24 = arith.constant 0.000000e+00 : f32
      %47 = vector.broadcast %cst_24 : f32 to vector<1x1280xf32>
      %c0_25 = arith.constant 0 : index
      %c0_26 = arith.constant 0 : index
      %48 = vector.load %arg10[%c0_25, %c0_26] : memref<1x1280xf32, #tpu.memory_space<vmem>>, vector<1x1280xf32>
      tpu.vector_store %arg10[%c0_25, %c0_26], %47 {strides = array<i32>} : memref<1x1280xf32, #tpu.memory_space<vmem>>, vector<1x1280xf32>,
    } else {
    }
    %c0 = arith.constant 0 : index
    %c0_1 = arith.constant 0 : index
    %c0_2 = arith.constant 0 : index
    %3 = vector.load %arg2[%c0, %c0_1, %c0_2] : memref<1x64x16xbf16, #tpu.memory_space<vmem>>, vector<1x64x16xbf16>
    %4 = vector.shape_cast %3 : vector<1x64x16xbf16> to vector<64x16xbf16>
    %c0_3 = arith.constant 0 : index
    %c0_4 = arith.constant 0 : index
    %5 = vector.load %arg3[%c0_3, %c0_4] : memref<16x32xbf16, #tpu.memory_space<vmem>>, vector<16x32xbf16>
    %cst = arith.constant dense<0.000000e+00> : vector<64x32xf32>
    %6 = tpu.matmul %4, %5, %cst {dimension_numbers = #tpu.dot_dimension_numbers<[1], [0], [0], [1], [0, 0, 1, 1], [], []>} : vector<64x16xbf16>, vector<16x32xbf16>, vector<64x32xf32> -> vector<64x32xf32>
    %c0_5 = arith.constant 0 : index
    %c0_6 = arith.constant 0 : index
    %7 = vector.load %arg4[%c0_5, %c0_6] : memref<1x32xf32, #tpu.memory_space<vmem>>, vector<1x32xf32>
    %8 = vector.broadcast %7 : vector<1x32xf32> to vector<64x32xf32>
    %9 = arith.addf %6, %8 : vector<64x32xf32>
    %10 = arith.negf %9 : vector<64x32xf32>
    %11 = math.exp %10 : vector<64x32xf32>
    %cst_7 = arith.constant 1.000000e+00 : f32
    %12 = vector.broadcast %cst_7 : f32 to vector<64x32xf32>
    %13 = arith.addf %12, %11 : vector<64x32xf32>
    %14 = arith.divf %12, %13 : vector<64x32xf32>
    %15 = arith.mulf %9, %14 : vector<64x32xf32>
    %16 = arith.truncf %15 : vector<64x32xf32> to vector<64x32xbf16>
    %c0_8 = arith.constant 0 : index
    %c0_9 = arith.constant 0 : index
    %17 = vector.load %arg5[%c0_8, %c0_9] : memref<32x1280xbf16, #tpu.memory_space<vmem>>, vector<32x1280xbf16>
    %cst_10 = arith.constant dense<0.000000e+00> : vector<64x1280xf32>
    %18 = tpu.matmul %16, %17, %cst_10 {dimension_numbers = #tpu.dot_dimension_numbers<[1], [0], [0], [1], [0, 0, 1, 1], [], []>} : vector<64x32xbf16>, vector<32x1280xbf16>, vector<64x1280xf32> -> vector<64x1280xf32>
    %19 = arith.truncf %18 : vector<64x1280xf32> to vector<64x1280xbf16>
    %c0_11 = arith.constant 0 : index
    %c0_12 = arith.constant 0 : index
    %20 = vector.load %arg6[%c0_11, %c0_12] : memref<1x1280xf32, #tpu.memory_space<vmem>>, vector<1x1280xf32>
    %21 = arith.truncf %20 : vector<1x1280xf32> to vector<1x1280xbf16>
    %22 = vector.broadcast %21 : vector<1x1280xbf16> to vector<64x1280xbf16>
    %23 = arith.addf %19, %22 : vector<64x1280xbf16>
    %24 = arith.negf %23 : vector<64x1280xbf16>
    %25 = math.exp %24 : vector<64x1280xbf16>
    %cst_13 = arith.constant 1.000000e+00 : bf16
    %26 = vector.broadcast %cst_13 : bf16 to vector<64x1280xbf16>
    %27 = arith.addf %26, %25 : vector<64x1280xbf16>
    %28 = arith.divf %26, %27 : vector<64x1280xbf16>
    %29 = arith.mulf %23, %28 : vector<64x1280xbf16>
    %30 = tpu.iota {dimensions = array<i32: 1>} : vector<1x64xi32>
    %c64_i32 = arith.constant 64 : i32
    %31 = arith.muli %arg1, %c64_i32 : i32
    %32 = vector.broadcast %31 : i32 to vector<1x64xi32>
    %33 = arith.addi %30, %32 : vector<1x64xi32>
    %c64_i32_14 = arith.constant 64 : i32
    %34 = vector.broadcast %c64_i32_14 : i32 to vector<1x64xi32>
    %35 = arith.cmpi slt, %33, %34 : vector<1x64xi32>
    %cst_15 = arith.constant 1.000000e+00 : f32
    %cst_16 = arith.constant 0.000000e+00 : f32
    %36 = vector.broadcast %cst_15 : f32 to vector<1x64xf32>
    %37 = vector.broadcast %cst_16 : f32 to vector<1x64xf32>
    %38 = arith.select %35, %36, %37 : vector<1x64xi1>, vector<1x64xf32>
    %39 = arith.truncf %38 : vector<1x64xf32> to vector<1x64xbf16>
    %c0_17 = arith.constant 0 : index
    %c0_18 = arith.constant 0 : index
    %40 = vector.load %arg10[%c0_17, %c0_18] : memref<1x1280xf32, #tpu.memory_space<vmem>>, vector<1x1280xf32>
    %cst_19 = arith.constant dense<0.000000e+00> : vector<1x1280xf32>
    %41 = tpu.matmul %39, %29, %cst_19 {dimension_numbers = #tpu.dot_dimension_numbers<[1], [0], [0], [1], [0, 0, 1, 1], [], []>} : vector<1x64xbf16>, vector<64x1280xbf16>, vector<1x1280xf32> -> vector<1x1280xf32>
    %42 = arith.addf %40, %41 : vector<1x1280xf32>
    %c0_20 = arith.constant 0 : index
    %c0_21 = arith.constant 0 : index
    %43 = vector.load %arg10[%c0_20, %c0_21] : memref<1x1280xf32, #tpu.memory_space<vmem>>, vector<1x1280xf32>
    tpu.vector_store %arg10[%c0_20, %c0_21], %42 {strides = array<i32>} : memref<1x1280xf32, #tpu.memory_space<vmem>>, vector<1x1280xf32>,
    %c0_i32_22 = arith.constant 0 : i32
    %44 = arith.cmpi eq, %arg1, %c0_i32_22 : i32
    %45 = arith.extui %44 : i1 to i32
    %c0_i32_23 = arith.constant 0 : i32
    %46 = arith.cmpi ne, %45, %c0_i32_23 : i32
    scf.if %46 {
      %c0_24 = arith.constant 0 : index
      %c0_25 = arith.constant 0 : index
      %47 = vector.load %arg10[%c0_24, %c0_25] : memref<1x1280xf32, #tpu.memory_space<vmem>>, vector<1x1280xf32>
      %cst_26 = arith.constant 1.562500e-02 : f32
      %48 = vector.broadcast %cst_26 : f32 to vector<1x1280xf32>
      %49 = arith.mulf %47, %48 : vector<1x1280xf32>
      %50 = arith.truncf %49 : vector<1x1280xf32> to vector<1x1280xbf16>
      %c0_27 = arith.constant 0 : index
      %c0_28 = arith.constant 0 : index
      %51 = vector.load %arg7[%c0_27, %c0_28] : memref<1280x384xbf16, #tpu.memory_space<vmem>>, vector<1280x384xbf16>
      %cst_29 = arith.constant dense<0.000000e+00> : vector<1x384xf32>
      %52 = tpu.matmul %50, %51, %cst_29 {dimension_numbers = #tpu.dot_dimension_numbers<[1], [0], [0], [1], [0, 0, 1, 1], [], []>} : vector<1x1280xbf16>, vector<1280x384xbf16>, vector<1x384xf32> -> vector<1x384xf32>
      %c0_30 = arith.constant 0 : index
      %c0_31 = arith.constant 0 : index
      %53 = vector.load %arg8[%c0_30, %c0_31] : memref<1x384xf32, #tpu.memory_space<vmem>>, vector<1x384xf32>
      %54 = arith.addf %52, %53 : vector<1x384xf32>
      %c0_32 = arith.constant 0 : index
      %c0_33 = arith.constant 0 : index
      %c0_34 = arith.constant 0 : index
      %55 = vector.load %arg9[%c0_32, %c0_33, %c0_34] : memref<1x1x384xf32, #tpu.memory_space<vmem>>, vector<1x1x384xf32>
      %56 = vector.shape_cast %55 : vector<1x1x384xf32> to vector<1x384xf32>
      %57 = vector.shape_cast %54 : vector<1x384xf32> to vector<1x1x384xf32>
      tpu.vector_store %arg9[%c0_32, %c0_33, %c0_34], %57 {strides = array<i32>} : memref<1x1x384xf32, #tpu.memory_space<vmem>>, vector<1x1x384xf32>,
    } else {
    }
    return
  }
  func.func @transform_0(%arg0: i32, %arg1: i32) -> (i32, i32, i32) {
    %c0_i32 = arith.constant 0 : i32
    %c0_i32_0 = arith.constant 0 : i32
    return %arg0, %arg1, %c0_i32 : i32, i32, i32
  }
  func.func @transform_1(%arg0: i32, %arg1: i32) -> (i32, i32) {
    %c0_i32 = arith.constant 0 : i32
    %c0_i32_0 = arith.constant 0 : i32
    %c0_i32_1 = arith.constant 0 : i32
    return %c0_i32, %c0_i32_0 : i32, i32
  }
  func.func @transform_2(%arg0: i32, %arg1: i32) -> (i32, i32) {
    %c0_i32 = arith.constant 0 : i32
    %c0_i32_0 = arith.constant 0 : i32
    %c0_i32_1 = arith.constant 0 : i32
    return %c0_i32, %c0_i32_0 : i32, i32
  }
  func.func @transform_3(%arg0: i32, %arg1: i32) -> (i32, i32) {
    %c0_i32 = arith.constant 0 : i32
    %c0_i32_0 = arith.constant 0 : i32
    %c0_i32_1 = arith.constant 0 : i32
    return %c0_i32, %c0_i32_0 : i32, i32
  }
  func.func @transform_4(%arg0: i32, %arg1: i32) -> (i32, i32) {
    %c0_i32 = arith.constant 0 : i32
    %c0_i32_0 = arith.constant 0 : i32
    %c0_i32_1 = arith.constant 0 : i32
    return %c0_i32, %c0_i32_0 : i32, i32
  }
  func.func @transform_5(%arg0: i32, %arg1: i32) -> (i32, i32) {
    %c0_i32 = arith.constant 0 : i32
    %c0_i32_0 = arith.constant 0 : i32
    %c0_i32_1 = arith.constant 0 : i32
    return %c0_i32, %c0_i32_0 : i32, i32
  }
  func.func @transform_6(%arg0: i32, %arg1: i32) -> (i32, i32) {
    %c0_i32 = arith.constant 0 : i32
    %c0_i32_0 = arith.constant 0 : i32
    %c0_i32_1 = arith.constant 0 : i32
    return %c0_i32, %c0_i32_0 : i32, i32
  }
  func.func @transform_7(%arg0: i32, %arg1: i32) -> (i32, i32, i32) {
    %c0_i32 = arith.constant 0 : i32
    %c0_i32_0 = arith.constant 0 : i32
    %c0_i32_1 = arith.constant 0 : i32
    return %arg0, %c0_i32, %c0_i32_0 : i32, i32, i32
  }
}

</mosaic_0001>

<llo_original>
// kernel: base_model_forward.1
$region0: #{base_model_forward.1}
  #allocation0 [shape = 'u32[]', space=smem, size = 0x4, offset = 0x4, fixed_abs, tag = 'smem constant byte address 0x4 - core index']
  #allocation1 [shape = 'u32[144,128]{1,0:T(1,128)}', space=vmem, size = 0x12000, scoped, tag = 'internal scratch']
  #allocation2 [shape = 'f32[1,1280]{1,0:T(1,128)}', space=vmem, size = 0x1400, scoped, tag = 'scratch operand']
  %s0 = inlined_call_operand.hbm [shape: bf16[2,64,16], index: 0, kind: input, shape index: {}]
  %s1 = inlined_call_operand.hbm [shape: bf16[16,32], index: 1, kind: input, shape index: {}]
  %s2 = inlined_call_operand.hbm [shape: f32[1,32], index: 2, kind: input, shape index: {}]
  %s3 = inlined_call_operand.hbm [shape: bf16[32,1280], index: 3, kind: input, shape index: {}]
  %s4 = inlined_call_operand.hbm [shape: f32[1,1280], index: 4, kind: input, shape index: {}]
  %s5 = inlined_call_operand.hbm [shape: bf16[1280,384], index: 5, kind: input, shape index: {}]
  %s6 = inlined_call_operand.hbm [shape: f32[1,384], index: 6, kind: input, shape index: {}]
  %s7 = inlined_call_operand.hbm [shape: f32[2,1,384], index: 7, kind: output, shape index: {}]
  %s8 = sld [smem:[#allocation0]]
  $region97: #{base_model_forward.1} parent=0
    _
  %s10 = ssub.s32 1, %s8
  %s11 = scalar_select 0, %s10, %s8
  $region1: #{base_model_forward.1} parent=0
    #allocation3 [shape = 'u8[32768]{0}', space=vmem, size = 0x8000, scoped, tag = 'input window, operand 0']
    #allocation4 [shape = 's32[2]{0}', space=sflag, size = 0x8, scoped, tag = 'scoped memory for base_model_forward.1']
    #allocation5 [shape = 's32[2]{0}', space=sflag, size = 0x8, scoped, tag = 'scoped memory for base_model_forward.1']
    #allocation6 [shape = 'u8[4096]{0}', space=vmem, size = 0x1000, scoped, tag = 'input window, operand 1, single buffered']
    #allocation7 [shape = 's32[1]{0}', space=sflag, size = 0x4, scoped, tag = 'scoped memory for base_model_forward.1']
    #allocation8 [shape = 'u8[512]{0}', space=vmem, size = 0x400, scoped, tag = 'input window, operand 2, single buffered']
    #allocation9 [shape = 'u8[81920]{0}', space=vmem, size = 0x14000, scoped, tag = 'input window, operand 3, single buffered']
    #allocation10 [shape = 's32[1]{0}', space=sflag, size = 0x4, scoped, tag = 'scoped memory for base_model_forward.1']
    #allocation11 [shape = 'u8[5120]{0}', space=vmem, size = 0x1400, scoped, tag = 'input window, operand 4, single buffered']
    #allocation12 [shape = 'u8[983040]{0}', space=vmem, size = 0xf0000, scoped, tag = 'input window, operand 5, single buffered']
    #allocation13 [shape = 's32[1]{0}', space=sflag, size = 0x4, scoped, tag = 'scoped memory for base_model_forward.1']
    #allocation14 [shape = 'u8[1536]{0}', space=vmem, size = 0x800, scoped, tag = 'input window, operand 6, single buffered']
    #allocation15 [shape = 'u8[3072]{0}', space=vmem, size = 0xc00, scoped, tag = 'output window, operand 0']
    %12 = vsyncpa [#allocation4], 0
    %s13 = scalar_lea.sflag [#allocation4], 1
    %14 = vsyncpa %s13, 0
    %15 = vsyncpa [#allocation7], 0
    %16 = vsyncpa [#allocation10], 0
    %17 = vsyncpa [#allocation13], 0
    %18 = vsyncpa [#allocation5], 0
    %s19 = scalar_lea.sflag [#allocation5], 1
    %20 = vsyncpa %s19, 0
    loop: start=0, step=1, limit=4
    $region2: #{base_model_forward.1} parent=1 // loop_pre_header
      _
    $region3: #{base_model_forward.1} parent=1 // loop_header
      %s22 = sphi 0, %s26
      %p23 = scmp.ge.s32.totalorder %s22, 4
      %s29 = sphi 0, %s41
      %s30 = sphi 0, %s37
      %s31 = sphi 0, %s29
      %s32 = sphi 0, %s30
      %s33 = sphi 0, %s31
      %s34 = sphi 0, %s32
      %s46 = sphi 0, %s48
      %s49 = sphi 0, %s46
      %s50 = sphi 0, %s49
      %s66 = sphi 0, %s50
      %s70 = sphi 0, %s70
      %s72 = sphi 0, %s70
      %s73 = sphi 0, %s72
      %s87 = sphi 0, %s73
      %s91 = sphi 0, %s91
      %s93 = sphi 0, %s91
      %s94 = sphi 0, %s93
      %s108 = sphi 0, %s94
      %s112 = sphi 0, %s112
      %s114 = sphi 0, %s112
      %s115 = sphi 0, %s114
      %s129 = sphi 0, %s115
      %s133 = sphi 0, %s133
      %s135 = sphi 0, %s133
      %s136 = sphi 0, %s135
      %s150 = sphi 0, %s136
      %s154 = sphi 0, %s154
      %s156 = sphi 0, %s154
      %s157 = sphi 0, %s156
      %s171 = sphi 0, %s157
      %s175 = sphi 0, %s175
      %s177 = sphi 0, %s175
      %s178 = sphi 0, %s177
      %s192 = sphi 0, %s178
      %s198 = sphi 0, %s200
      %s201 = sphi 0, %s198
      %s202 = sphi 0, %s201
      %s218 = sphi 0, %s202
    $region4: #{base_model_forward.1} parent=1 // loop_header_branch
      %25 = sbr.rel (%p23) target = $region8
    $region5: #{base_model_forward.1} parent=1 // loop_body
      %s27 = ssub.s32 %s22, 1
      %s28 = ssub.s32 %s22, 2
      %s35 = sadd.s32 1, %s30
      %p36 = scmp.ge.s32.totalorder %s35, 1
      %s37 = scalar_select %p36, 0, %s35
      %s38 = sadd.s32 1, %s29
      %s39 = scalar_select %p36, %s38, %s29
      %p40 = scmp.ge.s32.totalorder %s39, 2
      %s41 = scalar_select %p40, 0, %s39
      %s42 = ssub.s32 %s29, %s41
      %s43 = ssub.s32 %s30, %s37
      %s44 = sor.u32 %s42, %s43
      %p45 = scmp.eq.s32.totalorder %s44, 0
      %s47 = sadd.s32 %s46, 1
      %s48 = scalar_select %p45, %s46, %s47
      %p51 = pneg %p45
      %p52 = scmp.eq.s32.totalorder %s22, 1
      %p53 = por %p51, %p52
      %p54 = scmp.ne.s32.totalorder %s46, %s49
      %p55 = scmp.eq.s32.totalorder %s22, 0
      %p56 = por %p54, %p55
      %p57 = scmp.ne.s32.totalorder %s46, %s49
      %p58 = scmp.eq.s32.totalorder %s27, 1
      %p59 = por %p57, %p58
      %p60 = scmp.ne.s32.totalorder %s49, %s50
      %p61 = scmp.eq.s32.totalorder %s27, 0
      %p62 = por %p60, %p61
      %p63 = scmp.ne.s32.totalorder %s49, %s50
      %p64 = scmp.eq.s32.totalorder %s28, 1
      %p65 = por %p63, %p64
      %p67 = scmp.ne.s32.totalorder %s50, %s66
      %p68 = scmp.eq.s32.totalorder %s28, 0
      %p69 = por %p67, %p68
      %s71 = sadd.s32 %s70, 1
      %p74 = scmp.eq.s32.totalorder %s22, 1
      %p75 = scmp.ne.s32.totalorder %s70, %s72
      %p76 = scmp.eq.s32.totalorder %s22, 0
      %p77 = por %p75, %p76
      %p78 = scmp.ne.s32.totalorder %s70, %s72
      %p79 = scmp.eq.s32.totalorder %s27, 1
      %p80 = por %p78, %p79
      %p81 = scmp.ne.s32.totalorder %s72, %s73
      %p82 = scmp.eq.s32.totalorder %s27, 0
      %p83 = por %p81, %p82
      %p84 = scmp.ne.s32.totalorder %s72, %s73
      %p85 = scmp.eq.s32.totalorder %s28, 1
      %p86 = por %p84, %p85
      %p88 = scmp.ne.s32.totalorder %s73, %s87
      %p89 = scmp.eq.s32.totalorder %s28, 0
      %p90 = por %p88, %p89
      %s92 = sadd.s32 %s91, 1
      %p95 = scmp.eq.s32.totalorder %s22, 1
      %p96 = scmp.ne.s32.totalorder %s91, %s93
      %p97 = scmp.eq.s32.totalorder %s22, 0
      %p98 = por %p96, %p97
      %p99 = scmp.ne.s32.totalorder %s91, %s93
      %p100 = scmp.eq.s32.totalorder %s27, 1
      %p101 = por %p99, %p100
      %p102 = scmp.ne.s32.totalorder %s93, %s94
      %p103 = scmp.eq.s32.totalorder %s27, 0
      %p104 = por %p102, %p103
      %p105 = scmp.ne.s32.totalorder %s93, %s94
      %p106 = scmp.eq.s32.totalorder %s28, 1
      %p107 = por %p105, %p106
      %p109 = scmp.ne.s32.totalorder %s94, %s108
      %p110 = scmp.eq.s32.totalorder %s28, 0
      %p111 = por %p109, %p110
      %s113 = sadd.s32 %s112, 1
      %p116 = scmp.eq.s32.totalorder %s22, 1
      %p117 = scmp.ne.s32.totalorder %s112, %s114
      %p118 = scmp.eq.s32.totalorder %s22, 0
      %p119 = por %p117, %p118
      %p120 = scmp.ne.s32.totalorder %s112, %s114
      %p121 = scmp.eq.s32.totalorder %s27, 1
      %p122 = por %p120, %p121
      %p123 = scmp.ne.s32.totalorder %s114, %s115
      %p124 = scmp.eq.s32.totalorder %s27, 0
      %p125 = por %p123, %p124
      %p126 = scmp.ne.s32.totalorder %s114, %s115
      %p127 = scmp.eq.s32.totalorder %s28, 1
      %p128 = por %p126, %p127
      %p130 = scmp.ne.s32.totalorder %s115, %s129
      %p131 = scmp.eq.s32.totalorder %s28, 0
      %p132 = por %p130, %p131
      %s134 = sadd.s32 %s133, 1
      %p137 = scmp.eq.s32.totalorder %s22, 1
      %p138 = scmp.ne.s32.totalorder %s133, %s135
      %p139 = scmp.eq.s32.totalorder %s22, 0
      %p140 = por %p138, %p139
      %p141 = scmp.ne.s32.totalorder %s133, %s135
      %p142 = scmp.eq.s32.totalorder %s27, 1
      %p143 = por %p141, %p142
      %p144 = scmp.ne.s32.totalorder %s135, %s136
      %p145 = scmp.eq.s32.totalorder %s27, 0
      %p146 = por %p144, %p145
      %p147 = scmp.ne.s32.totalorder %s135, %s136
      %p148 = scmp.eq.s32.totalorder %s28, 1
      %p149 = por %p147, %p148
      %p151 = scmp.ne.s32.totalorder %s136, %s150
      %p152 = scmp.eq.s32.totalorder %s28, 0
      %p153 = por %p151, %p152
      %s155 = sadd.s32 %s154, 1
      %p158 = scmp.eq.s32.totalorder %s22, 1
      %p159 = scmp.ne.s32.totalorder %s154, %s156
      %p160 = scmp.eq.s32.totalorder %s22, 0
      %p161 = por %p159, %p160
      %p162 = scmp.ne.s32.totalorder %s154, %s156
      %p163 = scmp.eq.s32.totalorder %s27, 1
      %p164 = por %p162, %p163
      %p165 = scmp.ne.s32.totalorder %s156, %s157
      %p166 = scmp.eq.s32.totalorder %s27, 0
      %p167 = por %p165, %p166
      %p168 = scmp.ne.s32.totalorder %s156, %s157
      %p169 = scmp.eq.s32.totalorder %s28, 1
      %p170 = por %p168, %p169
      %p172 = scmp.ne.s32.totalorder %s157, %s171
      %p173 = scmp.eq.s32.totalorder %s28, 0
      %p174 = por %p172, %p173
      %s176 = sadd.s32 %s175, 1
      %p179 = scmp.eq.s32.totalorder %s22, 1
      %p180 = scmp.ne.s32.totalorder %s175, %s177
      %p181 = scmp.eq.s32.totalorder %s22, 0
      %p182 = por %p180, %p181
      %p183 = scmp.ne.s32.totalorder %s175, %s177
      %p184 = scmp.eq.s32.totalorder %s27, 1
      %p185 = por %p183, %p184
      %p186 = scmp.ne.s32.totalorder %s177, %s178
      %p187 = scmp.eq.s32.totalorder %s27, 0
      %p188 = por %p186, %p187
      %p189 = scmp.ne.s32.totalorder %s177, %s178
      %p190 = scmp.eq.s32.totalorder %s28, 1
      %p191 = por %p189, %p190
      %p193 = scmp.ne.s32.totalorder %s178, %s192
      %p194 = scmp.eq.s32.totalorder %s28, 0
      %p195 = por %p193, %p194
      %s196 = ssub.s32 %s29, %s41
      %p197 = scmp.eq.s32.totalorder %s196, 0
      %s199 = sadd.s32 %s198, 1
      %s200 = scalar_select %p197, %s198, %s199
      %p203 = pneg %p197
      %p204 = scmp.eq.s32.totalorder %s22, 1
      %p205 = por %p203, %p204
      %p206 = scmp.ne.s32.totalorder %s198, %s201
      %p207 = scmp.eq.s32.totalorder %s22, 0
      %p208 = por %p206, %p207
      %p209 = scmp.ne.s32.totalorder %s198, %s201
      %p210 = scmp.eq.s32.totalorder %s27, 1
      %p211 = por %p209, %p210
      %p212 = scmp.ne.s32.totalorder %s201, %s202
      %p213 = scmp.eq.s32.totalorder %s27, 0
      %p214 = por %p212, %p213
      %p215 = scmp.ne.s32.totalorder %s201, %s202
      %p216 = scmp.eq.s32.totalorder %s28, 1
      %p217 = por %p215, %p216
      %p219 = scmp.ne.s32.totalorder %s202, %s218
      %p220 = scmp.eq.s32.totalorder %s28, 0
      %p221 = por %p219, %p220
      %p222 = scmp.le.s32.totalorder 1, %s22
      %p223 = scmp.lt.s32.totalorder %s22, 3
      %p224 = pnand %p222, %p223
      %p225 = pneg %p224
      // Predicated region
      $region9: #{base_model_forward.1} parent=5 // pred_check
        _
      $region10: #{base_model_forward.1} parent=5 // pred_check_branch
        %227 = sbr.rel (%p224) target = $region12
      $region11: #{base_model_forward.1} parent=5 // pred_region
        %s228 = ssub.s32 %s22, 1
        // Predicated region
        $region13: #{base_model_forward.1} parent=11 // pred_check
          %p229 = pneg %p83
        $region14: #{base_model_forward.1} parent=11 // pred_check_branch
          %231 = sbr.rel (%p229) target = $region16
        $region15: #{base_model_forward.1} parent=11 // pred_region
          %s233 = ssub.s32 128, 128
          %234 = vsyncadd [#allocation7], %s233
          %s235 = sshll.u32 [#allocation6], 4
          %s236 = int_to_ptr.vmem [resolvable:$true] %s235
          %241 = dma.hbm_to_vmem [thread:$0]  %s1, 128, %s236, [#allocation7], 64, 64, 4
        $region16: #{base_model_forward.1} parent=11 // pred_fallthru
          _
        // Predicated region
        $region17: #{base_model_forward.1} parent=11 // pred_check
          %p242 = pneg %p104
        $region18: #{base_model_forward.1} parent=11 // pred_check_branch
          %244 = sbr.rel (%p242) target = $region20
        $region19: #{base_model_forward.1} parent=11 // pred_region
          %s246 = ssub.s32 16, 16
          %247 = vsyncadd [#allocation7], %s246
          %s249 = sshll.u32 [#allocation8], 4
          %s250 = int_to_ptr.vmem [resolvable:$true] %s249
          %252 = dma.hbm_to_vmem [thread:$0]  %s2, 16, %s250, [#allocation7]
        $region20: #{base_model_forward.1} parent=11 // pred_fallthru
          _
        // Predicated region
        $region21: #{base_model_forward.1} parent=11 // pred_check
          %p253 = pneg %p125
        $region22: #{base_model_forward.1} parent=11 // pred_check_branch
          %255 = sbr.rel (%p253) target = $region24
        $region23: #{base_model_forward.1} parent=11 // pred_region
          %s257 = ssub.s32 2560, 2560
          %258 = vsyncadd [#allocation10], %s257
          %s259 = sshll.u32 [#allocation9], 4
          %s260 = int_to_ptr.vmem [resolvable:$true] %s259
          %265 = dma.hbm_to_vmem [thread:$0]  %s3, 2560, %s260, [#allocation10], 640, 640, 40
        $region24: #{base_model_forward.1} parent=11 // pred_fallthru
          _
        // Predicated region
        $region25: #{base_model_forward.1} parent=11 // pred_check
          %p266 = pneg %p146
        $region26: #{base_model_forward.1} parent=11 // pred_check_branch
          %268 = sbr.rel (%p266) target = $region28
        $region27: #{base_model_forward.1} parent=11 // pred_region
          %s270 = ssub.s32 160, 160
          %271 = vsyncadd [#allocation10], %s270
          %s273 = sshll.u32 [#allocation11], 4
          %s274 = int_to_ptr.vmem [resolvable:$true] %s273
          %276 = dma.hbm_to_vmem [thread:$0]  %s4, 160, %s274, [#allocation10]
        $region28: #{base_model_forward.1} parent=11 // pred_fallthru
          _
        // Predicated region
        $region29: #{base_model_forward.1} parent=11 // pred_check
          %p277 = pneg %p167
        $region30: #{base_model_forward.1} parent=11 // pred_check_branch
          %279 = sbr.rel (%p277) target = $region32
        $region31: #{base_model_forward.1} parent=11 // pred_region
          %s281 = ssub.s32 30720, 30720
          %282 = vsyncadd [#allocation13], %s281
          %s283 = sshll.u32 [#allocation12], 4
          %s284 = int_to_ptr.vmem [resolvable:$true] %s283
          %289 = dma.hbm_to_vmem [thread:$0]  %s5, 30720, %s284, [#allocation13], 192, 192, 12
        $region32: #{base_model_forward.1} parent=11 // pred_fallthru
          _
        // Predicated region
        $region33: #{base_model_forward.1} parent=11 // pred_check
          %p290 = pneg %p188
        $region34: #{base_model_forward.1} parent=11 // pred_check_branch
          %292 = sbr.rel (%p290) target = $region36
        $region35: #{base_model_forward.1} parent=11 // pred_region
          %s294 = ssub.s32 48, 48
          %295 = vsyncadd [#allocation13], %s294
          %s297 = sshll.u32 [#allocation14], 4
          %s298 = int_to_ptr.vmem [resolvable:$true] %s297
          %300 = dma.hbm_to_vmem [thread:$0]  %s6, 48, %s298, [#allocation13]
        $region36: #{base_model_forward.1} parent=11 // pred_fallthru
          _
      $region12: #{base_model_forward.1} parent=5 // pred_fallthru
        _
      %p301 = scmp.lt.s32.totalorder %s22, 2
      // Predicated region
      $region37: #{base_model_forward.1} parent=5 // pred_check
        %p302 = pneg %p301
      $region38: #{base_model_forward.1} parent=5 // pred_check_branch
        %304 = sbr.rel (%p302) target = $region40
      $region39: #{base_model_forward.1} parent=5 // pred_region
        // Predicated region
        $region41: #{base_model_forward.1} parent=39 // pred_check
          %p305 = pneg %p56
        $region42: #{base_model_forward.1} parent=39 // pred_check_branch
          %307 = sbr.rel (%p305) target = $region44
        $region43: #{base_model_forward.1} parent=39 // pred_region
          %s308 = sand.u32 %s46, 1
          %s309 = scalar_lea.sflag [#allocation4], %s308
          %s310 = sand.u32 %s46, 1
          %s311 = smul.addr %s310, 32
          %s312 = scalar_lea.vmem [#allocation3], %s311
          %s313 = smul.u32 8, %s30
          %s315 = ssub.s32 512, 512
          %316 = vsyncadd %s309, %s315
          %s317 = smul.addr %s29, 8
          %s318 = sadd.s32 %s313, %s317
          %s319 = smul.addr %s318, 64
          %s320 = scalar_lea.hbm %s0, %s319
          %s321 = sshll.u32 %s312, 4
          %s322 = int_to_ptr.vmem [resolvable:$true] %s321
          %327 = dma.hbm_to_vmem [thread:$0]  %s320, 512, %s322, %s309, 64, 64, 4
        $region44: #{base_model_forward.1} parent=39 // pred_fallthru
          _
      $region40: #{base_model_forward.1} parent=5 // pred_fallthru
        _
      %p328 = scmp.le.s32.totalorder 1, %s22
      %p329 = scmp.lt.s32.totalorder %s22, 3
      %p330 = pnand %p328, %p329
      %p331 = pneg %p330
      // Predicated region
      $region45: #{base_model_forward.1} parent=5 // pred_check
        _
      $region46: #{base_model_forward.1} parent=5 // pred_check_branch
        %333 = sbr.rel (%p330) target = $region48
      $region47: #{base_model_forward.1} parent=5 // pred_region
        %s334 = ssub.s32 %s22, 1
        %s335 = sand.u32 %s49, 1
        %s336 = scalar_lea.sflag [#allocation4], %s335
        %s337 = sand.u32 %s49, 1
        %s338 = smul.addr %s337, 32
        %s339 = scalar_lea.vmem [#allocation3], %s338
        // Predicated region
        $region49: #{base_model_forward.1} parent=47 // pred_check
          %p340 = pneg %p62
        $region50: #{base_model_forward.1} parent=47 // pred_check_branch
          %342 = sbr.rel (%p340) target = $region52
        $region51: #{base_model_forward.1} parent=47 // pred_region
          %343 = dma.done %s336, 512
        $region52: #{base_model_forward.1} parent=47 // pred_fallthru
          _
        // Predicated region
        $region53: #{base_model_forward.1} parent=47 // pred_check
          %p344 = pneg %p83
        $region54: #{base_model_forward.1} parent=47 // pred_check_branch
          %346 = sbr.rel (%p344) target = $region56
        $region55: #{base_model_forward.1} parent=47 // pred_region
          %347 = dma.done [#allocation7], 128
        $region56: #{base_model_forward.1} parent=47 // pred_fallthru
          _
        // Predicated region
        $region57: #{base_model_forward.1} parent=47 // pred_check
          %p348 = pneg %p104
        $region58: #{base_model_forward.1} parent=47 // pred_check_branch
          %350 = sbr.rel (%p348) target = $region60
        $region59: #{base_model_forward.1} parent=47 // pred_region
          %351 = dma.done [#allocation7], 16
        $region60: #{base_model_forward.1} parent=47 // pred_fallthru
          _
        // Predicated region
        $region61: #{base_model_forward.1} parent=47 // pred_check
          %p352 = pneg %p125
        $region62: #{base_model_forward.1} parent=47 // pred_check_branch
          %354 = sbr.rel (%p352) target = $region64
        $region63: #{base_model_forward.1} parent=47 // pred_region
          %355 = dma.done [#allocation10], 2560
        $region64: #{base_model_forward.1} parent=47 // pred_fallthru
          _
        // Predicated region
        $region65: #{base_model_forward.1} parent=47 // pred_check
          %p356 = pneg %p146
        $region66: #{base_model_forward.1} parent=47 // pred_check_branch
          %358 = sbr.rel (%p356) target = $region68
        $region67: #{base_model_forward.1} parent=47 // pred_region
          %359 = dma.done [#allocation10], 160
        $region68: #{base_model_forward.1} parent=47 // pred_fallthru
          _
        // Predicated region
        $region69: #{base_model_forward.1} parent=47 // pred_check
          %p360 = pneg %p167
        $region70: #{base_model_forward.1} parent=47 // pred_check_branch
          %362 = sbr.rel (%p360) target = $region72
        $region71: #{base_model_forward.1} parent=47 // pred_region
          %363 = dma.done [#allocation13], 30720
        $region72: #{base_model_forward.1} parent=47 // pred_fallthru
          _
        // Predicated region
        $region73: #{base_model_forward.1} parent=47 // pred_check
          %p364 = pneg %p188
        $region74: #{base_model_forward.1} parent=47 // pred_check_branch
          %366 = sbr.rel (%p364) target = $region76
        $region75: #{base_model_forward.1} parent=47 // pred_region
          %367 = dma.done [#allocation13], 48
        $region76: #{base_model_forward.1} parent=47 // pred_fallthru
          _
        %s368 = sand.u32 %s49, 1
        %s369 = scalar_lea.sflag [#allocation4], %s368
        %s370 = sand.u32 %s49, 1
        %s371 = smul.addr %s370, 32
        %s372 = scalar_lea.vmem [#allocation3], %s371
        %p373 = pneg %p62
        %p374 = pneg %p59
        %p375 = pneg %p83
        %p376 = pneg %p80
        %p377 = pneg %p104
        %p378 = pneg %p101
        %p379 = pneg %p125
        %p380 = pneg %p122
        %p381 = pneg %p146
        %p382 = pneg %p143
        %p383 = pneg %p167
        %p384 = pneg %p164
        %p385 = pneg %p188
        %p386 = pneg %p185
        %p387 = pneg %p214
        %p388 = pneg %p211
        %s389 = sand.u32 %s201, 1
        %s390 = scalar_lea.sflag [#allocation5], %s389
        %s391 = sand.u32 %s201, 1
        %s392 = smul.addr %s391, 3
        %s393 = scalar_lea.vmem [#allocation15], %s392
        %s394 = smul.u32 8, %s32
        %p397 = scmp.eq.s32.totalorder %s32, 0
        // Predicated region
        $region77: #{base_model_forward.1} parent=47 // pred_check
          %p398 = pneg %p397
        $region78: #{base_model_forward.1} parent=47 // pred_check_branch
          %400 = sbr.rel (%p398) target = $region80
        $region79: #{base_model_forward.1} parent=47 // pred_region
          %401 = vst [vmem:[#allocation2] sm:$0xff] 0.0
          %v402 = vlaneseq
          %vm403 = vcmp.ge.s32.totalorder %v402, 0
          %vm404 = vcmp.lt.s32.totalorder %v402, 256
          %vm405 = vmand %vm403, %vm404
          %406 = vst.msk [vmem:[#allocation2 + $0x8] sm:$0x3] %vm405, 0.0
        $region80: #{base_model_forward.1} parent=47 // pred_fallthru
          _
        %v407 = vld [vmem:[%s339] sm:$0xf]
        %v408 = vld [vmem:[%s339 + $0x4] sm:$0xf]
        %v409 = vld [vmem:[%s339 + $0x8] sm:$0xf]
        %v410 = vld [vmem:[%s339 + $0xc] sm:$0xf]
        %v411 = vld [vmem:[%s339 + $0x10] sm:$0xf]
        %v412 = vld [vmem:[%s339 + $0x14] sm:$0xf]
        %v413 = vld [vmem:[%s339 + $0x18] sm:$0xf]
        %v414 = vld [vmem:[%s339 + $0x1c] sm:$0xf]
        %v415 = vld [vmem:[#allocation6] sm:$0xf]
        %v416 = vld [vmem:[#allocation6 + $0x4] sm:$0xf]
        %v417 = vld [vmem:[#allocation8] sm:$0x1]
        %v419 = vlaneseq
        %v420 = vshrl.u32 %v419, 7
        %v421 = vsub.s32 0, %v420
        %v422 = vrot.slane %v417, %v421
        %v432 = vunpack.c.l.b16 %v407
        %v433 = vunpack.c.l.b16 %v408
        %v434 = vunpack.c.l.b16 %v409
        %v435 = vunpack.c.l.b16 %v410
        %v436 = vunpack.c.l.b16 %v411
        %v437 = vunpack.c.l.b16 %v412
        %v438 = vunpack.c.l.b16 %v413
        %v439 = vunpack.c.l.b16 %v414
        %v440 = vpack.c.b16 %v433, %v432
        %v441 = vpack.c.b16 %v435, %v434
        %v442 = vpack.c.b16 %v437, %v436
        %v443 = vpack.c.b16 %v439, %v438
        %v446 = vunpack.c.l.b16 %v415
        %v447 = vunpack.c.l.b16 %v416
        %v448 = vpack.c.b16 %v447, %v446
        %vm450 = vcmask 130048
        %v452 = vsel %vm450, %v440, 0
        %v455 = vsel %vm450, %v441, 0
        %v458 = vsel %vm450, %v442, 0
        %v461 = vsel %vm450, %v443, 0
        %463 = vmatprep.subr.bf16.mxu0 0
        %464 = vmatpush1.bf16.msra.mxu0 %v448
        %465 = vmatprep.subr.bf16.mxu0 0
        %466 = vmatpush1.bf16.msra.mxu0 0
        %467 = vmatprep.subr.bf16.mxu0 0
        %468 = vmatpush1.bf16.msra.mxu0 0
        %469 = vmatprep.subr.bf16.mxu0 0
        %470 = vmatpush1.bf16.msra.mxu0 0
        %471 = vmatprep.subr.bf16.mxu0 0
        %472 = vmatpush1.bf16.msra.mxu0 0
        %473 = vmatprep.subr.bf16.mxu0 0
        %474 = vmatpush1.bf16.msra.mxu0 0
        %475 = vmatprep.subr.bf16.mxu0 0
        %476 = vmatpush1.bf16.msra.mxu0 0
        %477 = vmatprep.subr.bf16.mxu0 0
        %478 = vmatpush1.bf16.msra.mxu0 0
        %479 = vmatprep.subr.bf16.mxu0 0
        %480 = vmatpush1.bf16.msra.mxu0 0
        %481 = vmatprep.subr.bf16.mxu0 0
        %482 = vmatpush1.bf16.msra.mxu0 0
        %483 = vmatprep.subr.bf16.mxu0 0
        %484 = vmatpush1.bf16.msra.mxu0 0
        %485 = vmatprep.subr.bf16.mxu0 0
        %486 = vmatpush1.bf16.msra.mxu0 0
        %487 = vmatprep.subr.bf16.mxu0 0
        %488 = vmatpush1.bf16.msra.mxu0 0
        %489 = vmatprep.subr.bf16.mxu0 0
        %490 = vmatpush1.bf16.msra.mxu0 0
        %491 = vmatprep.subr.bf16.mxu0 0
        %492 = vmatpush1.bf16.msra.mxu0 0
        %493 = vmatprep.subr.bf16.mxu0 0
        %494 = vmatpush1.bf16.msra.mxu0 0
        %495 = vmatprep.mubr.bf16.mxu0 0
        %496 = vmatmul.mubr.bf16.gmra.mrb[0].mxu0 %v452
        %v497 = vpop.f32.mrb[0].mxu0
        %v498 = vadd.f32 %v422, %v497
        %v499 = vpop.f32.mrb[0].mxu0
        %v500 = vpop.f32.mrb[0].mxu0
        %v501 = vadd.f32 %v422, %v500
        %v502 = vpop.f32.mrb[0].mxu0
        %503 = vmatprep.mubr.bf16.mxu0 0
        %504 = vmatmul.mubr.bf16.gmra.mrb[0].mxu0 %v455
        %v505 = vpop.f32.mrb[0].mxu0
        %v506 = vadd.f32 %v422, %v505
        %v507 = vpop.f32.mrb[0].mxu0
        %v508 = vpop.f32.mrb[0].mxu0
        %v509 = vadd.f32 %v422, %v508
        %v510 = vpop.f32.mrb[0].mxu0
        %511 = vmatprep.mubr.bf16.mxu0 0
        %512 = vmatmul.mubr.bf16.gmra.mrb[0].mxu0 %v458
        %v513 = vpop.f32.mrb[0].mxu0
        %v514 = vadd.f32 %v422, %v513
        %v515 = vpop.f32.mrb[0].mxu0
        %v516 = vpop.f32.mrb[0].mxu0
        %v517 = vadd.f32 %v422, %v516
        %v518 = vpop.f32.mrb[0].mxu0
        %519 = vmatprep.mubr.bf16.mxu0 0
        %520 = vmatmul.mubr.bf16.gmra.mrb[0].mxu0 %v461
        %v521 = vpop.f32.mrb[0].mxu0
        %v522 = vadd.f32 %v422, %v521
        %v523 = vpop.f32.mrb[0].mxu0
        %v524 = vpop.f32.mrb[0].mxu0
        %v525 = vadd.f32 %v422, %v524
        %v526 = vpop.f32.mrb[0].mxu0
        %527 = vdwg.mxu0
        %v528 = vxor.u32 %v498, 2147483648
        %v529 = vxor.u32 %v501, 2147483648
        %v530 = vxor.u32 %v506, 2147483648
        %v531 = vxor.u32 %v509, 2147483648
        %v532 = vxor.u32 %v514, 2147483648
        %v533 = vxor.u32 %v517, 2147483648
        %v534 = vxor.u32 %v522, 2147483648
        %v535 = vxor.u32 %v525, 2147483648
        %v536 = vmul.f32 %v528, 1.442695
        %v537 = vpow.pop %v536
        %v538 = vmul.f32 %v529, 1.442695
        %v539 = vpow.pop %v538
        %v540 = vmul.f32 %v530, 1.442695
        %v541 = vpow.pop %v540
        %v542 = vmul.f32 %v531, 1.442695
        %v543 = vpow.pop %v542
        %v544 = vmul.f32 %v532, 1.442695
        %v545 = vpow.pop %v544
        %v546 = vmul.f32 %v533, 1.442695
        %v547 = vpow.pop %v546
        %v548 = vmul.f32 %v534, 1.442695
        %v549 = vpow.pop %v548
        %v550 = vmul.f32 %v535, 1.442695
        %v551 = vpow.pop %v550
        %v552 = vadd.f32 %v537, 1.0
        %v553 = vadd.f32 %v539, 1.0
        %v554 = vadd.f32 %v541, 1.0
        %v555 = vadd.f32 %v543, 1.0
        %v556 = vadd.f32 %v545, 1.0
        %v557 = vadd.f32 %v547, 1.0
        %v558 = vadd.f32 %v549, 1.0
        %v559 = vadd.f32 %v551, 1.0
        %v560 = vrcp.pop %v552
        %v561 = vmul.f32 1.0, %v560
        %v562 = vrcp.pop %v553
        %v563 = vmul.f32 1.0, %v562
        %v564 = vrcp.pop %v554
        %v565 = vmul.f32 1.0, %v564
        %v566 = vrcp.pop %v555
        %v567 = vmul.f32 1.0, %v566
        %v568 = vrcp.pop %v556
        %v569 = vmul.f32 1.0, %v568
        %v570 = vrcp.pop %v557
        %v571 = vmul.f32 1.0, %v570
        %v572 = vrcp.pop %v558
        %v573 = vmul.f32 1.0, %v572
        %v574 = vrcp.pop %v559
        %v575 = vmul.f32 1.0, %v574
        %v576 = vmul.f32 %v498, %v561
        %v577 = vmul.f32 %v501, %v563
        %v578 = vmul.f32 %v506, %v565
        %v579 = vmul.f32 %v509, %v567
        %v580 = vmul.f32 %v514, %v569
        %v581 = vmul.f32 %v517, %v571
        %v582 = vmul.f32 %v522, %v573
        %v583 = vmul.f32 %v525, %v575
        %v584 = vpack.c.bf16 %v577, %v576
        %v585 = vpack.c.bf16 %v579, %v578
        %v586 = vpack.c.bf16 %v581, %v580
        %v587 = vpack.c.bf16 %v583, %v582
        %v588 = vld [vmem:[#allocation9] sm:$0xff]
        %v589 = vld [vmem:[#allocation9 + $0x8] sm:$0xff]
        %v590 = vld [vmem:[#allocation9 + $0x10] sm:$0xff]
        %v591 = vld [vmem:[#allocation9 + $0x18] sm:$0xff]
        %v592 = vld [vmem:[#allocation9 + $0x20] sm:$0xff]
        %v593 = vld [vmem:[#allocation9 + $0x28] sm:$0xff]
        %v594 = vld [vmem:[#allocation9 + $0x30] sm:$0xff]
        %v595 = vld [vmem:[#allocation9 + $0x38] sm:$0xff]
        %v596 = vld [vmem:[#allocation9 + $0x40] sm:$0xff]
        %v597 = vld [vmem:[#allocation9 + $0x48] sm:$0xff]
        %v598 = vld [vmem:[#allocation9 + $0x50] sm:$0xff]
        %v599 = vld [vmem:[#allocation9 + $0x58] sm:$0xff]
        %v600 = vld [vmem:[#allocation9 + $0x60] sm:$0xff]
        %v601 = vld [vmem:[#allocation9 + $0x68] sm:$0xff]
        %v602 = vld [vmem:[#allocation9 + $0x70] sm:$0xff]
        %v603 = vld [vmem:[#allocation9 + $0x78] sm:$0xff]
        %v604 = vld [vmem:[#allocation9 + $0x80] sm:$0xff]
        %v605 = vld [vmem:[#allocation9 + $0x88] sm:$0xff]
        %v606 = vld [vmem:[#allocation9 + $0x90] sm:$0xff]
        %v607 = vld [vmem:[#allocation9 + $0x98] sm:$0xff]
        %v628 = vunpack.c.l.b16 %v588
        %v629 = vunpack.c.h.b16 %v588
        %v630 = vunpack.c.l.b16 %v589
        %v631 = vunpack.c.h.b16 %v589
        %v632 = vunpack.c.l.b16 %v590
        %v633 = vunpack.c.h.b16 %v590
        %v634 = vunpack.c.l.b16 %v591
        %v635 = vunpack.c.h.b16 %v591
        %v636 = vunpack.c.l.b16 %v592
        %v637 = vunpack.c.h.b16 %v592
        %v638 = vunpack.c.l.b16 %v593
        %v639 = vunpack.c.h.b16 %v593
        %v640 = vunpack.c.l.b16 %v594
        %v641 = vunpack.c.h.b16 %v594
        %v642 = vunpack.c.l.b16 %v595
        %v643 = vunpack.c.h.b16 %v595
        %v644 = vunpack.c.l.b16 %v596
        %v645 = vunpack.c.h.b16 %v596
        %v646 = vunpack.c.l.b16 %v597
        %v647 = vunpack.c.h.b16 %v597
        %v648 = vunpack.c.l.b16 %v598
        %v649 = vunpack.c.h.b16 %v598
        %v650 = vunpack.c.l.b16 %v599
        %v651 = vunpack.c.h.b16 %v599
        %v652 = vunpack.c.l.b16 %v600
        %v653 = vunpack.c.h.b16 %v600
        %v654 = vunpack.c.l.b16 %v601
        %v655 = vunpack.c.h.b16 %v601
        %v656 = vunpack.c.l.b16 %v602
        %v657 = vunpack.c.h.b16 %v602
        %v658 = vunpack.c.l.b16 %v603
        %v659 = vunpack.c.h.b16 %v603
        %v660 = vunpack.c.l.b16 %v604
        %v661 = vunpack.c.h.b16 %v604
        %v662 = vunpack.c.l.b16 %v605
        %v663 = vunpack.c.h.b16 %v605
        %v664 = vunpack.c.l.b16 %v606
        %v665 = vunpack.c.h.b16 %v606
        %v666 = vunpack.c.l.b16 %v607
        %v667 = vunpack.c.h.b16 %v607
        %v668 = vpack.c.b16 %v638, %v628
        %v669 = vpack.c.b16 %v639, %v629
        %v670 = vpack.c.b16 %v640, %v630
        %v671 = vpack.c.b16 %v641, %v631
        %v672 = vpack.c.b16 %v642, %v632
        %v673 = vpack.c.b16 %v643, %v633
        %v674 = vpack.c.b16 %v644, %v634
        %v675 = vpack.c.b16 %v645, %v635
        %v676 = vpack.c.b16 %v646, %v636
        %v677 = vpack.c.b16 %v647, %v637
        %v678 = vpack.c.b16 %v658, %v648
        %v679 = vpack.c.b16 %v659, %v649
        %v680 = vpack.c.b16 %v660, %v650
        %v681 = vpack.c.b16 %v661, %v651
        %v682 = vpack.c.b16 %v662, %v652
        %v683 = vpack.c.b16 %v663, %v653
        %v684 = vpack.c.b16 %v664, %v654
        %v685 = vpack.c.b16 %v665, %v655
        %v686 = vpack.c.b16 %v666, %v656
        %v687 = vpack.c.b16 %v667, %v657
        %vm708 = vcmask 261120
        %v710 = vsel %vm708, %v584, 0
        %v713 = vsel %vm708, %v585, 0
        %v716 = vsel %vm708, %v586, 0
        %v719 = vsel %vm708, %v587, 0
        %721 = vmatprep.subr.bf16.mxu0 %v669
        %722 = vmatpush1.bf16.msra.mxu0 %v668
        %723 = vmatprep.subr.bf16.mxu0 %v679
        %724 = vmatpush1.bf16.msra.mxu0 %v678
        %725 = vmatprep.subr.bf16.mxu0 0
        %726 = vmatpush1.bf16.msra.mxu0 0
        %727 = vmatprep.subr.bf16.mxu0 0
        %728 = vmatpush1.bf16.msra.mxu0 0
        %729 = vmatprep.subr.bf16.mxu0 0
        %730 = vmatpush1.bf16.msra.mxu0 0
        %731 = vmatprep.subr.bf16.mxu0 0
        %732 = vmatpush1.bf16.msra.mxu0 0
        %733 = vmatprep.subr.bf16.mxu0 0
        %734 = vmatpush1.bf16.msra.mxu0 0
        %735 = vmatprep.subr.bf16.mxu0 0
        %736 = vmatpush1.bf16.msra.mxu0 0
        %737 = vmatprep.subr.bf16.mxu0 0
        %738 = vmatpush1.bf16.msra.mxu0 0
        %739 = vmatprep.subr.bf16.mxu0 0
        %740 = vmatpush1.bf16.msra.mxu0 0
        %741 = vmatprep.subr.bf16.mxu0 0
        %742 = vmatpush1.bf16.msra.mxu0 0
        %743 = vmatprep.subr.bf16.mxu0 0
        %744 = vmatpush1.bf16.msra.mxu0 0
        %745 = vmatprep.subr.bf16.mxu0 0
        %746 = vmatpush1.bf16.msra.mxu0 0
        %747 = vmatprep.subr.bf16.mxu0 0
        %748 = vmatpush1.bf16.msra.mxu0 0
        %749 = vmatprep.subr.bf16.mxu0 0
        %750 = vmatpush1.bf16.msra.mxu0 0
        %751 = vmatprep.subr.bf16.mxu0 0
        %752 = vmatpush1.bf16.msra.mxu0 0
        %753 = vmatprep.mubr.bf16.mxu0 0
        %754 = vmatmul.mubr.bf16.gmra.mrb[0].mxu0 %v710
        %v755 = vpop.f32.mrb[0].mxu0
        %v756 = vadd.f32 0.0, %v755
        %v757 = vpop.f32.mrb[0].mxu0
        %v758 = vadd.f32 0.0, %v757
        %v759 = vpop.f32.mrb[0].mxu0
        %v760 = vadd.f32 0.0, %v759
        %v761 = vpop.f32.mrb[0].mxu0
        %v762 = vadd.f32 0.0, %v761
        %763 = vmatprep.mubr.bf16.mxu0 0
        %764 = vmatmul.mubr.bf16.gmra.mrb[0].mxu0 %v713
        %v765 = vpop.f32.mrb[0].mxu0
        %v766 = vadd.f32 0.0, %v765
        %v767 = vpop.f32.mrb[0].mxu0
        %v768 = vadd.f32 0.0, %v767
        %v769 = vpop.f32.mrb[0].mxu0
        %v770 = vadd.f32 0.0, %v769
        %v771 = vpop.f32.mrb[0].mxu0
        %v772 = vadd.f32 0.0, %v771
        %773 = vmatprep.mubr.bf16.mxu0 0
        %774 = vmatmul.mubr.bf16.gmra.mrb[0].mxu0 %v716
        %v775 = vpop.f32.mrb[0].mxu0
        %v776 = vadd.f32 0.0, %v775
        %v777 = vpop.f32.mrb[0].mxu0
        %v778 = vadd.f32 0.0, %v777
        %v779 = vpop.f32.mrb[0].mxu0
        %v780 = vadd.f32 0.0, %v779
        %v781 = vpop.f32.mrb[0].mxu0
        %v782 = vadd.f32 0.0, %v781
        %783 = vmatprep.mubr.bf16.mxu0 0
        %784 = vmatmul.mubr.bf16.gmra.mrb[0].mxu0 %v719
        %v785 = vpop.f32.mrb[0].mxu0
        %v786 = vadd.f32 0.0, %v785
        %v787 = vpop.f32.mrb[0].mxu0
        %v788 = vadd.f32 0.0, %v787
        %v789 = vpop.f32.mrb[0].mxu0
        %v790 = vadd.f32 0.0, %v789
        %v791 = vpop.f32.mrb[0].mxu0
        %v792 = vadd.f32 0.0, %v791
        %793 = vdwg.mxu0
        %794 = vmatprep.subr.bf16.mxu0 %v671
        %795 = vmatpush1.bf16.msra.mxu0 %v670
        %796 = vmatprep.subr.bf16.mxu0 %v681
        %797 = vmatpush1.bf16.msra.mxu0 %v680
        %798 = vmatprep.subr.bf16.mxu0 0
        %799 = vmatpush1.bf16.msra.mxu0 0
        %800 = vmatprep.subr.bf16.mxu0 0
        %801 = vmatpush1.bf16.msra.mxu0 0
        %802 = vmatprep.subr.bf16.mxu0 0
        %803 = vmatpush1.bf16.msra.mxu0 0
        %804 = vmatprep.subr.bf16.mxu0 0
        %805 = vmatpush1.bf16.msra.mxu0 0
        %806 = vmatprep.subr.bf16.mxu0 0
        %807 = vmatpush1.bf16.msra.mxu0 0
        %808 = vmatprep.subr.bf16.mxu0 0
        %809 = vmatpush1.bf16.msra.mxu0 0
        %810 = vmatprep.subr.bf16.mxu0 0
        %811 = vmatpush1.bf16.msra.mxu0 0
        %812 = vmatprep.subr.bf16.mxu0 0
        %813 = vmatpush1.bf16.msra.mxu0 0
        %814 = vmatprep.subr.bf16.mxu0 0
        %815 = vmatpush1.bf16.msra.mxu0 0
        %816 = vmatprep.subr.bf16.mxu0 0
        %817 = vmatpush1.bf16.msra.mxu0 0
        %818 = vmatprep.subr.bf16.mxu0 0
        %819 = vmatpush1.bf16.msra.mxu0 0
        %820 = vmatprep.subr.bf16.mxu0 0
        %821 = vmatpush1.bf16.msra.mxu0 0
        %822 = vmatprep.subr.bf16.mxu0 0
        %823 = vmatpush1.bf16.msra.mxu0 0
        %824 = vmatprep.subr.bf16.mxu0 0
        %825 = vmatpush1.bf16.msra.mxu0 0
        %826 = vmatprep.mubr.bf16.mxu0 0
        %827 = vmatmul.mubr.bf16.gmra.mrb[0].mxu0 %v710
        %v828 = vpop.f32.mrb[0].mxu0
        %v829 = vadd.f32 0.0, %v828
        %v830 = vpop.f32.mrb[0].mxu0
        %v831 = vadd.f32 0.0, %v830
        %v832 = vpop.f32.mrb[0].mxu0
        %v833 = vadd.f32 0.0, %v832
        %v834 = vpop.f32.mrb[0].mxu0
        %v835 = vadd.f32 0.0, %v834
        %836 = vmatprep.mubr.bf16.mxu0 0
        %837 = vmatmul.mubr.bf16.gmra.mrb[0].mxu0 %v713
        %v838 = vpop.f32.mrb[0].mxu0
        %v839 = vadd.f32 0.0, %v838
        %v840 = vpop.f32.mrb[0].mxu0
        %v841 = vadd.f32 0.0, %v840
        %v842 = vpop.f32.mrb[0].mxu0
        %v843 = vadd.f32 0.0, %v842
        %v844 = vpop.f32.mrb[0].mxu0
        %v845 = vadd.f32 0.0, %v844
        %846 = vmatprep.mubr.bf16.mxu0 0
        %847 = vmatmul.mubr.bf16.gmra.mrb[0].mxu0 %v716
        %v848 = vpop.f32.mrb[0].mxu0
        %v849 = vadd.f32 0.0, %v848
        %v850 = vpop.f32.mrb[0].mxu0
        %v851 = vadd.f32 0.0, %v850
        %v852 = vpop.f32.mrb[0].mxu0
        %v853 = vadd.f32 0.0, %v852
        %v854 = vpop.f32.mrb[0].mxu0
        %v855 = vadd.f32 0.0, %v854
        %856 = vmatprep.mubr.bf16.mxu0 0
        %857 = vmatmul.mubr.bf16.gmra.mrb[0].mxu0 %v719
        %v858 = vpop.f32.mrb[0].mxu0
        %v859 = vadd.f32 0.0, %v858
        %v860 = vpop.f32.mrb[0].mxu0
        %v861 = vadd.f32 0.0, %v860
        %v862 = vpop.f32.mrb[0].mxu0
        %v863 = vadd.f32 0.0, %v862
        %v864 = vpop.f32.mrb[0].mxu0
        %v865 = vadd.f32 0.0, %v864
        %866 = vdwg.mxu0
        %867 = vmatprep.subr.bf16.mxu0 %v673
        %868 = vmatpush1.bf16.msra.mxu0 %v672
        %869 = vmatprep.subr.bf16.mxu0 %v683
        %870 = vmatpush1.bf16.msra.mxu0 %v682
        %871 = vmatprep.subr.bf16.mxu0 0
        %872 = vmatpush1.bf16.msra.mxu0 0
        %873 = vmatprep.subr.bf16.mxu0 0
        %874 = vmatpush1.bf16.msra.mxu0 0
        %875 = vmatprep.subr.bf16.mxu0 0
        %876 = vmatpush1.bf16.msra.mxu0 0
        %877 = vmatprep.subr.bf16.mxu0 0
        %878 = vmatpush1.bf16.msra.mxu0 0
        %879 = vmatprep.subr.bf16.mxu0 0
        %880 = vmatpush1.bf16.msra.mxu0 0
        %881 = vmatprep.subr.bf16.mxu0 0
        %882 = vmatpush1.bf16.msra.mxu0 0
        %883 = vmatprep.subr.bf16.mxu0 0
        %884 = vmatpush1.bf16.msra.mxu0 0
        %885 = vmatprep.subr.bf16.mxu0 0
        %886 = vmatpush1.bf16.msra.mxu0 0
        %887 = vmatprep.subr.bf16.mxu0 0
        %888 = vmatpush1.bf16.msra.mxu0 0
        %889 = vmatprep.subr.bf16.mxu0 0
        %890 = vmatpush1.bf16.msra.mxu0 0
        %891 = vmatprep.subr.bf16.mxu0 0
        %892 = vmatpush1.bf16.msra.mxu0 0
        %893 = vmatprep.subr.bf16.mxu0 0
        %894 = vmatpush1.bf16.msra.mxu0 0
        %895 = vmatprep.subr.bf16.mxu0 0
        %896 = vmatpush1.bf16.msra.mxu0 0
        %897 = vmatprep.subr.bf16.mxu0 0
        %898 = vmatpush1.bf16.msra.mxu0 0
        %899 = vmatprep.mubr.bf16.mxu0 0
        %900 = vmatmul.mubr.bf16.gmra.mrb[0].mxu0 %v710
        %v901 = vpop.f32.mrb[0].mxu0
        %v902 = vadd.f32 0.0, %v901
        %v903 = vpop.f32.mrb[0].mxu0
        %v904 = vadd.f32 0.0, %v903
        %v905 = vpop.f32.mrb[0].mxu0
        %v906 = vadd.f32 0.0, %v905
        %v907 = vpop.f32.mrb[0].mxu0
        %v908 = vadd.f32 0.0, %v907
        %909 = vmatprep.mubr.bf16.mxu0 0
        %910 = vmatmul.mubr.bf16.gmra.mrb[0].mxu0 %v713
        %v911 = vpop.f32.mrb[0].mxu0
        %v912 = vadd.f32 0.0, %v911
        %v913 = vpop.f32.mrb[0].mxu0
        %v914 = vadd.f32 0.0, %v913
        %v915 = vpop.f32.mrb[0].mxu0
        %v916 = vadd.f32 0.0, %v915
        %v917 = vpop.f32.mrb[0].mxu0
        %v918 = vadd.f32 0.0, %v917
        %919 = vmatprep.mubr.bf16.mxu0 0
        %920 = vmatmul.mubr.bf16.gmra.mrb[0].mxu0 %v716
        %v921 = vpop.f32.mrb[0].mxu0
        %v922 = vadd.f32 0.0, %v921
        %v923 = vpop.f32.mrb[0].mxu0
        %v924 = vadd.f32 0.0, %v923
        %v925 = vpop.f32.mrb[0].mxu0
        %v926 = vadd.f32 0.0, %v925
        %v927 = vpop.f32.mrb[0].mxu0
        %v928 = vadd.f32 0.0, %v927
        %929 = vmatprep.mubr.bf16.mxu0 0
        %930 = vmatmul.mubr.bf16.gmra.mrb[0].mxu0 %v719
        %v931 = vpop.f32.mrb[0].mxu0
        %v932 = vadd.f32 0.0, %v931
        %v933 = vpop.f32.mrb[0].mxu0
        %v934 = vadd.f32 0.0, %v933
        %v935 = vpop.f32.mrb[0].mxu0
        %v936 = vadd.f32 0.0, %v935
        %v937 = vpop.f32.mrb[0].mxu0
        %v938 = vadd.f32 0.0, %v937
        %939 = vdwg.mxu0
        %940 = vmatprep.subr.bf16.mxu0 %v675
        %941 = vmatpush1.bf16.msra.mxu0 %v674
        %942 = vmatprep.subr.bf16.mxu0 %v685
        %943 = vmatpush1.bf16.msra.mxu0 %v684
        %944 = vmatprep.subr.bf16.mxu0 0
        %945 = vmatpush1.bf16.msra.mxu0 0
        %946 = vmatprep.subr.bf16.mxu0 0
        %947 = vmatpush1.bf16.msra.mxu0 0
        %948 = vmatprep.subr.bf16.mxu0 0
        %949 = vmatpush1.bf16.msra.mxu0 0
        %950 = vmatprep.subr.bf16.mxu0 0
        %951 = vmatpush1.bf16.msra.mxu0 0
        %952 = vmatprep.subr.bf16.mxu0 0
        %953 = vmatpush1.bf16.msra.mxu0 0
        %954 = vmatprep.subr.bf16.mxu0 0
        %955 = vmatpush1.bf16.msra.mxu0 0
        %956 = vmatprep.subr.bf16.mxu0 0
        %957 = vmatpush1.bf16.msra.mxu0 0
        %958 = vmatprep.subr.bf16.mxu0 0
        %959 = vmatpush1.bf16.msra.mxu0 0
        %960 = vmatprep.subr.bf16.mxu0 0
        %961 = vmatpush1.bf16.msra.mxu0 0
        %962 = vmatprep.subr.bf16.mxu0 0
        %963 = vmatpush1.bf16.msra.mxu0 0
        %964 = vmatprep.subr.bf16.mxu0 0
        %965 = vmatpush1.bf16.msra.mxu0 0
        %966 = vmatprep.subr.bf16.mxu0 0
        %967 = vmatpush1.bf16.msra.mxu0 0
        %968 = vmatprep.subr.bf16.mxu0 0
        %969 = vmatpush1.bf16.msra.mxu0 0
        %970 = vmatprep.subr.bf16.mxu0 0
        %971 = vmatpush1.bf16.msra.mxu0 0
        %972 = vmatprep.mubr.bf16.mxu0 0
        %973 = vmatmul.mubr.bf16.gmra.mrb[0].mxu0 %v710
        %v974 = vpop.f32.mrb[0].mxu0
        %v975 = vadd.f32 0.0, %v974
        %v976 = vpop.f32.mrb[0].mxu0
        %v977 = vadd.f32 0.0, %v976
        %v978 = vpop.f32.mrb[0].mxu0
        %v979 = vadd.f32 0.0, %v978
        %v980 = vpop.f32.mrb[0].mxu0
        %v981 = vadd.f32 0.0, %v980
        %982 = vmatprep.mubr.bf16.mxu0 0
        %983 = vmatmul.mubr.bf16.gmra.mrb[0].mxu0 %v713
        %v984 = vpop.f32.mrb[0].mxu0
        %v985 = vadd.f32 0.0, %v984
        %v986 = vpop.f32.mrb[0].mxu0
        %v987 = vadd.f32 0.0, %v986
        %v988 = vpop.f32.mrb[0].mxu0
        %v989 = vadd.f32 0.0, %v988
        %v990 = vpop.f32.mrb[0].mxu0
        %v991 = vadd.f32 0.0, %v990
        %992 = vmatprep.mubr.bf16.mxu0 0
        %993 = vmatmul.mubr.bf16.gmra.mrb[0].mxu0 %v716
        %v994 = vpop.f32.mrb[0].mxu0
        %v995 = vadd.f32 0.0, %v994
        %v996 = vpop.f32.mrb[0].mxu0
        %v997 = vadd.f32 0.0, %v996
        %v998 = vpop.f32.mrb[0].mxu0
        %v999 = vadd.f32 0.0, %v998
        %v1000 = vpop.f32.mrb[0].mxu0
        %v1001 = vadd.f32 0.0, %v1000
        %1002 = vmatprep.mubr.bf16.mxu0 0
        %1003 = vmatmul.mubr.bf16.gmra.mrb[0].mxu0 %v719
        %v1004 = vpop.f32.mrb[0].mxu0
        %v1005 = vadd.f32 0.0, %v1004
        %v1006 = vpop.f32.mrb[0].mxu0
        %v1007 = vadd.f32 0.0, %v1006
        %v1008 = vpop.f32.mrb[0].mxu0
        %v1009 = vadd.f32 0.0, %v1008
        %v1010 = vpop.f32.mrb[0].mxu0
        %v1011 = vadd.f32 0.0, %v1010
        %1012 = vdwg.mxu0
        %1013 = vmatprep.subr.bf16.mxu0 %v677
        %1014 = vmatpush1.bf16.msra.mxu0 %v676
        %1015 = vmatprep.subr.bf16.mxu0 %v687
        %1016 = vmatpush1.bf16.msra.mxu0 %v686
        %1017 = vmatprep.subr.bf16.mxu0 0
        %1018 = vmatpush1.bf16.msra.mxu0 0
        %1019 = vmatprep.subr.bf16.mxu0 0
        %1020 = vmatpush1.bf16.msra.mxu0 0
        %1021 = vmatprep.subr.bf16.mxu0 0
        %1022 = vmatpush1.bf16.msra.mxu0 0
        %1023 = vmatprep.subr.bf16.mxu0 0
        %1024 = vmatpush1.bf16.msra.mxu0 0
        %1025 = vmatprep.subr.bf16.mxu0 0
        %1026 = vmatpush1.bf16.msra.mxu0 0
        %1027 = vmatprep.subr.bf16.mxu0 0
        %1028 = vmatpush1.bf16.msra.mxu0 0
        %1029 = vmatprep.subr.bf16.mxu0 0
        %1030 = vmatpush1.bf16.msra.mxu0 0
        %1031 = vmatprep.subr.bf16.mxu0 0
        %1032 = vmatpush1.bf16.msra.mxu0 0
        %1033 = vmatprep.subr.bf16.mxu0 0
        %1034 = vmatpush1.bf16.msra.mxu0 0
        %1035 = vmatprep.subr.bf16.mxu0 0
        %1036 = vmatpush1.bf16.msra.mxu0 0
        %1037 = vmatprep.subr.bf16.mxu0 0
        %1038 = vmatpush1.bf16.msra.mxu0 0
        %1039 = vmatprep.subr.bf16.mxu0 0
        %1040 = vmatpush1.bf16.msra.mxu0 0
        %1041 = vmatprep.subr.bf16.mxu0 0
        %1042 = vmatpush1.bf16.msra.mxu0 0
        %1043 = vmatprep.subr.bf16.mxu0 0
        %1044 = vmatpush1.bf16.msra.mxu0 0
        %1045 = vmatprep.mubr.bf16.mxu0 0
        %1046 = vmatmul.mubr.bf16.gmra.mrb[0].mxu0 %v710
        %v1047 = vpop.f32.mrb[0].mxu0
        %v1048 = vadd.f32 0.0, %v1047
        %v1049 = vpop.f32.mrb[0].mxu0
        %v1050 = vadd.f32 0.0, %v1049
        %v1051 = vpop.f32.mrb[0].mxu0
        %v1052 = vadd.f32 0.0, %v1051
        %v1053 = vpop.f32.mrb[0].mxu0
        %v1054 = vadd.f32 0.0, %v1053
        %1055 = vmatprep.mubr.bf16.mxu0 0
        %1056 = vmatmul.mubr.bf16.gmra.mrb[0].mxu0 %v713
        %v1057 = vpop.f32.mrb[0].mxu0
        %v1058 = vadd.f32 0.0, %v1057
        %v1059 = vpop.f32.mrb[0].mxu0
        %v1060 = vadd.f32 0.0, %v1059
        %v1061 = vpop.f32.mrb[0].mxu0
        %v1062 = vadd.f32 0.0, %v1061
        %v1063 = vpop.f32.mrb[0].mxu0
        %v1064 = vadd.f32 0.0, %v1063
        %1065 = vmatprep.mubr.bf16.mxu0 0
        %1066 = vmatmul.mubr.bf16.gmra.mrb[0].mxu0 %v716
        %v1067 = vpop.f32.mrb[0].mxu0
        %v1068 = vadd.f32 0.0, %v1067
        %v1069 = vpop.f32.mrb[0].mxu0
        %v1070 = vadd.f32 0.0, %v1069
        %v1071 = vpop.f32.mrb[0].mxu0
        %v1072 = vadd.f32 0.0, %v1071
        %v1073 = vpop.f32.mrb[0].mxu0
        %v1074 = vadd.f32 0.0, %v1073
        %1075 = vmatprep.mubr.bf16.mxu0 0
        %1076 = vmatmul.mubr.bf16.gmra.mrb[0].mxu0 %v719
        %v1077 = vpop.f32.mrb[0].mxu0
        %v1078 = vadd.f32 0.0, %v1077
        %v1079 = vpop.f32.mrb[0].mxu0
        %v1080 = vadd.f32 0.0, %v1079
        %v1081 = vpop.f32.mrb[0].mxu0
        %v1082 = vadd.f32 0.0, %v1081
        %v1083 = vpop.f32.mrb[0].mxu0
        %v1084 = vadd.f32 0.0, %v1083
        %1085 = vdwg.mxu0
        %v1086 = vpack.c.bf16 %v760, %v756
        %v1087 = vpack.c.bf16 %v762, %v758
        %v1088 = vpack.c.bf16 %v833, %v829
        %v1089 = vpack.c.bf16 %v835, %v831
        %v1090 = vpack.c.bf16 %v906, %v902
        %v1091 = vpack.c.bf16 %v908, %v904
        %v1092 = vpack.c.bf16 %v979, %v975
        %v1093 = vpack.c.bf16 %v981, %v977
        %v1094 = vpack.c.bf16 %v1052, %v1048
        %v1095 = vpack.c.bf16 %v1054, %v1050
        %v1096 = vpack.c.bf16 %v770, %v766
        %v1097 = vpack.c.bf16 %v772, %v768
        %v1098 = vpack.c.bf16 %v843, %v839
        %v1099 = vpack.c.bf16 %v845, %v841
        %v1100 = vpack.c.bf16 %v916, %v912
        %v1101 = vpack.c.bf16 %v918, %v914
        %v1102 = vpack.c.bf16 %v989, %v985
        %v1103 = vpack.c.bf16 %v991, %v987
        %v1104 = vpack.c.bf16 %v1062, %v1058
        %v1105 = vpack.c.bf16 %v1064, %v1060
        %v1106 = vpack.c.bf16 %v780, %v776
        %v1107 = vpack.c.bf16 %v782, %v778
        %v1108 = vpack.c.bf16 %v853, %v849
        %v1109 = vpack.c.bf16 %v855, %v851
        %v1110 = vpack.c.bf16 %v926, %v922
        %v1111 = vpack.c.bf16 %v928, %v924
        %v1112 = vpack.c.bf16 %v999, %v995
        %v1113 = vpack.c.bf16 %v1001, %v997
        %v1114 = vpack.c.bf16 %v1072, %v1068
        %v1115 = vpack.c.bf16 %v1074, %v1070
        %v1116 = vpack.c.bf16 %v790, %v786
        %v1117 = vpack.c.bf16 %v792, %v788
        %v1118 = vpack.c.bf16 %v863, %v859
        %v1119 = vpack.c.bf16 %v865, %v861
        %v1120 = vpack.c.bf16 %v936, %v932
        %v1121 = vpack.c.bf16 %v938, %v934
        %v1122 = vpack.c.bf16 %v1009, %v1005
        %v1123 = vpack.c.bf16 %v1011, %v1007
        %v1124 = vpack.c.bf16 %v1082, %v1078
        %v1125 = vpack.c.bf16 %v1084, %v1080
        %v1126 = vld [vmem:[#allocation11] sm:$0xff]
        %v1127 = vld [vmem:[#allocation11 + $0x8] sm:$0x3]
        %v1130 = vlaneseq
        %v1131 = vshrl.u32 %v1130, 7
        %v1132 = vsub.s32 0, %v1131
        %v1133 = vrot.slane %v1126, %v1132
        %v1134 = vlaneseq
        %v1135 = vshrl.u32 %v1134, 7
        %v1136 = vsub.s32 1, %v1135
        %v1137 = vrot.slane %v1126, %v1136
        %v1138 = vlaneseq
        %v1139 = vshrl.u32 %v1138, 7
        %v1140 = vsub.s32 2, %v1139
        %v1141 = vrot.slane %v1126, %v1140
        %v1142 = vlaneseq
        %v1143 = vshrl.u32 %v1142, 7
        %v1144 = vsub.s32 3, %v1143
        %v1145 = vrot.slane %v1126, %v1144
        %v1146 = vlaneseq
        %v1147 = vshrl.u32 %v1146, 7
        %v1148 = vsub.s32 4, %v1147
        %v1149 = vrot.slane %v1126, %v1148
        %v1150 = vlaneseq
        %v1151 = vshrl.u32 %v1150, 7
        %v1152 = vsub.s32 5, %v1151
        %v1153 = vrot.slane %v1126, %v1152
        %v1154 = vlaneseq
        %v1155 = vshrl.u32 %v1154, 7
        %v1156 = vsub.s32 6, %v1155
        %v1157 = vrot.slane %v1126, %v1156
        %v1158 = vlaneseq
        %v1159 = vshrl.u32 %v1158, 7
        %v1160 = vsub.s32 7, %v1159
        %v1161 = vrot.slane %v1126, %v1160
        %v1162 = vlaneseq
        %v1163 = vshrl.u32 %v1162, 7
        %v1164 = vsub.s32 0, %v1163
        %v1165 = vrot.slane %v1127, %v1164
        %v1166 = vlaneseq
        %v1167 = vshrl.u32 %v1166, 7
        %v1168 = vsub.s32 1, %v1167
        %v1169 = vrot.slane %v1127, %v1168
        %v1180 = vpack.c.bf16 %v1133, %v1133
        %v1181 = vpack.c.bf16 %v1137, %v1137
        %v1182 = vpack.c.bf16 %v1141, %v1141
        %v1183 = vpack.c.bf16 %v1145, %v1145
        %v1184 = vpack.c.bf16 %v1149, %v1149
        %v1185 = vpack.c.bf16 %v1153, %v1153
        %v1186 = vpack.c.bf16 %v1157, %v1157
        %v1187 = vpack.c.bf16 %v1161, %v1161
        %v1188 = vpack.c.bf16 %v1165, %v1165
        %v1189 = vpack.c.bf16 %v1169, %v1169
        %v1191 = vpack.i.b16 %v1180, %v1180
        %v1193 = vlaneseq
        %v1194 = vshrl.u32 %v1193, 7
        %v1195 = vsub.s32 0, %v1194
        %v1196 = vrot.slane %v1191, %v1195
        %v1198 = vpack.i.b16 %v1181, %v1181
        %v1200 = vlaneseq
        %v1201 = vshrl.u32 %v1200, 7
        %v1202 = vsub.s32 0, %v1201
        %v1203 = vrot.slane %v1198, %v1202
        %v1205 = vpack.i.b16 %v1182, %v1182
        %v1207 = vlaneseq
        %v1208 = vshrl.u32 %v1207, 7
        %v1209 = vsub.s32 0, %v1208
        %v1210 = vrot.slane %v1205, %v1209
        %v1212 = vpack.i.b16 %v1183, %v1183
        %v1214 = vlaneseq
        %v1215 = vshrl.u32 %v1214, 7
        %v1216 = vsub.s32 0, %v1215
        %v1217 = vrot.slane %v1212, %v1216
        %v1219 = vpack.i.b16 %v1184, %v1184
        %v1221 = vlaneseq
        %v1222 = vshrl.u32 %v1221, 7
        %v1223 = vsub.s32 0, %v1222
        %v1224 = vrot.slane %v1219, %v1223
        %v1226 = vpack.i.b16 %v1185, %v1185
        %v1228 = vlaneseq
        %v1229 = vshrl.u32 %v1228, 7
        %v1230 = vsub.s32 0, %v1229
        %v1231 = vrot.slane %v1226, %v1230
        %v1233 = vpack.i.b16 %v1186, %v1186
        %v1235 = vlaneseq
        %v1236 = vshrl.u32 %v1235, 7
        %v1237 = vsub.s32 0, %v1236
        %v1238 = vrot.slane %v1233, %v1237
        %v1240 = vpack.i.b16 %v1187, %v1187
        %v1242 = vlaneseq
        %v1243 = vshrl.u32 %v1242, 7
        %v1244 = vsub.s32 0, %v1243
        %v1245 = vrot.slane %v1240, %v1244
        %v1247 = vpack.i.b16 %v1188, %v1188
        %v1249 = vlaneseq
        %v1250 = vshrl.u32 %v1249, 7
        %v1251 = vsub.s32 0, %v1250
        %v1252 = vrot.slane %v1247, %v1251
        %v1254 = vpack.i.b16 %v1189, %v1189
        %v1256 = vlaneseq
        %v1257 = vshrl.u32 %v1256, 7
        %v1258 = vsub.s32 0, %v1257
        %v1259 = vrot.slane %v1254, %v1258
        %v1260 = vadd.bf16 %v1086, %v1196
        %v1261 = vadd.bf16 %v1087, %v1203
        %v1262 = vadd.bf16 %v1088, %v1210
        %v1263 = vadd.bf16 %v1089, %v1217
        %v1264 = vadd.bf16 %v1090, %v1224
        %v1265 = vadd.bf16 %v1091, %v1231
        %v1266 = vadd.bf16 %v1092, %v1238
        %v1267 = vadd.bf16 %v1093, %v1245
        %v1268 = vadd.bf16 %v1094, %v1252
        %v1269 = vadd.bf16 %v1095, %v1259
        %v1270 = vadd.bf16 %v1096, %v1196
        %v1271 = vadd.bf16 %v1097, %v1203
        %v1272 = vadd.bf16 %v1098, %v1210
        %v1273 = vadd.bf16 %v1099, %v1217
        %v1274 = vadd.bf16 %v1100, %v1224
        %v1275 = vadd.bf16 %v1101, %v1231
        %v1276 = vadd.bf16 %v1102, %v1238
        %v1277 = vadd.bf16 %v1103, %v1245
        %v1278 = vadd.bf16 %v1104, %v1252
        %v1279 = vadd.bf16 %v1105, %v1259
        %v1280 = vadd.bf16 %v1106, %v1196
        %v1281 = vadd.bf16 %v1107, %v1203
        %v1282 = vadd.bf16 %v1108, %v1210
        %v1283 = vadd.bf16 %v1109, %v1217
        %v1284 = vadd.bf16 %v1110, %v1224
        %v1285 = vadd.bf16 %v1111, %v1231
        %v1286 = vadd.bf16 %v1112, %v1238
        %v1287 = vadd.bf16 %v1113, %v1245
        %v1288 = vadd.bf16 %v1114, %v1252
        %v1289 = vadd.bf16 %v1115, %v1259
        %v1290 = vadd.bf16 %v1116, %v1196
        %v1291 = vadd.bf16 %v1117, %v1203
        %v1292 = vadd.bf16 %v1118, %v1210
        %v1293 = vadd.bf16 %v1119, %v1217
        %v1294 = vadd.bf16 %v1120, %v1224
        %v1295 = vadd.bf16 %v1121, %v1231
        %v1296 = vadd.bf16 %v1122, %v1238
        %v1297 = vadd.bf16 %v1123, %v1245
        %v1298 = vadd.bf16 %v1124, %v1252
        %v1299 = vadd.bf16 %v1125, %v1259
        %v1300 = vxor.u32 %v1260, 2147516416
        %v1301 = vxor.u32 %v1261, 2147516416
        %v1302 = vxor.u32 %v1262, 2147516416
        %v1303 = vxor.u32 %v1263, 2147516416
        %v1304 = vxor.u32 %v1264, 2147516416
        %v1305 = vxor.u32 %v1265, 2147516416
        %v1306 = vxor.u32 %v1266, 2147516416
        %v1307 = vxor.u32 %v1267, 2147516416
        %v1308 = vxor.u32 %v1268, 2147516416
        %v1309 = vxor.u32 %v1269, 2147516416
        %v1310 = vxor.u32 %v1270, 2147516416
        %v1311 = vxor.u32 %v1271, 2147516416
        %v1312 = vxor.u32 %v1272, 2147516416
        %v1313 = vxor.u32 %v1273, 2147516416
        %v1314 = vxor.u32 %v1274, 2147516416
        %v1315 = vxor.u32 %v1275, 2147516416
        %v1316 = vxor.u32 %v1276, 2147516416
        %v1317 = vxor.u32 %v1277, 2147516416
        %v1318 = vxor.u32 %v1278, 2147516416
        %v1319 = vxor.u32 %v1279, 2147516416
        %v1320 = vxor.u32 %v1280, 2147516416
        %v1321 = vxor.u32 %v1281, 2147516416
        %v1322 = vxor.u32 %v1282, 2147516416
        %v1323 = vxor.u32 %v1283, 2147516416
        %v1324 = vxor.u32 %v1284, 2147516416
        %v1325 = vxor.u32 %v1285, 2147516416
        %v1326 = vxor.u32 %v1286, 2147516416
        %v1327 = vxor.u32 %v1287, 2147516416
        %v1328 = vxor.u32 %v1288, 2147516416
        %v1329 = vxor.u32 %v1289, 2147516416
        %v1330 = vxor.u32 %v1290, 2147516416
        %v1331 = vxor.u32 %v1291, 2147516416
        %v1332 = vxor.u32 %v1292, 2147516416
        %v1333 = vxor.u32 %v1293, 2147516416
        %v1334 = vxor.u32 %v1294, 2147516416
        %v1335 = vxor.u32 %v1295, 2147516416
        %v1336 = vxor.u32 %v1296, 2147516416
        %v1337 = vxor.u32 %v1297, 2147516416
        %v1338 = vxor.u32 %v1298, 2147516416
        %v1339 = vxor.u32 %v1299, 2147516416
        %v1341 = vmul.bf16 %v1300, 1069105081
        %v1342 = vpow.bf16.pop %v1341
        %v1344 = vmul.bf16 %v1301, 1069105081
        %v1345 = vpow.bf16.pop %v1344
        %v1347 = vmul.bf16 %v1302, 1069105081
        %v1348 = vpow.bf16.pop %v1347
        %v1350 = vmul.bf16 %v1303, 1069105081
        %v1351 = vpow.bf16.pop %v1350
        %v1353 = vmul.bf16 %v1304, 1069105081
        %v1354 = vpow.bf16.pop %v1353
        %v1356 = vmul.bf16 %v1305, 1069105081
        %v1357 = vpow.bf16.pop %v1356
        %v1359 = vmul.bf16 %v1306, 1069105081
        %v1360 = vpow.bf16.pop %v1359
        %v1362 = vmul.bf16 %v1307, 1069105081
        %v1363 = vpow.bf16.pop %v1362
        %v1365 = vmul.bf16 %v1308, 1069105081
        %v1366 = vpow.bf16.pop %v1365
        %v1368 = vmul.bf16 %v1309, 1069105081
        %v1369 = vpow.bf16.pop %v1368
        %v1371 = vmul.bf16 %v1310, 1069105081
        %v1372 = vpow.bf16.pop %v1371
        %v1374 = vmul.bf16 %v1311, 1069105081
        %v1375 = vpow.bf16.pop %v1374
        %v1377 = vmul.bf16 %v1312, 1069105081
        %v1378 = vpow.bf16.pop %v1377
        %v1380 = vmul.bf16 %v1313, 1069105081
        %v1381 = vpow.bf16.pop %v1380
        %v1383 = vmul.bf16 %v1314, 1069105081
        %v1384 = vpow.bf16.pop %v1383
        %v1386 = vmul.bf16 %v1315, 1069105081
        %v1387 = vpow.bf16.pop %v1386
        %v1389 = vmul.bf16 %v1316, 1069105081
        %v1390 = vpow.bf16.pop %v1389
        %v1392 = vmul.bf16 %v1317, 1069105081
        %v1393 = vpow.bf16.pop %v1392
        %v1395 = vmul.bf16 %v1318, 1069105081
        %v1396 = vpow.bf16.pop %v1395
        %v1398 = vmul.bf16 %v1319, 1069105081
        %v1399 = vpow.bf16.pop %v1398
        %v1401 = vmul.bf16 %v1320, 1069105081
        %v1402 = vpow.bf16.pop %v1401
        %v1404 = vmul.bf16 %v1321, 1069105081
        %v1405 = vpow.bf16.pop %v1404
        %v1407 = vmul.bf16 %v1322, 1069105081
        %v1408 = vpow.bf16.pop %v1407
        %v1410 = vmul.bf16 %v1323, 1069105081
        %v1411 = vpow.bf16.pop %v1410
        %v1413 = vmul.bf16 %v1324, 1069105081
        %v1414 = vpow.bf16.pop %v1413
        %v1416 = vmul.bf16 %v1325, 1069105081
        %v1417 = vpow.bf16.pop %v1416
        %v1419 = vmul.bf16 %v1326, 1069105081
        %v1420 = vpow.bf16.pop %v1419
        %v1422 = vmul.bf16 %v1327, 1069105081
        %v1423 = vpow.bf16.pop %v1422
        %v1425 = vmul.bf16 %v1328, 1069105081
        %v1426 = vpow.bf16.pop %v1425
        %v1428 = vmul.bf16 %v1329, 1069105081
        %v1429 = vpow.bf16.pop %v1428
        %v1431 = vmul.bf16 %v1330, 1069105081
        %v1432 = vpow.bf16.pop %v1431
        %v1434 = vmul.bf16 %v1331, 1069105081
        %v1435 = vpow.bf16.pop %v1434
        %v1437 = vmul.bf16 %v1332, 1069105081
        %v1438 = vpow.bf16.pop %v1437
        %v1440 = vmul.bf16 %v1333, 1069105081
        %v1441 = vpow.bf16.pop %v1440
        %v1443 = vmul.bf16 %v1334, 1069105081
        %v1444 = vpow.bf16.pop %v1443
        %v1446 = vmul.bf16 %v1335, 1069105081
        %v1447 = vpow.bf16.pop %v1446
        %v1449 = vmul.bf16 %v1336, 1069105081
        %v1450 = vpow.bf16.pop %v1449
        %v1452 = vmul.bf16 %v1337, 1069105081
        %v1453 = vpow.bf16.pop %v1452
        %v1455 = vmul.bf16 %v1338, 1069105081
        %v1456 = vpow.bf16.pop %v1455
        %v1458 = vmul.bf16 %v1339, 1069105081
        %v1459 = vpow.bf16.pop %v1458
        %v1460 = vadd.bf16 %v1342, 1065369472
        %v1461 = vadd.bf16 %v1345, 1065369472
        %v1462 = vadd.bf16 %v1348, 1065369472
        %v1463 = vadd.bf16 %v1351, 1065369472
        %v1464 = vadd.bf16 %v1354, 1065369472
        %v1465 = vadd.bf16 %v1357, 1065369472
        %v1466 = vadd.bf16 %v1360, 1065369472
        %v1467 = vadd.bf16 %v1363, 1065369472
        %v1468 = vadd.bf16 %v1366, 1065369472
        %v1469 = vadd.bf16 %v1369, 1065369472
        %v1470 = vadd.bf16 %v1372, 1065369472
        %v1471 = vadd.bf16 %v1375, 1065369472
        %v1472 = vadd.bf16 %v1378, 1065369472
        %v1473 = vadd.bf16 %v1381, 1065369472
        %v1474 = vadd.bf16 %v1384, 1065369472
        %v1475 = vadd.bf16 %v1387, 1065369472
        %v1476 = vadd.bf16 %v1390, 1065369472
        %v1477 = vadd.bf16 %v1393, 1065369472
        %v1478 = vadd.bf16 %v1396, 1065369472
        %v1479 = vadd.bf16 %v1399, 1065369472
        %v1480 = vadd.bf16 %v1402, 1065369472
        %v1481 = vadd.bf16 %v1405, 1065369472
        %v1482 = vadd.bf16 %v1408, 1065369472
        %v1483 = vadd.bf16 %v1411, 1065369472
        %v1484 = vadd.bf16 %v1414, 1065369472
        %v1485 = vadd.bf16 %v1417, 1065369472
        %v1486 = vadd.bf16 %v1420, 1065369472
        %v1487 = vadd.bf16 %v1423, 1065369472
        %v1488 = vadd.bf16 %v1426, 1065369472
        %v1489 = vadd.bf16 %v1429, 1065369472
        %v1490 = vadd.bf16 %v1432, 1065369472
        %v1491 = vadd.bf16 %v1435, 1065369472
        %v1492 = vadd.bf16 %v1438, 1065369472
        %v1493 = vadd.bf16 %v1441, 1065369472
        %v1494 = vadd.bf16 %v1444, 1065369472
        %v1495 = vadd.bf16 %v1447, 1065369472
        %v1496 = vadd.bf16 %v1450, 1065369472
        %v1497 = vadd.bf16 %v1453, 1065369472
        %v1498 = vadd.bf16 %v1456, 1065369472
        %v1499 = vadd.bf16 %v1459, 1065369472
        %v1500 = vrcp.bf16.pop %v1460
        %v1501 = vmul.bf16 1065369472, %v1500
        %v1502 = vrcp.bf16.pop %v1461
        %v1503 = vmul.bf16 1065369472, %v1502
        %v1504 = vrcp.bf16.pop %v1462
        %v1505 = vmul.bf16 1065369472, %v1504
        %v1506 = vrcp.bf16.pop %v1463
        %v1507 = vmul.bf16 1065369472, %v1506
        %v1508 = vrcp.bf16.pop %v1464
        %v1509 = vmul.bf16 1065369472, %v1508
        %v1510 = vrcp.bf16.pop %v1465
        %v1511 = vmul.bf16 1065369472, %v1510
        %v1512 = vrcp.bf16.pop %v1466
        %v1513 = vmul.bf16 1065369472, %v1512
        %v1514 = vrcp.bf16.pop %v1467
        %v1515 = vmul.bf16 1065369472, %v1514
        %v1516 = vrcp.bf16.pop %v1468
        %v1517 = vmul.bf16 1065369472, %v1516
        %v1518 = vrcp.bf16.pop %v1469
        %v1519 = vmul.bf16 1065369472, %v1518
        %v1520 = vrcp.bf16.pop %v1470
        %v1521 = vmul.bf16 1065369472, %v1520
        %v1522 = vrcp.bf16.pop %v1471
        %v1523 = vmul.bf16 1065369472, %v1522
        %v1524 = vrcp.bf16.pop %v1472
        %v1525 = vmul.bf16 1065369472, %v1524
        %v1526 = vrcp.bf16.pop %v1473
        %v1527 = vmul.bf16 1065369472, %v1526
        %v1528 = vrcp.bf16.pop %v1474
        %v1529 = vmul.bf16 1065369472, %v1528
        %v1530 = vrcp.bf16.pop %v1475
        %v1531 = vmul.bf16 1065369472, %v1530
        %v1532 = vrcp.bf16.pop %v1476
        %v1533 = vmul.bf16 1065369472, %v1532
        %v1534 = vrcp.bf16.pop %v1477
        %v1535 = vmul.bf16 1065369472, %v1534
        %v1536 = vrcp.bf16.pop %v1478
        %v1537 = vmul.bf16 1065369472, %v1536
        %v1538 = vrcp.bf16.pop %v1479
        %v1539 = vmul.bf16 1065369472, %v1538
        %v1540 = vrcp.bf16.pop %v1480
        %v1541 = vmul.bf16 1065369472, %v1540
        %v1542 = vrcp.bf16.pop %v1481
        %v1543 = vmul.bf16 1065369472, %v1542
        %v1544 = vrcp.bf16.pop %v1482
        %v1545 = vmul.bf16 1065369472, %v1544
        %v1546 = vrcp.bf16.pop %v1483
        %v1547 = vmul.bf16 1065369472, %v1546
        %v1548 = vrcp.bf16.pop %v1484
        %v1549 = vmul.bf16 1065369472, %v1548
        %v1550 = vrcp.bf16.pop %v1485
        %v1551 = vmul.bf16 1065369472, %v1550
        %v1552 = vrcp.bf16.pop %v1486
        %v1553 = vmul.bf16 1065369472, %v1552
        %v1554 = vrcp.bf16.pop %v1487
        %v1555 = vmul.bf16 1065369472, %v1554
        %v1556 = vrcp.bf16.pop %v1488
        %v1557 = vmul.bf16 1065369472, %v1556
        %v1558 = vrcp.bf16.pop %v1489
        %v1559 = vmul.bf16 1065369472, %v1558
        %v1560 = vrcp.bf16.pop %v1490
        %v1561 = vmul.bf16 1065369472, %v1560
        %v1562 = vrcp.bf16.pop %v1491
        %v1563 = vmul.bf16 1065369472, %v1562
        %v1564 = vrcp.bf16.pop %v1492
        %v1565 = vmul.bf16 1065369472, %v1564
        %v1566 = vrcp.bf16.pop %v1493
        %v1567 = vmul.bf16 1065369472, %v1566
        %v1568 = vrcp.bf16.pop %v1494
        %v1569 = vmul.bf16 1065369472, %v1568
        %v1570 = vrcp.bf16.pop %v1495
        %v1571 = vmul.bf16 1065369472, %v1570
        %v1572 = vrcp.bf16.pop %v1496
        %v1573 = vmul.bf16 1065369472, %v1572
        %v1574 = vrcp.bf16.pop %v1497
        %v1575 = vmul.bf16 1065369472, %v1574
        %v1576 = vrcp.bf16.pop %v1498
        %v1577 = vmul.bf16 1065369472, %v1576
        %v1578 = vrcp.bf16.pop %v1499
        %v1579 = vmul.bf16 1065369472, %v1578
        %v1580 = vmul.bf16 %v1260, %v1501
        %v1581 = vmul.bf16 %v1261, %v1503
        %v1582 = vmul.bf16 %v1262, %v1505
        %v1583 = vmul.bf16 %v1263, %v1507
        %v1584 = vmul.bf16 %v1264, %v1509
        %v1585 = vmul.bf16 %v1265, %v1511
        %v1586 = vmul.bf16 %v1266, %v1513
        %v1587 = vmul.bf16 %v1267, %v1515
        %v1588 = vmul.bf16 %v1268, %v1517
        %v1589 = vmul.bf16 %v1269, %v1519
        %v1590 = vmul.bf16 %v1270, %v1521
        %v1591 = vmul.bf16 %v1271, %v1523
        %v1592 = vmul.bf16 %v1272, %v1525
        %v1593 = vmul.bf16 %v1273, %v1527
        %v1594 = vmul.bf16 %v1274, %v1529
        %v1595 = vmul.bf16 %v1275, %v1531
        %v1596 = vmul.bf16 %v1276, %v1533
        %v1597 = vmul.bf16 %v1277, %v1535
        %v1598 = vmul.bf16 %v1278, %v1537
        %v1599 = vmul.bf16 %v1279, %v1539
        %v1600 = vmul.bf16 %v1280, %v1541
        %v1601 = vmul.bf16 %v1281, %v1543
        %v1602 = vmul.bf16 %v1282, %v1545
        %v1603 = vmul.bf16 %v1283, %v1547
        %v1604 = vmul.bf16 %v1284, %v1549
        %v1605 = vmul.bf16 %v1285, %v1551
        %v1606 = vmul.bf16 %v1286, %v1553
        %v1607 = vmul.bf16 %v1287, %v1555
        %v1608 = vmul.bf16 %v1288, %v1557
        %v1609 = vmul.bf16 %v1289, %v1559
        %v1610 = vmul.bf16 %v1290, %v1561
        %v1611 = vmul.bf16 %v1291, %v1563
        %v1612 = vmul.bf16 %v1292, %v1565
        %v1613 = vmul.bf16 %v1293, %v1567
        %v1614 = vmul.bf16 %v1294, %v1569
        %v1615 = vmul.bf16 %v1295, %v1571
        %v1616 = vmul.bf16 %v1296, %v1573
        %v1617 = vmul.bf16 %v1297, %v1575
        %v1618 = vmul.bf16 %v1298, %v1577
        %v1619 = vmul.bf16 %v1299, %v1579
        %v1620 = vlaneseq
        %v1621 = vand.u32 %v1620, 127
        %s1622 = smul.u32 %s32, 64
        %v1623 = vstv %s1622
        %v1624 = vadd.s32 %v1621, %v1623
        %vm1625 = vcmp.lt.s32.totalorder %v1624, 64
        %v1626 = vsel %vm1625, 1.0, 0.0
        %v1627 = vpack.c.bf16 %v1626, %v1626
        %v1628 = vld [vmem:[#allocation2] sm:$0xff]
        %v1629 = vld [vmem:[#allocation2 + $0x8] sm:$0x3]
        %vm1630 = vcmask 523264
        %v1632 = vsel %vm1630, %v1627, 0
        %1634 = vmatprep.subr.bf16.mxu0 %v1581
        %1635 = vmatpush1.bf16.msra.mxu0 %v1580
        %1636 = vmatprep.subr.bf16.mxu0 %v1591
        %1637 = vmatpush1.bf16.msra.mxu0 %v1590
        %1638 = vmatprep.subr.bf16.mxu0 %v1601
        %1639 = vmatpush1.bf16.msra.mxu0 %v1600
        %1640 = vmatprep.subr.bf16.mxu0 %v1611
        %1641 = vmatpush1.bf16.msra.mxu0 %v1610
        %1642 = vmatprep.subr.bf16.mxu0 0
        %1643 = vmatpush1.bf16.msra.mxu0 0
        %1644 = vmatprep.subr.bf16.mxu0 0
        %1645 = vmatpush1.bf16.msra.mxu0 0
        %1646 = vmatprep.subr.bf16.mxu0 0
        %1647 = vmatpush1.bf16.msra.mxu0 0
        %1648 = vmatprep.subr.bf16.mxu0 0
        %1649 = vmatpush1.bf16.msra.mxu0 0
        %1650 = vmatprep.subr.bf16.mxu0 0
        %1651 = vmatpush1.bf16.msra.mxu0 0
        %1652 = vmatprep.subr.bf16.mxu0 0
        %1653 = vmatpush1.bf16.msra.mxu0 0
        %1654 = vmatprep.subr.bf16.mxu0 0
        %1655 = vmatpush1.bf16.msra.mxu0 0
        %1656 = vmatprep.subr.bf16.mxu0 0
        %1657 = vmatpush1.bf16.msra.mxu0 0
        %1658 = vmatprep.subr.bf16.mxu0 0
        %1659 = vmatpush1.bf16.msra.mxu0 0
        %1660 = vmatprep.subr.bf16.mxu0 0
        %1661 = vmatpush1.bf16.msra.mxu0 0
        %1662 = vmatprep.subr.bf16.mxu0 0
        %1663 = vmatpush1.bf16.msra.mxu0 0
        %1664 = vmatprep.subr.bf16.mxu0 0
        %1665 = vmatpush1.bf16.msra.mxu0 0
        %1666 = vmatprep.mubr.bf16.mxu0 0
        %1667 = vmatmul.mubr.bf16.gmra.mrb[0].mxu0 %v1632
        %v1668 = vpop.f32.mrb[0].mxu0
        %v1669 = vadd.f32 0.0, %v1668
        %v1670 = vpop.f32.mrb[0].mxu0
        %v1671 = vadd.f32 0.0, %v1670
        %v1672 = vpop.f32.mrb[0].mxu0
        %v1673 = vpop.f32.mrb[0].mxu0
        %1674 = vdwg.mxu0
        %1675 = vmatprep.subr.bf16.mxu0 %v1583
        %1676 = vmatpush1.bf16.msra.mxu0 %v1582
        %1677 = vmatprep.subr.bf16.mxu0 %v1593
        %1678 = vmatpush1.bf16.msra.mxu0 %v1592
        %1679 = vmatprep.subr.bf16.mxu0 %v1603
        %1680 = vmatpush1.bf16.msra.mxu0 %v1602
        %1681 = vmatprep.subr.bf16.mxu0 %v1613
        %1682 = vmatpush1.bf16.msra.mxu0 %v1612
        %1683 = vmatprep.subr.bf16.mxu0 0
        %1684 = vmatpush1.bf16.msra.mxu0 0
        %1685 = vmatprep.subr.bf16.mxu0 0
        %1686 = vmatpush1.bf16.msra.mxu0 0
        %1687 = vmatprep.subr.bf16.mxu0 0
        %1688 = vmatpush1.bf16.msra.mxu0 0
        %1689 = vmatprep.subr.bf16.mxu0 0
        %1690 = vmatpush1.bf16.msra.mxu0 0
        %1691 = vmatprep.subr.bf16.mxu0 0
        %1692 = vmatpush1.bf16.msra.mxu0 0
        %1693 = vmatprep.subr.bf16.mxu0 0
        %1694 = vmatpush1.bf16.msra.mxu0 0
        %1695 = vmatprep.subr.bf16.mxu0 0
        %1696 = vmatpush1.bf16.msra.mxu0 0
        %1697 = vmatprep.subr.bf16.mxu0 0
        %1698 = vmatpush1.bf16.msra.mxu0 0
        %1699 = vmatprep.subr.bf16.mxu0 0
        %1700 = vmatpush1.bf16.msra.mxu0 0
        %1701 = vmatprep.subr.bf16.mxu0 0
        %1702 = vmatpush1.bf16.msra.mxu0 0
        %1703 = vmatprep.subr.bf16.mxu0 0
        %1704 = vmatpush1.bf16.msra.mxu0 0
        %1705 = vmatprep.subr.bf16.mxu0 0
        %1706 = vmatpush1.bf16.msra.mxu0 0
        %1707 = vmatprep.mubr.bf16.mxu0 0
        %1708 = vmatmul.mubr.bf16.gmra.mrb[0].mxu0 %v1632
        %v1709 = vpop.f32.mrb[0].mxu0
        %v1710 = vadd.f32 0.0, %v1709
        %v1711 = vpop.f32.mrb[0].mxu0
        %v1712 = vadd.f32 0.0, %v1711
        %v1713 = vpop.f32.mrb[0].mxu0
        %v1714 = vpop.f32.mrb[0].mxu0
        %1715 = vdwg.mxu0
        %1716 = vmatprep.subr.bf16.mxu0 %v1585
        %1717 = vmatpush1.bf16.msra.mxu0 %v1584
        %1718 = vmatprep.subr.bf16.mxu0 %v1595
        %1719 = vmatpush1.bf16.msra.mxu0 %v1594
        %1720 = vmatprep.subr.bf16.mxu0 %v1605
        %1721 = vmatpush1.bf16.msra.mxu0 %v1604
        %1722 = vmatprep.subr.bf16.mxu0 %v1615
        %1723 = vmatpush1.bf16.msra.mxu0 %v1614
        %1724 = vmatprep.subr.bf16.mxu0 0
        %1725 = vmatpush1.bf16.msra.mxu0 0
        %1726 = vmatprep.subr.bf16.mxu0 0
        %1727 = vmatpush1.bf16.msra.mxu0 0
        %1728 = vmatprep.subr.bf16.mxu0 0
        %1729 = vmatpush1.bf16.msra.mxu0 0
        %1730 = vmatprep.subr.bf16.mxu0 0
        %1731 = vmatpush1.bf16.msra.mxu0 0
        %1732 = vmatprep.subr.bf16.mxu0 0
        %1733 = vmatpush1.bf16.msra.mxu0 0
        %1734 = vmatprep.subr.bf16.mxu0 0
        %1735 = vmatpush1.bf16.msra.mxu0 0
        %1736 = vmatprep.subr.bf16.mxu0 0
        %1737 = vmatpush1.bf16.msra.mxu0 0
        %1738 = vmatprep.subr.bf16.mxu0 0
        %1739 = vmatpush1.bf16.msra.mxu0 0
        %1740 = vmatprep.subr.bf16.mxu0 0
        %1741 = vmatpush1.bf16.msra.mxu0 0
        %1742 = vmatprep.subr.bf16.mxu0 0
        %1743 = vmatpush1.bf16.msra.mxu0 0
        %1744 = vmatprep.subr.bf16.mxu0 0
        %1745 = vmatpush1.bf16.msra.mxu0 0
        %1746 = vmatprep.subr.bf16.mxu0 0
        %1747 = vmatpush1.bf16.msra.mxu0 0
        %1748 = vmatprep.mubr.bf16.mxu0 0
        %1749 = vmatmul.mubr.bf16.gmra.mrb[0].mxu0 %v1632
        %v1750 = vpop.f32.mrb[0].mxu0
        %v1751 = vadd.f32 0.0, %v1750
        %v1752 = vpop.f32.mrb[0].mxu0
        %v1753 = vadd.f32 0.0, %v1752
        %v1754 = vpop.f32.mrb[0].mxu0
        %v1755 = vpop.f32.mrb[0].mxu0
        %1756 = vdwg.mxu0
        %1757 = vmatprep.subr.bf16.mxu0 %v1587
        %1758 = vmatpush1.bf16.msra.mxu0 %v1586
        %1759 = vmatprep.subr.bf16.mxu0 %v1597
        %1760 = vmatpush1.bf16.msra.mxu0 %v1596
        %1761 = vmatprep.subr.bf16.mxu0 %v1607
        %1762 = vmatpush1.bf16.msra.mxu0 %v1606
        %1763 = vmatprep.subr.bf16.mxu0 %v1617
        %1764 = vmatpush1.bf16.msra.mxu0 %v1616
        %1765 = vmatprep.subr.bf16.mxu0 0
        %1766 = vmatpush1.bf16.msra.mxu0 0
        %1767 = vmatprep.subr.bf16.mxu0 0
        %1768 = vmatpush1.bf16.msra.mxu0 0
        %1769 = vmatprep.subr.bf16.mxu0 0
        %1770 = vmatpush1.bf16.msra.mxu0 0
        %1771 = vmatprep.subr.bf16.mxu0 0
        %1772 = vmatpush1.bf16.msra.mxu0 0
        %1773 = vmatprep.subr.bf16.mxu0 0
        %1774 = vmatpush1.bf16.msra.mxu0 0
        %1775 = vmatprep.subr.bf16.mxu0 0
        %1776 = vmatpush1.bf16.msra.mxu0 0
        %1777 = vmatprep.subr.bf16.mxu0 0
        %1778 = vmatpush1.bf16.msra.mxu0 0
        %1779 = vmatprep.subr.bf16.mxu0 0
        %1780 = vmatpush1.bf16.msra.mxu0 0
        %1781 = vmatprep.subr.bf16.mxu0 0
        %1782 = vmatpush1.bf16.msra.mxu0 0
        %1783 = vmatprep.subr.bf16.mxu0 0
        %1784 = vmatpush1.bf16.msra.mxu0 0
        %1785 = vmatprep.subr.bf16.mxu0 0
        %1786 = vmatpush1.bf16.msra.mxu0 0
        %1787 = vmatprep.subr.bf16.mxu0 0
        %1788 = vmatpush1.bf16.msra.mxu0 0
        %1789 = vmatprep.mubr.bf16.mxu0 0
        %1790 = vmatmul.mubr.bf16.gmra.mrb[0].mxu0 %v1632
        %v1791 = vpop.f32.mrb[0].mxu0
        %v1792 = vadd.f32 0.0, %v1791
        %v1793 = vpop.f32.mrb[0].mxu0
        %v1794 = vadd.f32 0.0, %v1793
        %v1795 = vpop.f32.mrb[0].mxu0
        %v1796 = vpop.f32.mrb[0].mxu0
        %1797 = vdwg.mxu0
        %1798 = vmatprep.subr.bf16.mxu0 %v1589
        %1799 = vmatpush1.bf16.msra.mxu0 %v1588
        %1800 = vmatprep.subr.bf16.mxu0 %v1599
        %1801 = vmatpush1.bf16.msra.mxu0 %v1598
        %1802 = vmatprep.subr.bf16.mxu0 %v1609
        %1803 = vmatpush1.bf16.msra.mxu0 %v1608
        %1804 = vmatprep.subr.bf16.mxu0 %v1619
        %1805 = vmatpush1.bf16.msra.mxu0 %v1618
        %1806 = vmatprep.subr.bf16.mxu0 0
        %1807 = vmatpush1.bf16.msra.mxu0 0
        %1808 = vmatprep.subr.bf16.mxu0 0
        %1809 = vmatpush1.bf16.msra.mxu0 0
        %1810 = vmatprep.subr.bf16.mxu0 0
        %1811 = vmatpush1.bf16.msra.mxu0 0
        %1812 = vmatprep.subr.bf16.mxu0 0
        %1813 = vmatpush1.bf16.msra.mxu0 0
        %1814 = vmatprep.subr.bf16.mxu0 0
        %1815 = vmatpush1.bf16.msra.mxu0 0
        %1816 = vmatprep.subr.bf16.mxu0 0
        %1817 = vmatpush1.bf16.msra.mxu0 0
        %1818 = vmatprep.subr.bf16.mxu0 0
        %1819 = vmatpush1.bf16.msra.mxu0 0
        %1820 = vmatprep.subr.bf16.mxu0 0
        %1821 = vmatpush1.bf16.msra.mxu0 0
        %1822 = vmatprep.subr.bf16.mxu0 0
        %1823 = vmatpush1.bf16.msra.mxu0 0
        %1824 = vmatprep.subr.bf16.mxu0 0
        %1825 = vmatpush1.bf16.msra.mxu0 0
        %1826 = vmatprep.subr.bf16.mxu0 0
        %1827 = vmatpush1.bf16.msra.mxu0 0
        %1828 = vmatprep.subr.bf16.mxu0 0
        %1829 = vmatpush1.bf16.msra.mxu0 0
        %1830 = vmatprep.mubr.bf16.mxu0 0
        %1831 = vmatmul.mubr.bf16.gmra.mrb[0].mxu0 %v1632
        %v1832 = vpop.f32.mrb[0].mxu0
        %v1833 = vadd.f32 0.0, %v1832
        %v1834 = vpop.f32.mrb[0].mxu0
        %v1835 = vadd.f32 0.0, %v1834
        %v1836 = vpop.f32.mrb[0].mxu0
        %v1837 = vpop.f32.mrb[0].mxu0
        %1838 = vdwg.mxu0
        %v1849 = vcombine.low %v1669, %v1671
        %v1850 = vcombine.low %v1710, %v1712
        %v1851 = vcombine.low %v1751, %v1753
        %v1852 = vcombine.low %v1792, %v1794
        %v1854 = vunpack.c.l.s4 1966171168
        %v1855 = vunpack.c.0.s8 %v1854
        %v1856 = vlaneseq
        %v1857 = vshrl.u32 %v1856, 7
        %v1858 = vsub.s32 %v1855, %v1857
        %v1859 = vrot.slane %v1849, %v1858
        %v1861 = vunpack.c.l.s4 1966171168
        %v1862 = vunpack.c.0.s8 %v1861
        %v1863 = vlaneseq
        %v1864 = vshrl.u32 %v1863, 7
        %v1865 = vsub.s32 %v1862, %v1864
        %v1866 = vrot.slane %v1850, %v1865
        %v1868 = vunpack.c.l.s4 1966171168
        %v1869 = vunpack.c.0.s8 %v1868
        %v1870 = vlaneseq
        %v1871 = vshrl.u32 %v1870, 7
        %v1872 = vsub.s32 %v1869, %v1871
        %v1873 = vrot.slane %v1851, %v1872
        %v1875 = vunpack.c.l.s4 1966171168
        %v1876 = vunpack.c.0.s8 %v1875
        %v1877 = vlaneseq
        %v1878 = vshrl.u32 %v1877, 7
        %v1879 = vsub.s32 %v1876, %v1878
        %v1880 = vrot.slane %v1852, %v1879
        %v1881 = vcombine.low %v1859, %v1866
        %v1882 = vcombine.low %v1873, %v1880
        %v1884 = vunpack.c.l.s4 1966171168
        %v1885 = vunpack.c.0.s8 %v1884
        %v1886 = vlaneseq
        %v1887 = vshrl.u32 %v1886, 7
        %v1888 = vsub.s32 %v1885, %v1887
        %v1889 = vrot.slane %v1881, %v1888
        %v1891 = vunpack.c.l.s4 1966171168
        %v1892 = vunpack.c.0.s8 %v1891
        %v1893 = vlaneseq
        %v1894 = vshrl.u32 %v1893, 7
        %v1895 = vsub.s32 %v1892, %v1894
        %v1896 = vrot.slane %v1882, %v1895
        %v1897 = vcombine.low %v1889, %v1896
        %v1898 = vcombine.low %v1833, %v1835
        %v1900 = vunpack.c.l.s4 1966171168
        %v1901 = vunpack.c.0.s8 %v1900
        %v1902 = vlaneseq
        %v1903 = vshrl.u32 %v1902, 7
        %v1904 = vsub.s32 %v1901, %v1903
        %v1905 = vrot.slane %v1898, %v1904
        %v1907 = vunpack.c.l.s4 1966171168
        %v1908 = vunpack.c.0.s8 %v1907
        %v1909 = vlaneseq
        %v1910 = vshrl.u32 %v1909, 7
        %v1911 = vsub.s32 %v1908, %v1910
        %v1912 = vrot.slane %v1905, %v1911
        %v1915 = vadd.f32 %v1628, %v1897
        %v1916 = vadd.f32 %v1629, %v1912
        %1917 = vst [vmem:[#allocation2] sm:$0xff] %v1915
        %v1918 = vlaneseq
        %vm1919 = vcmp.ge.s32.totalorder %v1918, 0
        %vm1920 = vcmp.lt.s32.totalorder %v1918, 256
        %vm1921 = vmand %vm1919, %vm1920
        %1922 = vst.msk [vmem:[#allocation2 + $0x8] sm:$0x3] %vm1921, %v1916
        // Predicated region
        $region81: #{base_model_forward.1} parent=47 // pred_check
          %p1923 = pneg %p397
        $region82: #{base_model_forward.1} parent=47 // pred_check_branch
          %1925 = sbr.rel (%p1923) target = $region84
        $region83: #{base_model_forward.1} parent=47 // pred_region
          %v1926 = vld [vmem:[#allocation2] sm:$0xff]
          %v1927 = vld [vmem:[#allocation2 + $0x8] sm:$0x3]
          %v1928 = vmul.f32 %v1926, 0.015625
          %v1929 = vmul.f32 %v1927, 0.015625
          %v1932 = vlaneseq
          %v1933 = vshrl.u32 %v1932, 7
          %v1934 = vsub.s32 0, %v1933
          %v1935 = vrot.slane %v1928, %v1934
          %v1936 = vlaneseq
          %v1937 = vshrl.u32 %v1936, 7
          %v1938 = vsub.s32 1, %v1937
          %v1939 = vrot.slane %v1928, %v1938
          %v1940 = vlaneseq
          %v1941 = vshrl.u32 %v1940, 7
          %v1942 = vsub.s32 2, %v1941
          %v1943 = vrot.slane %v1928, %v1942
          %v1944 = vlaneseq
          %v1945 = vshrl.u32 %v1944, 7
          %v1946 = vsub.s32 3, %v1945
          %v1947 = vrot.slane %v1928, %v1946
          %v1948 = vlaneseq
          %v1949 = vshrl.u32 %v1948, 7
          %v1950 = vsub.s32 4, %v1949
          %v1951 = vrot.slane %v1928, %v1950
          %v1952 = vlaneseq
          %v1953 = vshrl.u32 %v1952, 7
          %v1954 = vsub.s32 5, %v1953
          %v1955 = vrot.slane %v1928, %v1954
          %v1956 = vlaneseq
          %v1957 = vshrl.u32 %v1956, 7
          %v1958 = vsub.s32 6, %v1957
          %v1959 = vrot.slane %v1928, %v1958
          %v1960 = vlaneseq
          %v1961 = vshrl.u32 %v1960, 7
          %v1962 = vsub.s32 7, %v1961
          %v1963 = vrot.slane %v1928, %v1962
          %v1964 = vlaneseq
          %v1965 = vshrl.u32 %v1964, 7
          %v1966 = vsub.s32 0, %v1965
          %v1967 = vrot.slane %v1929, %v1966
          %v1968 = vlaneseq
          %v1969 = vshrl.u32 %v1968, 7
          %v1970 = vsub.s32 1, %v1969
          %v1971 = vrot.slane %v1929, %v1970
          %v1982 = vpack.c.bf16 %v1935, %v1935
          %v1983 = vpack.c.bf16 %v1939, %v1939
          %v1984 = vpack.c.bf16 %v1943, %v1943
          %v1985 = vpack.c.bf16 %v1947, %v1947
          %v1986 = vpack.c.bf16 %v1951, %v1951
          %v1987 = vpack.c.bf16 %v1955, %v1955
          %v1988 = vpack.c.bf16 %v1959, %v1959
          %v1989 = vpack.c.bf16 %v1963, %v1963
          %v1990 = vpack.c.bf16 %v1967, %v1967
          %v1991 = vpack.c.bf16 %v1971, %v1971
          %v1992 = vld [vmem:[#allocation12] sm:$0xff]
          %v1993 = vld [vmem:[#allocation12 + $0x8] sm:$0xf]
          %v1994 = vld [vmem:[#allocation12 + $0xc] sm:$0xff]
          %v1995 = vld [vmem:[#allocation12 + $0x14] sm:$0xf]
          %v1996 = vld [vmem:[#allocation12 + $0x18] sm:$0xff]
          %v1997 = vld [vmem:[#allocation12 + $0x20] sm:$0xf]
          %v1998 = vld [vmem:[#allocation12 + $0x24] sm:$0xff]
          %v1999 = vld [vmem:[#allocation12 + $0x2c] sm:$0xf]
          %v2000 = vld [vmem:[#allocation12 + $0x30] sm:$0xff]
          %v2001 = vld [vmem:[#allocation12 + $0x38] sm:$0xf]
          %v2002 = vld [vmem:[#allocation12 + $0x3c] sm:$0xff]
          %v2003 = vld [vmem:[#allocation12 + $0x44] sm:$0xf]
          %v2004 = vld [vmem:[#allocation12 + $0x48] sm:$0xff]
          %v2005 = vld [vmem:[#allocation12 + $0x50] sm:$0xf]
          %v2006 = vld [vmem:[#allocation12 + $0x54] sm:$0xff]
          %v2007 = vld [vmem:[#allocation12 + $0x5c] sm:$0xf]
          %v2008 = vld [vmem:[#allocation12 + $0x60] sm:$0xff]
          %v2009 = vld [vmem:[#allocation12 + $0x68] sm:$0xf]
          %v2010 = vld [vmem:[#allocation12 + $0x6c] sm:$0xff]
          %v2011 = vld [vmem:[#allocation12 + $0x74] sm:$0xf]
          %v2012 = vld [vmem:[#allocation12 + $0x78] sm:$0xff]
          %v2013 = vld [vmem:[#allocation12 + $0x80] sm:$0xf]
          %v2014 = vld [vmem:[#allocation12 + $0x84] sm:$0xff]
          %v2015 = vld [vmem:[#allocation12 + $0x8c] sm:$0xf]
          %v2016 = vld [vmem:[#allocation12 + $0x90] sm:$0xff]
          %v2017 = vld [vmem:[#allocation12 + $0x98] sm:$0xf]
          %v2018 = vld [vmem:[#allocation12 + $0x9c] sm:$0xff]
          %v2019 = vld [vmem:[#allocation12 + $0xa4] sm:$0xf]
          %v2020 = vld [vmem:[#allocation12 + $0xa8] sm:$0xff]
          %v2021 = vld [vmem:[#allocation12 + $0xb0] sm:$0xf]
          %v2022 = vld [vmem:[#allocation12 + $0xb4] sm:$0xff]
          %v2023 = vld [vmem:[#allocation12 + $0xbc] sm:$0xf]
          %v2024 = vld [vmem:[#allocation12 + $0xc0] sm:$0xff]
          %v2025 = vld [vmem:[#allocation12 + $0xc8] sm:$0xf]
          %v2026 = vld [vmem:[#allocation12 + $0xcc] sm:$0xff]
          %v2027 = vld [vmem:[#allocation12 + $0xd4] sm:$0xf]
          %v2028 = vld [vmem:[#allocation12 + $0xd8] sm:$0xff]
          %v2029 = vld [vmem:[#allocation12 + $0xe0] sm:$0xf]
          %v2030 = vld [vmem:[#allocation12 + $0xe4] sm:$0xff]
          %v2031 = vld [vmem:[#allocation12 + $0xec] sm:$0xf]
          %v2032 = vld [vmem:[#allocation12 + $0xf0] sm:$0xff]
          %v2033 = vld [vmem:[#allocation12 + $0xf8] sm:$0xf]
          %v2034 = vld [vmem:[#allocation12 + $0xfc] sm:$0xff]
          %v2035 = vld [vmem:[#allocation12 + $0x104] sm:$0xf]
          %v2036 = vld [vmem:[#allocation12 + $0x108] sm:$0xff]
          %v2037 = vld [vmem:[#allocation12 + $0x110] sm:$0xf]
          %v2038 = vld [vmem:[#allocation12 + $0x114] sm:$0xff]
          %v2039 = vld [vmem:[#allocation12 + $0x11c] sm:$0xf]
          %v2040 = vld [vmem:[#allocation12 + $0x120] sm:$0xff]
          %v2041 = vld [vmem:[#allocation12 + $0x128] sm:$0xf]
          %v2042 = vld [vmem:[#allocation12 + $0x12c] sm:$0xff]
          %v2043 = vld [vmem:[#allocation12 + $0x134] sm:$0xf]
          %v2044 = vld [vmem:[#allocation12 + $0x138] sm:$0xff]
          %v2045 = vld [vmem:[#allocation12 + $0x140] sm:$0xf]
          %v2046 = vld [vmem:[#allocation12 + $0x144] sm:$0xff]
          %v2047 = vld [vmem:[#allocation12 + $0x14c] sm:$0xf]
          %v2048 = vld [vmem:[#allocation12 + $0x150] sm:$0xff]
          %v2049 = vld [vmem:[#allocation12 + $0x158] sm:$0xf]
          %v2050 = vld [vmem:[#allocation12 + $0x15c] sm:$0xff]
          %v2051 = vld [vmem:[#allocation12 + $0x164] sm:$0xf]
          %v2052 = vld [vmem:[#allocation12 + $0x168] sm:$0xff]
          %v2053 = vld [vmem:[#allocation12 + $0x170] sm:$0xf]
          %v2054 = vld [vmem:[#allocation12 + $0x174] sm:$0xff]
          %v2055 = vld [vmem:[#allocation12 + $0x17c] sm:$0xf]
          %v2056 = vld [vmem:[#allocation12 + $0x180] sm:$0xff]
          %v2057 = vld [vmem:[#allocation12 + $0x188] sm:$0xf]
          %v2058 = vld [vmem:[#allocation12 + $0x18c] sm:$0xff]
          %v2059 = vld [vmem:[#allocation12 + $0x194] sm:$0xf]
          %v2060 = vld [vmem:[#allocation12 + $0x198] sm:$0xff]
          %v2061 = vld [vmem:[#allocation12 + $0x1a0] sm:$0xf]
          %v2062 = vld [vmem:[#allocation12 + $0x1a4] sm:$0xff]
          %v2063 = vld [vmem:[#allocation12 + $0x1ac] sm:$0xf]
          %v2064 = vld [vmem:[#allocation12 + $0x1b0] sm:$0xff]
          %v2065 = vld [vmem:[#allocation12 + $0x1b8] sm:$0xf]
          %v2066 = vld [vmem:[#allocation12 + $0x1bc] sm:$0xff]
          %v2067 = vld [vmem:[#allocation12 + $0x1c4] sm:$0xf]
          %v2068 = vld [vmem:[#allocation12 + $0x1c8] sm:$0xff]
          %v2069 = vld [vmem:[#allocation12 + $0x1d0] sm:$0xf]
          %v2070 = vld [vmem:[#allocation12 + $0x1d4] sm:$0xff]
          %v2071 = vld [vmem:[#allocation12 + $0x1dc] sm:$0xf]
          %v2072 = vld [vmem:[#allocation12 + $0x1e0] sm:$0xff]
          %v2073 = vld [vmem:[#allocation12 + $0x1e8] sm:$0xf]
          %v2074 = vld [vmem:[#allocation12 + $0x1ec] sm:$0xff]
          %v2075 = vld [vmem:[#allocation12 + $0x1f4] sm:$0xf]
          %v2076 = vld [vmem:[#allocation12 + $0x1f8] sm:$0xff]
          %v2077 = vld [vmem:[#allocation12 + $0x200] sm:$0xf]
          %v2078 = vld [vmem:[#allocation12 + $0x204] sm:$0xff]
          %v2079 = vld [vmem:[#allocation12 + $0x20c] sm:$0xf]
          %v2080 = vld [vmem:[#allocation12 + $0x210] sm:$0xff]
          %v2081 = vld [vmem:[#allocation12 + $0x218] sm:$0xf]
          %v2082 = vld [vmem:[#allocation12 + $0x21c] sm:$0xff]
          %v2083 = vld [vmem:[#allocation12 + $0x224] sm:$0xf]
          %v2084 = vld [vmem:[#allocation12 + $0x228] sm:$0xff]
          %v2085 = vld [vmem:[#allocation12 + $0x230] sm:$0xf]
          %v2086 = vld [vmem:[#allocation12 + $0x234] sm:$0xff]
          %v2087 = vld [vmem:[#allocation12 + $0x23c] sm:$0xf]
          %v2088 = vld [vmem:[#allocation12 + $0x240] sm:$0xff]
          %v2089 = vld [vmem:[#allocation12 + $0x248] sm:$0xf]
          %v2090 = vld [vmem:[#allocation12 + $0x24c] sm:$0xff]
          %v2091 = vld [vmem:[#allocation12 + $0x254] sm:$0xf]
          %v2092 = vld [vmem:[#allocation12 + $0x258] sm:$0xff]
          %v2093 = vld [vmem:[#allocation12 + $0x260] sm:$0xf]
          %v2094 = vld [vmem:[#allocation12 + $0x264] sm:$0xff]
          %v2095 = vld [vmem:[#allocation12 + $0x26c] sm:$0xf]
          %v2096 = vld [vmem:[#allocation12 + $0x270] sm:$0xff]
          %v2097 = vld [vmem:[#allocation12 + $0x278] sm:$0xf]
          %v2098 = vld [vmem:[#allocation12 + $0x27c] sm:$0xff]
          %v2099 = vld [vmem:[#allocation12 + $0x284] sm:$0xf]
          %v2100 = vld [vmem:[#allocation12 + $0x288] sm:$0xff]
          %v2101 = vld [vmem:[#allocation12 + $0x290] sm:$0xf]
          %v2102 = vld [vmem:[#allocation12 + $0x294] sm:$0xff]
          %v2103 = vld [vmem:[#allocation12 + $0x29c] sm:$0xf]
          %v2104 = vld [vmem:[#allocation12 + $0x2a0] sm:$0xff]
          %v2105 = vld [vmem:[#allocation12 + $0x2a8] sm:$0xf]
          %v2106 = vld [vmem:[#allocation12 + $0x2ac] sm:$0xff]
          %v2107 = vld [vmem:[#allocation12 + $0x2b4] sm:$0xf]
          %v2108 = vld [vmem:[#allocation12 + $0x2b8] sm:$0xff]
          %v2109 = vld [vmem:[#allocation12 + $0x2c0] sm:$0xf]
          %v2110 = vld [vmem:[#allocation12 + $0x2c4] sm:$0xff]
          %v2111 = vld [vmem:[#allocation12 + $0x2cc] sm:$0xf]
          %v2112 = vld [vmem:[#allocation12 + $0x2d0] sm:$0xff]
          %v2113 = vld [vmem:[#allocation12 + $0x2d8] sm:$0xf]
          %v2114 = vld [vmem:[#allocation12 + $0x2dc] sm:$0xff]
          %v2115 = vld [vmem:[#allocation12 + $0x2e4] sm:$0xf]
          %v2116 = vld [vmem:[#allocation12 + $0x2e8] sm:$0xff]
          %v2117 = vld [vmem:[#allocation12 + $0x2f0] sm:$0xf]
          %v2118 = vld [vmem:[#allocation12 + $0x2f4] sm:$0xff]
          %v2119 = vld [vmem:[#allocation12 + $0x2fc] sm:$0xf]
          %v2120 = vld [vmem:[#allocation12 + $0x300] sm:$0xff]
          %v2121 = vld [vmem:[#allocation12 + $0x308] sm:$0xf]
          %v2122 = vld [vmem:[#allocation12 + $0x30c] sm:$0xff]
          %v2123 = vld [vmem:[#allocation12 + $0x314] sm:$0xf]
          %v2124 = vld [vmem:[#allocation12 + $0x318] sm:$0xff]
          %v2125 = vld [vmem:[#allocation12 + $0x320] sm:$0xf]
          %v2126 = vld [vmem:[#allocation12 + $0x324] sm:$0xff]
          %v2127 = vld [vmem:[#allocation12 + $0x32c] sm:$0xf]
          %v2128 = vld [vmem:[#allocation12 + $0x330] sm:$0xff]
          %v2129 = vld [vmem:[#allocation12 + $0x338] sm:$0xf]
          %v2130 = vld [vmem:[#allocation12 + $0x33c] sm:$0xff]
          %v2131 = vld [vmem:[#allocation12 + $0x344] sm:$0xf]
          %v2132 = vld [vmem:[#allocation12 + $0x348] sm:$0xff]
          %v2133 = vld [vmem:[#allocation12 + $0x350] sm:$0xf]
          %v2134 = vld [vmem:[#allocation12 + $0x354] sm:$0xff]
          %v2135 = vld [vmem:[#allocation12 + $0x35c] sm:$0xf]
          %v2136 = vld [vmem:[#allocation12 + $0x360] sm:$0xff]
          %v2137 = vld [vmem:[#allocation12 + $0x368] sm:$0xf]
          %v2138 = vld [vmem:[#allocation12 + $0x36c] sm:$0xff]
          %v2139 = vld [vmem:[#allocation12 + $0x374] sm:$0xf]
          %v2140 = vld [vmem:[#allocation12 + $0x378] sm:$0xff]
          %v2141 = vld [vmem:[#allocation12 + $0x380] sm:$0xf]
          %v2142 = vld [vmem:[#allocation12 + $0x384] sm:$0xff]
          %v2143 = vld [vmem:[#allocation12 + $0x38c] sm:$0xf]
          %v2144 = vld [vmem:[#allocation12 + $0x390] sm:$0xff]
          %v2145 = vld [vmem:[#allocation12 + $0x398] sm:$0xf]
          %v2146 = vld [vmem:[#allocation12 + $0x39c] sm:$0xff]
          %v2147 = vld [vmem:[#allocation12 + $0x3a4] sm:$0xf]
          %v2148 = vld [vmem:[#allocation12 + $0x3a8] sm:$0xff]
          %v2149 = vld [vmem:[#allocation12 + $0x3b0] sm:$0xf]
          %v2150 = vld [vmem:[#allocation12 + $0x3b4] sm:$0xff]
          %v2151 = vld [vmem:[#allocation12 + $0x3bc] sm:$0xf]
          %v2152 = vld [vmem:[#allocation12 + $0x3c0] sm:$0xff]
          %v2153 = vld [vmem:[#allocation12 + $0x3c8] sm:$0xf]
          %v2154 = vld [vmem:[#allocation12 + $0x3cc] sm:$0xff]
          %v2155 = vld [vmem:[#allocation12 + $0x3d4] sm:$0xf]
          %v2156 = vld [vmem:[#allocation12 + $0x3d8] sm:$0xff]
          %v2157 = vld [vmem:[#allocation12 + $0x3e0] sm:$0xf]
          %v2158 = vld [vmem:[#allocation12 + $0x3e4] sm:$0xff]
          %v2159 = vld [vmem:[#allocation12 + $0x3ec] sm:$0xf]
          %v2160 = vld [vmem:[#allocation12 + $0x3f0] sm:$0xff]
          %v2161 = vld [vmem:[#allocation12 + $0x3f8] sm:$0xf]
          %v2162 = vld [vmem:[#allocation12 + $0x3fc] sm:$0xff]
          %v2163 = vld [vmem:[#allocation12 + $0x404] sm:$0xf]
          %v2164 = vld [vmem:[#allocation12 + $0x408] sm:$0xff]
          %v2165 = vld [vmem:[#allocation12 + $0x410] sm:$0xf]
          %v2166 = vld [vmem:[#allocation12 + $0x414] sm:$0xff]
          %v2167 = vld [vmem:[#allocation12 + $0x41c] sm:$0xf]
          %v2168 = vld [vmem:[#allocation12 + $0x420] sm:$0xff]
          %v2169 = vld [vmem:[#allocation12 + $0x428] sm:$0xf]
          %v2170 = vld [vmem:[#allocation12 + $0x42c] sm:$0xff]
          %v2171 = vld [vmem:[#allocation12 + $0x434] sm:$0xf]
          %v2172 = vld [vmem:[#allocation12 + $0x438] sm:$0xff]
          %v2173 = vld [vmem:[#allocation12 + $0x440] sm:$0xf]
          %v2174 = vld [vmem:[#allocation12 + $0x444] sm:$0xff]
          %v2175 = vld [vmem:[#allocation12 + $0x44c] sm:$0xf]
          %v2176 = vld [vmem:[#allocation12 + $0x450] sm:$0xff]
          %v2177 = vld [vmem:[#allocation12 + $0x458] sm:$0xf]
          %v2178 = vld [vmem:[#allocation12 + $0x45c] sm:$0xff]
          %v2179 = vld [vmem:[#allocation12 + $0x464] sm:$0xf]
          %v2180 = vld [vmem:[#allocation12 + $0x468] sm:$0xff]
          %v2181 = vld [vmem:[#allocation12 + $0x470] sm:$0xf]
          %v2182 = vld [vmem:[#allocation12 + $0x474] sm:$0xff]
          %v2183 = vld [vmem:[#allocation12 + $0x47c] sm:$0xf]
          %v2184 = vld [vmem:[#allocation12 + $0x480] sm:$0xff]
          %v2185 = vld [vmem:[#allocation12 + $0x488] sm:$0xf]
          %v2186 = vld [vmem:[#allocation12 + $0x48c] sm:$0xff]
          %v2187 = vld [vmem:[#allocation12 + $0x494] sm:$0xf]
          %v2188 = vld [vmem:[#allocation12 + $0x498] sm:$0xff]
          %v2189 = vld [vmem:[#allocation12 + $0x4a0] sm:$0xf]
          %v2190 = vld [vmem:[#allocation12 + $0x4a4] sm:$0xff]
          %v2191 = vld [vmem:[#allocation12 + $0x4ac] sm:$0xf]
          %v2192 = vld [vmem:[#allocation12 + $0x4b0] sm:$0xff]
          %v2193 = vld [vmem:[#allocation12 + $0x4b8] sm:$0xf]
          %v2194 = vld [vmem:[#allocation12 + $0x4bc] sm:$0xff]
          %v2195 = vld [vmem:[#allocation12 + $0x4c4] sm:$0xf]
          %v2196 = vld [vmem:[#allocation12 + $0x4c8] sm:$0xff]
          %v2197 = vld [vmem:[#allocation12 + $0x4d0] sm:$0xf]
          %v2198 = vld [vmem:[#allocation12 + $0x4d4] sm:$0xff]
          %v2199 = vld [vmem:[#allocation12 + $0x4dc] sm:$0xf]
          %v2200 = vld [vmem:[#allocation12 + $0x4e0] sm:$0xff]
          %v2201 = vld [vmem:[#allocation12 + $0x4e8] sm:$0xf]
          %v2202 = vld [vmem:[#allocation12 + $0x4ec] sm:$0xff]
          %v2203 = vld [vmem:[#allocation12 + $0x4f4] sm:$0xf]
          %v2204 = vld [vmem:[#allocation12 + $0x4f8] sm:$0xff]
          %v2205 = vld [vmem:[#allocation12 + $0x500] sm:$0xf]
          %v2206 = vld [vmem:[#allocation12 + $0x504] sm:$0xff]
          %v2207 = vld [vmem:[#allocation12 + $0x50c] sm:$0xf]
          %v2208 = vld [vmem:[#allocation12 + $0x510] sm:$0xff]
          %v2209 = vld [vmem:[#allocation12 + $0x518] sm:$0xf]
          %v2210 = vld [vmem:[#allocation12 + $0x51c] sm:$0xff]
          %v2211 = vld [vmem:[#allocation12 + $0x524] sm:$0xf]
          %v2212 = vld [vmem:[#allocation12 + $0x528] sm:$0xff]
          %v2213 = vld [vmem:[#allocation12 + $0x530] sm:$0xf]
          %v2214 = vld [vmem:[#allocation12 + $0x534] sm:$0xff]
          %v2215 = vld [vmem:[#allocation12 + $0x53c] sm:$0xf]
          %v2216 = vld [vmem:[#allocation12 + $0x540] sm:$0xff]
          %v2217 = vld [vmem:[#allocation12 + $0x548] sm:$0xf]
          %v2218 = vld [vmem:[#allocation12 + $0x54c] sm:$0xff]
          %v2219 = vld [vmem:[#allocation12 + $0x554] sm:$0xf]
          %v2220 = vld [vmem:[#allocation12 + $0x558] sm:$0xff]
          %v2221 = vld [vmem:[#allocation12 + $0x560] sm:$0xf]
          %v2222 = vld [vmem:[#allocation12 + $0x564] sm:$0xff]
          %v2223 = vld [vmem:[#allocation12 + $0x56c] sm:$0xf]
          %v2224 = vld [vmem:[#allocation12 + $0x570] sm:$0xff]
          %v2225 = vld [vmem:[#allocation12 + $0x578] sm:$0xf]
          %v2226 = vld [vmem:[#allocation12 + $0x57c] sm:$0xff]
          %v2227 = vld [vmem:[#allocation12 + $0x584] sm:$0xf]
          %v2228 = vld [vmem:[#allocation12 + $0x588] sm:$0xff]
          %v2229 = vld [vmem:[#allocation12 + $0x590] sm:$0xf]
          %v2230 = vld [vmem:[#allocation12 + $0x594] sm:$0xff]
          %v2231 = vld [vmem:[#allocation12 + $0x59c] sm:$0xf]
          %v2232 = vld [vmem:[#allocation12 + $0x5a0] sm:$0xff]
          %v2233 = vld [vmem:[#allocation12 + $0x5a8] sm:$0xf]
          %v2234 = vld [vmem:[#allocation12 + $0x5ac] sm:$0xff]
          %v2235 = vld [vmem:[#allocation12 + $0x5b4] sm:$0xf]
          %v2236 = vld [vmem:[#allocation12 + $0x5b8] sm:$0xff]
          %v2237 = vld [vmem:[#allocation12 + $0x5c0] sm:$0xf]
          %v2238 = vld [vmem:[#allocation12 + $0x5c4] sm:$0xff]
          %v2239 = vld [vmem:[#allocation12 + $0x5cc] sm:$0xf]
          %v2240 = vld [vmem:[#allocation12 + $0x5d0] sm:$0xff]
          %v2241 = vld [vmem:[#allocation12 + $0x5d8] sm:$0xf]
          %v2242 = vld [vmem:[#allocation12 + $0x5dc] sm:$0xff]
          %v2243 = vld [vmem:[#allocation12 + $0x5e4] sm:$0xf]
          %v2244 = vld [vmem:[#allocation12 + $0x5e8] sm:$0xff]
          %v2245 = vld [vmem:[#allocation12 + $0x5f0] sm:$0xf]
          %v2246 = vld [vmem:[#allocation12 + $0x5f4] sm:$0xff]
          %v2247 = vld [vmem:[#allocation12 + $0x5fc] sm:$0xf]
          %v2248 = vld [vmem:[#allocation12 + $0x600] sm:$0xff]
          %v2249 = vld [vmem:[#allocation12 + $0x608] sm:$0xf]
          %v2250 = vld [vmem:[#allocation12 + $0x60c] sm:$0xff]
          %v2251 = vld [vmem:[#allocation12 + $0x614] sm:$0xf]
          %v2252 = vld [vmem:[#allocation12 + $0x618] sm:$0xff]
          %v2253 = vld [vmem:[#allocation12 + $0x620] sm:$0xf]
          %v2254 = vld [vmem:[#allocation12 + $0x624] sm:$0xff]
          %v2255 = vld [vmem:[#allocation12 + $0x62c] sm:$0xf]
          %v2256 = vld [vmem:[#allocation12 + $0x630] sm:$0xff]
          %v2257 = vld [vmem:[#allocation12 + $0x638] sm:$0xf]
          %v2258 = vld [vmem:[#allocation12 + $0x63c] sm:$0xff]
          %v2259 = vld [vmem:[#allocation12 + $0x644] sm:$0xf]
          %v2260 = vld [vmem:[#allocation12 + $0x648] sm:$0xff]
          %v2261 = vld [vmem:[#allocation12 + $0x650] sm:$0xf]
          %v2262 = vld [vmem:[#allocation12 + $0x654] sm:$0xff]
          %v2263 = vld [vmem:[#allocation12 + $0x65c] sm:$0xf]
          %v2264 = vld [vmem:[#allocation12 + $0x660] sm:$0xff]
          %v2265 = vld [vmem:[#allocation12 + $0x668] sm:$0xf]
          %v2266 = vld [vmem:[#allocation12 + $0x66c] sm:$0xff]
          %v2267 = vld [vmem:[#allocation12 + $0x674] sm:$0xf]
          %v2268 = vld [vmem:[#allocation12 + $0x678] sm:$0xff]
          %v2269 = vld [vmem:[#allocation12 + $0x680] sm:$0xf]
          %v2270 = vld [vmem:[#allocation12 + $0x684] sm:$0xff]
          %v2271 = vld [vmem:[#allocation12 + $0x68c] sm:$0xf]
          %v2272 = vld [vmem:[#allocation12 + $0x690] sm:$0xff]
          %v2273 = vld [vmem:[#allocation12 + $0x698] sm:$0xf]
          %v2274 = vld [vmem:[#allocation12 + $0x69c] sm:$0xff]
          %v2275 = vld [vmem:[#allocation12 + $0x6a4] sm:$0xf]
          %v2276 = vld [vmem:[#allocation12 + $0x6a8] sm:$0xff]
          %v2277 = vld [vmem:[#allocation12 + $0x6b0] sm:$0xf]
          %v2278 = vld [vmem:[#allocation12 + $0x6b4] sm:$0xff]
          %v2279 = vld [vmem:[#allocation12 + $0x6bc] sm:$0xf]
          %v2280 = vld [vmem:[#allocation12 + $0x6c0] sm:$0xff]
          %v2281 = vld [vmem:[#allocation12 + $0x6c8] sm:$0xf]
          %v2282 = vld [vmem:[#allocation12 + $0x6cc] sm:$0xff]
          %v2283 = vld [vmem:[#allocation12 + $0x6d4] sm:$0xf]
          %v2284 = vld [vmem:[#allocation12 + $0x6d8] sm:$0xff]
          %v2285 = vld [vmem:[#allocation12 + $0x6e0] sm:$0xf]
          %v2286 = vld [vmem:[#allocation12 + $0x6e4] sm:$0xff]
          %v2287 = vld [vmem:[#allocation12 + $0x6ec] sm:$0xf]
          %v2288 = vld [vmem:[#allocation12 + $0x6f0] sm:$0xff]
          %v2289 = vld [vmem:[#allocation12 + $0x6f8] sm:$0xf]
          %v2290 = vld [vmem:[#allocation12 + $0x6fc] sm:$0xff]
          %v2291 = vld [vmem:[#allocation12 + $0x704] sm:$0xf]
          %v2292 = vld [vmem:[#allocation12 + $0x708] sm:$0xff]
          %v2293 = vld [vmem:[#allocation12 + $0x710] sm:$0xf]
          %v2294 = vld [vmem:[#allocation12 + $0x714] sm:$0xff]
          %v2295 = vld [vmem:[#allocation12 + $0x71c] sm:$0xf]
          %v2296 = vld [vmem:[#allocation12 + $0x720] sm:$0xff]
          %v2297 = vld [vmem:[#allocation12 + $0x728] sm:$0xf]
          %v2298 = vld [vmem:[#allocation12 + $0x72c] sm:$0xff]
          %v2299 = vld [vmem:[#allocation12 + $0x734] sm:$0xf]
          %v2300 = vld [vmem:[#allocation12 + $0x738] sm:$0xff]
          %v2301 = vld [vmem:[#allocation12 + $0x740] sm:$0xf]
          %v2302 = vld [vmem:[#allocation12 + $0x744] sm:$0xff]
          %v2303 = vld [vmem:[#allocation12 + $0x74c] sm:$0xf]
          %v2304 = vld [vmem:[#allocation12 + $0x750] sm:$0xff]
          %v2305 = vld [vmem:[#allocation12 + $0x758] sm:$0xf]
          %v2306 = vld [vmem:[#allocation12 + $0x75c] sm:$0xff]
          %v2307 = vld [vmem:[#allocation12 + $0x764] sm:$0xf]
          %v2308 = vld [vmem:[#allocation12 + $0x768] sm:$0xff]
          %v2309 = vld [vmem:[#allocation12 + $0x770] sm:$0xf]
          %v2310 = vld [vmem:[#allocation12 + $0x774] sm:$0xff]
          %v2311 = vld [vmem:[#allocation12 + $0x77c] sm:$0xf]
          %v2312 = vld [vmem:[#allocation14] sm:$0x7]
          %v2633 = vunpack.c.l.b16 %v1992
          %v2634 = vunpack.c.h.b16 %v1992
          %v2635 = vunpack.c.l.b16 %v1993
          %v2636 = vunpack.c.l.b16 %v1994
          %v2637 = vunpack.c.h.b16 %v1994
          %v2638 = vunpack.c.l.b16 %v1995
          %v2639 = vunpack.c.l.b16 %v1996
          %v2640 = vunpack.c.h.b16 %v1996
          %v2641 = vunpack.c.l.b16 %v1997
          %v2642 = vunpack.c.l.b16 %v1998
          %v2643 = vunpack.c.h.b16 %v1998
          %v2644 = vunpack.c.l.b16 %v1999
          %v2645 = vunpack.c.l.b16 %v2000
          %v2646 = vunpack.c.h.b16 %v2000
          %v2647 = vunpack.c.l.b16 %v2001
          %v2648 = vunpack.c.l.b16 %v2002
          %v2649 = vunpack.c.h.b16 %v2002
          %v2650 = vunpack.c.l.b16 %v2003
          %v2651 = vunpack.c.l.b16 %v2004
          %v2652 = vunpack.c.h.b16 %v2004
          %v2653 = vunpack.c.l.b16 %v2005
          %v2654 = vunpack.c.l.b16 %v2006
          %v2655 = vunpack.c.h.b16 %v2006
          %v2656 = vunpack.c.l.b16 %v2007
          %v2657 = vunpack.c.l.b16 %v2008
          %v2658 = vunpack.c.h.b16 %v2008
          %v2659 = vunpack.c.l.b16 %v2009
          %v2660 = vunpack.c.l.b16 %v2010
          %v2661 = vunpack.c.h.b16 %v2010
          %v2662 = vunpack.c.l.b16 %v2011
          %v2663 = vunpack.c.l.b16 %v2012
          %v2664 = vunpack.c.h.b16 %v2012
          %v2665 = vunpack.c.l.b16 %v2013
          %v2666 = vunpack.c.l.b16 %v2014
          %v2667 = vunpack.c.h.b16 %v2014
          %v2668 = vunpack.c.l.b16 %v2015
          %v2669 = vunpack.c.l.b16 %v2016
          %v2670 = vunpack.c.h.b16 %v2016
          %v2671 = vunpack.c.l.b16 %v2017
          %v2672 = vunpack.c.l.b16 %v2018
          %v2673 = vunpack.c.h.b16 %v2018
          %v2674 = vunpack.c.l.b16 %v2019
          %v2675 = vunpack.c.l.b16 %v2020
          %v2676 = vunpack.c.h.b16 %v2020
          %v2677 = vunpack.c.l.b16 %v2021
          %v2678 = vunpack.c.l.b16 %v2022
          %v2679 = vunpack.c.h.b16 %v2022
          %v2680 = vunpack.c.l.b16 %v2023
          %v2681 = vunpack.c.l.b16 %v2024
          %v2682 = vunpack.c.h.b16 %v2024
          %v2683 = vunpack.c.l.b16 %v2025
          %v2684 = vunpack.c.l.b16 %v2026
          %v2685 = vunpack.c.h.b16 %v2026
          %v2686 = vunpack.c.l.b16 %v2027
          %v2687 = vunpack.c.l.b16 %v2028
          %v2688 = vunpack.c.h.b16 %v2028
          %v2689 = vunpack.c.l.b16 %v2029
          %v2690 = vunpack.c.l.b16 %v2030
          %v2691 = vunpack.c.h.b16 %v2030
          %v2692 = vunpack.c.l.b16 %v2031
          %v2693 = vunpack.c.l.b16 %v2032
          %v2694 = vunpack.c.h.b16 %v2032
          %v2695 = vunpack.c.l.b16 %v2033
          %v2696 = vunpack.c.l.b16 %v2034
          %v2697 = vunpack.c.h.b16 %v2034
          %v2698 = vunpack.c.l.b16 %v2035
          %v2699 = vunpack.c.l.b16 %v2036
          %v2700 = vunpack.c.h.b16 %v2036
          %v2701 = vunpack.c.l.b16 %v2037
          %v2702 = vunpack.c.l.b16 %v2038
          %v2703 = vunpack.c.h.b16 %v2038
          %v2704 = vunpack.c.l.b16 %v2039
          %v2705 = vunpack.c.l.b16 %v2040
          %v2706 = vunpack.c.h.b16 %v2040
          %v2707 = vunpack.c.l.b16 %v2041
          %v2708 = vunpack.c.l.b16 %v2042
          %v2709 = vunpack.c.h.b16 %v2042
          %v2710 = vunpack.c.l.b16 %v2043
          %v2711 = vunpack.c.l.b16 %v2044
          %v2712 = vunpack.c.h.b16 %v2044
          %v2713 = vunpack.c.l.b16 %v2045
          %v2714 = vunpack.c.l.b16 %v2046
          %v2715 = vunpack.c.h.b16 %v2046
          %v2716 = vunpack.c.l.b16 %v2047
          %v2717 = vunpack.c.l.b16 %v2048
          %v2718 = vunpack.c.h.b16 %v2048
          %v2719 = vunpack.c.l.b16 %v2049
          %v2720 = vunpack.c.l.b16 %v2050
          %v2721 = vunpack.c.h.b16 %v2050
          %v2722 = vunpack.c.l.b16 %v2051
          %v2723 = vunpack.c.l.b16 %v2052
          %v2724 = vunpack.c.h.b16 %v2052
          %v2725 = vunpack.c.l.b16 %v2053
          %v2726 = vunpack.c.l.b16 %v2054
          %v2727 = vunpack.c.h.b16 %v2054
          %v2728 = vunpack.c.l.b16 %v2055
          %v2729 = vunpack.c.l.b16 %v2056
          %v2730 = vunpack.c.h.b16 %v2056
          %v2731 = vunpack.c.l.b16 %v2057
          %v2732 = vunpack.c.l.b16 %v2058
          %v2733 = vunpack.c.h.b16 %v2058
          %v2734 = vunpack.c.l.b16 %v2059
          %v2735 = vunpack.c.l.b16 %v2060
          %v2736 = vunpack.c.h.b16 %v2060
          %v2737 = vunpack.c.l.b16 %v2061
          %v2738 = vunpack.c.l.b16 %v2062
          %v2739 = vunpack.c.h.b16 %v2062
          %v2740 = vunpack.c.l.b16 %v2063
          %v2741 = vunpack.c.l.b16 %v2064
          %v2742 = vunpack.c.h.b16 %v2064
          %v2743 = vunpack.c.l.b16 %v2065
          %v2744 = vunpack.c.l.b16 %v2066
          %v2745 = vunpack.c.h.b16 %v2066
          %v2746 = vunpack.c.l.b16 %v2067
          %v2747 = vunpack.c.l.b16 %v2068
          %v2748 = vunpack.c.h.b16 %v2068
          %v2749 = vunpack.c.l.b16 %v2069
          %v2750 = vunpack.c.l.b16 %v2070
          %v2751 = vunpack.c.h.b16 %v2070
          %v2752 = vunpack.c.l.b16 %v2071
          %v2753 = vunpack.c.l.b16 %v2072
          %v2754 = vunpack.c.h.b16 %v2072
          %v2755 = vunpack.c.l.b16 %v2073
          %v2756 = vunpack.c.l.b16 %v2074
          %v2757 = vunpack.c.h.b16 %v2074
          %v2758 = vunpack.c.l.b16 %v2075
          %v2759 = vunpack.c.l.b16 %v2076
          %v2760 = vunpack.c.h.b16 %v2076
          %v2761 = vunpack.c.l.b16 %v2077
          %v2762 = vunpack.c.l.b16 %v2078
          %v2763 = vunpack.c.h.b16 %v2078
          %v2764 = vunpack.c.l.b16 %v2079
          %v2765 = vunpack.c.l.b16 %v2080
          %v2766 = vunpack.c.h.b16 %v2080
          %v2767 = vunpack.c.l.b16 %v2081
          %v2768 = vunpack.c.l.b16 %v2082
          %v2769 = vunpack.c.h.b16 %v2082
          %v2770 = vunpack.c.l.b16 %v2083
          %v2771 = vunpack.c.l.b16 %v2084
          %v2772 = vunpack.c.h.b16 %v2084
          %v2773 = vunpack.c.l.b16 %v2085
          %v2774 = vunpack.c.l.b16 %v2086
          %v2775 = vunpack.c.h.b16 %v2086
          %v2776 = vunpack.c.l.b16 %v2087
          %v2777 = vunpack.c.l.b16 %v2088
          %v2778 = vunpack.c.h.b16 %v2088
          %v2779 = vunpack.c.l.b16 %v2089
          %v2780 = vunpack.c.l.b16 %v2090
          %v2781 = vunpack.c.h.b16 %v2090
          %v2782 = vunpack.c.l.b16 %v2091
          %v2783 = vunpack.c.l.b16 %v2092
          %v2784 = vunpack.c.h.b16 %v2092
          %v2785 = vunpack.c.l.b16 %v2093
          %v2786 = vunpack.c.l.b16 %v2094
          %v2787 = vunpack.c.h.b16 %v2094
          %v2788 = vunpack.c.l.b16 %v2095
          %v2789 = vunpack.c.l.b16 %v2096
          %v2790 = vunpack.c.h.b16 %v2096
          %v2791 = vunpack.c.l.b16 %v2097
          %v2792 = vunpack.c.l.b16 %v2098
          %v2793 = vunpack.c.h.b16 %v2098
          %v2794 = vunpack.c.l.b16 %v2099
          %v2795 = vunpack.c.l.b16 %v2100
          %v2796 = vunpack.c.h.b16 %v2100
          %v2797 = vunpack.c.l.b16 %v2101
          %v2798 = vunpack.c.l.b16 %v2102
          %v2799 = vunpack.c.h.b16 %v2102
          %v2800 = vunpack.c.l.b16 %v2103
          %v2801 = vunpack.c.l.b16 %v2104
          %v2802 = vunpack.c.h.b16 %v2104
          %v2803 = vunpack.c.l.b16 %v2105
          %v2804 = vunpack.c.l.b16 %v2106
          %v2805 = vunpack.c.h.b16 %v2106
          %v2806 = vunpack.c.l.b16 %v2107
          %v2807 = vunpack.c.l.b16 %v2108
          %v2808 = vunpack.c.h.b16 %v2108
          %v2809 = vunpack.c.l.b16 %v2109
          %v2810 = vunpack.c.l.b16 %v2110
          %v2811 = vunpack.c.h.b16 %v2110
          %v2812 = vunpack.c.l.b16 %v2111
          %v2813 = vunpack.c.l.b16 %v2112
          %v2814 = vunpack.c.h.b16 %v2112
          %v2815 = vunpack.c.l.b16 %v2113
          %v2816 = vunpack.c.l.b16 %v2114
          %v2817 = vunpack.c.h.b16 %v2114
          %v2818 = vunpack.c.l.b16 %v2115
          %v2819 = vunpack.c.l.b16 %v2116
          %v2820 = vunpack.c.h.b16 %v2116
          %v2821 = vunpack.c.l.b16 %v2117
          %v2822 = vunpack.c.l.b16 %v2118
          %v2823 = vunpack.c.h.b16 %v2118
          %v2824 = vunpack.c.l.b16 %v2119
          %v2825 = vunpack.c.l.b16 %v2120
          %v2826 = vunpack.c.h.b16 %v2120
          %v2827 = vunpack.c.l.b16 %v2121
          %v2828 = vunpack.c.l.b16 %v2122
          %v2829 = vunpack.c.h.b16 %v2122
          %v2830 = vunpack.c.l.b16 %v2123
          %v2831 = vunpack.c.l.b16 %v2124
          %v2832 = vunpack.c.h.b16 %v2124
          %v2833 = vunpack.c.l.b16 %v2125
          %v2834 = vunpack.c.l.b16 %v2126
          %v2835 = vunpack.c.h.b16 %v2126
          %v2836 = vunpack.c.l.b16 %v2127
          %v2837 = vunpack.c.l.b16 %v2128
          %v2838 = vunpack.c.h.b16 %v2128
          %v2839 = vunpack.c.l.b16 %v2129
          %v2840 = vunpack.c.l.b16 %v2130
          %v2841 = vunpack.c.h.b16 %v2130
          %v2842 = vunpack.c.l.b16 %v2131
          %v2843 = vunpack.c.l.b16 %v2132
          %v2844 = vunpack.c.h.b16 %v2132
          %v2845 = vunpack.c.l.b16 %v2133
          %v2846 = vunpack.c.l.b16 %v2134
          %v2847 = vunpack.c.h.b16 %v2134
          %v2848 = vunpack.c.l.b16 %v2135
          %v2849 = vunpack.c.l.b16 %v2136
          %v2850 = vunpack.c.h.b16 %v2136
          %v2851 = vunpack.c.l.b16 %v2137
          %v2852 = vunpack.c.l.b16 %v2138
          %v2853 = vunpack.c.h.b16 %v2138
          %v2854 = vunpack.c.l.b16 %v2139
          %v2855 = vunpack.c.l.b16 %v2140
          %v2856 = vunpack.c.h.b16 %v2140
          %v2857 = vunpack.c.l.b16 %v2141
          %v2858 = vunpack.c.l.b16 %v2142
          %v2859 = vunpack.c.h.b16 %v2142
          %v2860 = vunpack.c.l.b16 %v2143
          %v2861 = vunpack.c.l.b16 %v2144
          %v2862 = vunpack.c.h.b16 %v2144
          %v2863 = vunpack.c.l.b16 %v2145
          %v2864 = vunpack.c.l.b16 %v2146
          %v2865 = vunpack.c.h.b16 %v2146
          %v2866 = vunpack.c.l.b16 %v2147
          %v2867 = vunpack.c.l.b16 %v2148
          %v2868 = vunpack.c.h.b16 %v2148
          %v2869 = vunpack.c.l.b16 %v2149
          %v2870 = vunpack.c.l.b16 %v2150
          %v2871 = vunpack.c.h.b16 %v2150
          %v2872 = vunpack.c.l.b16 %v2151
          %v2873 = vunpack.c.l.b16 %v2152
          %v2874 = vunpack.c.h.b16 %v2152
          %v2875 = vunpack.c.l.b16 %v2153
          %v2876 = vunpack.c.l.b16 %v2154
          %v2877 = vunpack.c.h.b16 %v2154
          %v2878 = vunpack.c.l.b16 %v2155
          %v2879 = vunpack.c.l.b16 %v2156
          %v2880 = vunpack.c.h.b16 %v2156
          %v2881 = vunpack.c.l.b16 %v2157
          %v2882 = vunpack.c.l.b16 %v2158
          %v2883 = vunpack.c.h.b16 %v2158
          %v2884 = vunpack.c.l.b16 %v2159
          %v2885 = vunpack.c.l.b16 %v2160
          %v2886 = vunpack.c.h.b16 %v2160
          %v2887 = vunpack.c.l.b16 %v2161
          %v2888 = vunpack.c.l.b16 %v2162
          %v2889 = vunpack.c.h.b16 %v2162
          %v2890 = vunpack.c.l.b16 %v2163
          %v2891 = vunpack.c.l.b16 %v2164
          %v2892 = vunpack.c.h.b16 %v2164
          %v2893 = vunpack.c.l.b16 %v2165
          %v2894 = vunpack.c.l.b16 %v2166
          %v2895 = vunpack.c.h.b16 %v2166
          %v2896 = vunpack.c.l.b16 %v2167
          %v2897 = vunpack.c.l.b16 %v2168
          %v2898 = vunpack.c.h.b16 %v2168
          %v2899 = vunpack.c.l.b16 %v2169
          %v2900 = vunpack.c.l.b16 %v2170
          %v2901 = vunpack.c.h.b16 %v2170
          %v2902 = vunpack.c.l.b16 %v2171
          %v2903 = vunpack.c.l.b16 %v2172
          %v2904 = vunpack.c.h.b16 %v2172
          %v2905 = vunpack.c.l.b16 %v2173
          %v2906 = vunpack.c.l.b16 %v2174
          %v2907 = vunpack.c.h.b16 %v2174
          %v2908 = vunpack.c.l.b16 %v2175
          %v2909 = vunpack.c.l.b16 %v2176
          %v2910 = vunpack.c.h.b16 %v2176
          %v2911 = vunpack.c.l.b16 %v2177
          %v2912 = vunpack.c.l.b16 %v2178
          %v2913 = vunpack.c.h.b16 %v2178
          %v2914 = vunpack.c.l.b16 %v2179
          %v2915 = vunpack.c.l.b16 %v2180
          %v2916 = vunpack.c.h.b16 %v2180
          %v2917 = vunpack.c.l.b16 %v2181
          %v2918 = vunpack.c.l.b16 %v2182
          %v2919 = vunpack.c.h.b16 %v2182
          %v2920 = vunpack.c.l.b16 %v2183
          %v2921 = vunpack.c.l.b16 %v2184
          %v2922 = vunpack.c.h.b16 %v2184
          %v2923 = vunpack.c.l.b16 %v2185
          %v2924 = vunpack.c.l.b16 %v2186
          %v2925 = vunpack.c.h.b16 %v2186
          %v2926 = vunpack.c.l.b16 %v2187
          %v2927 = vunpack.c.l.b16 %v2188
          %v2928 = vunpack.c.h.b16 %v2188
          %v2929 = vunpack.c.l.b16 %v2189
          %v2930 = vunpack.c.l.b16 %v2190
          %v2931 = vunpack.c.h.b16 %v2190
          %v2932 = vunpack.c.l.b16 %v2191
          %v2933 = vunpack.c.l.b16 %v2192
          %v2934 = vunpack.c.h.b16 %v2192
          %v2935 = vunpack.c.l.b16 %v2193
          %v2936 = vunpack.c.l.b16 %v2194
          %v2937 = vunpack.c.h.b16 %v2194
          %v2938 = vunpack.c.l.b16 %v2195
          %v2939 = vunpack.c.l.b16 %v2196
          %v2940 = vunpack.c.h.b16 %v2196
          %v2941 = vunpack.c.l.b16 %v2197
          %v2942 = vunpack.c.l.b16 %v2198
          %v2943 = vunpack.c.h.b16 %v2198
          %v2944 = vunpack.c.l.b16 %v2199
          %v2945 = vunpack.c.l.b16 %v2200
          %v2946 = vunpack.c.h.b16 %v2200
          %v2947 = vunpack.c.l.b16 %v2201
          %v2948 = vunpack.c.l.b16 %v2202
          %v2949 = vunpack.c.h.b16 %v2202
          %v2950 = vunpack.c.l.b16 %v2203
          %v2951 = vunpack.c.l.b16 %v2204
          %v2952 = vunpack.c.h.b16 %v2204
          %v2953 = vunpack.c.l.b16 %v2205
          %v2954 = vunpack.c.l.b16 %v2206
          %v2955 = vunpack.c.h.b16 %v2206
          %v2956 = vunpack.c.l.b16 %v2207
          %v2957 = vunpack.c.l.b16 %v2208
          %v2958 = vunpack.c.h.b16 %v2208
          %v2959 = vunpack.c.l.b16 %v2209
          %v2960 = vunpack.c.l.b16 %v2210
          %v2961 = vunpack.c.h.b16 %v2210
          %v2962 = vunpack.c.l.b16 %v2211
          %v2963 = vunpack.c.l.b16 %v2212
          %v2964 = vunpack.c.h.b16 %v2212
          %v2965 = vunpack.c.l.b16 %v2213
          %v2966 = vunpack.c.l.b16 %v2214
          %v2967 = vunpack.c.h.b16 %v2214
          %v2968 = vunpack.c.l.b16 %v2215
          %v2969 = vunpack.c.l.b16 %v2216
          %v2970 = vunpack.c.h.b16 %v2216
          %v2971 = vunpack.c.l.b16 %v2217
          %v2972 = vunpack.c.l.b16 %v2218
          %v2973 = vunpack.c.h.b16 %v2218
          %v2974 = vunpack.c.l.b16 %v2219
          %v2975 = vunpack.c.l.b16 %v2220
          %v2976 = vunpack.c.h.b16 %v2220
          %v2977 = vunpack.c.l.b16 %v2221
          %v2978 = vunpack.c.l.b16 %v2222
          %v2979 = vunpack.c.h.b16 %v2222
          %v2980 = vunpack.c.l.b16 %v2223
          %v2981 = vunpack.c.l.b16 %v2224
          %v2982 = vunpack.c.h.b16 %v2224
          %v2983 = vunpack.c.l.b16 %v2225
          %v2984 = vunpack.c.l.b16 %v2226
          %v2985 = vunpack.c.h.b16 %v2226
          %v2986 = vunpack.c.l.b16 %v2227
          %v2987 = vunpack.c.l.b16 %v2228
          %v2988 = vunpack.c.h.b16 %v2228
          %v2989 = vunpack.c.l.b16 %v2229
          %v2990 = vunpack.c.l.b16 %v2230
          %v2991 = vunpack.c.h.b16 %v2230
          %v2992 = vunpack.c.l.b16 %v2231
          %v2993 = vunpack.c.l.b16 %v2232
          %v2994 = vunpack.c.h.b16 %v2232
          %v2995 = vunpack.c.l.b16 %v2233
          %v2996 = vunpack.c.l.b16 %v2234
          %v2997 = vunpack.c.h.b16 %v2234
          %v2998 = vunpack.c.l.b16 %v2235
          %v2999 = vunpack.c.l.b16 %v2236
          %v3000 = vunpack.c.h.b16 %v2236
          %v3001 = vunpack.c.l.b16 %v2237
          %v3002 = vunpack.c.l.b16 %v2238
          %v3003 = vunpack.c.h.b16 %v2238
          %v3004 = vunpack.c.l.b16 %v2239
          %v3005 = vunpack.c.l.b16 %v2240
          %v3006 = vunpack.c.h.b16 %v2240
          %v3007 = vunpack.c.l.b16 %v2241
          %v3008 = vunpack.c.l.b16 %v2242
          %v3009 = vunpack.c.h.b16 %v2242
          %v3010 = vunpack.c.l.b16 %v2243
          %v3011 = vunpack.c.l.b16 %v2244
          %v3012 = vunpack.c.h.b16 %v2244
          %v3013 = vunpack.c.l.b16 %v2245
          %v3014 = vunpack.c.l.b16 %v2246
          %v3015 = vunpack.c.h.b16 %v2246
          %v3016 = vunpack.c.l.b16 %v2247
          %v3017 = vunpack.c.l.b16 %v2248
          %v3018 = vunpack.c.h.b16 %v2248
          %v3019 = vunpack.c.l.b16 %v2249
          %v3020 = vunpack.c.l.b16 %v2250
          %v3021 = vunpack.c.h.b16 %v2250
          %v3022 = vunpack.c.l.b16 %v2251
          %v3023 = vunpack.c.l.b16 %v2252
          %v3024 = vunpack.c.h.b16 %v2252
          %v3025 = vunpack.c.l.b16 %v2253
          %v3026 = vunpack.c.l.b16 %v2254
          %v3027 = vunpack.c.h.b16 %v2254
          %v3028 = vunpack.c.l.b16 %v2255
          %v3029 = vunpack.c.l.b16 %v2256
          %v3030 = vunpack.c.h.b16 %v2256
          %v3031 = vunpack.c.l.b16 %v2257
          %v3032 = vunpack.c.l.b16 %v2258
          %v3033 = vunpack.c.h.b16 %v2258
          %v3034 = vunpack.c.l.b16 %v2259
          %v3035 = vunpack.c.l.b16 %v2260
          %v3036 = vunpack.c.h.b16 %v2260
          %v3037 = vunpack.c.l.b16 %v2261
          %v3038 = vunpack.c.l.b16 %v2262
          %v3039 = vunpack.c.h.b16 %v2262
          %v3040 = vunpack.c.l.b16 %v2263
          %v3041 = vunpack.c.l.b16 %v2264
          %v3042 = vunpack.c.h.b16 %v2264
          %v3043 = vunpack.c.l.b16 %v2265
          %v3044 = vunpack.c.l.b16 %v2266
          %v3045 = vunpack.c.h.b16 %v2266
          %v3046 = vunpack.c.l.b16 %v2267
          %v3047 = vunpack.c.l.b16 %v2268
          %v3048 = vunpack.c.h.b16 %v2268
          %v3049 = vunpack.c.l.b16 %v2269
          %v3050 = vunpack.c.l.b16 %v2270
          %v3051 = vunpack.c.h.b16 %v2270
          %v3052 = vunpack.c.l.b16 %v2271
          %v3053 = vunpack.c.l.b16 %v2272
          %v3054 = vunpack.c.h.b16 %v2272
          %v3055 = vunpack.c.l.b16 %v2273
          %v3056 = vunpack.c.l.b16 %v2274
          %v3057 = vunpack.c.h.b16 %v2274
          %v3058 = vunpack.c.l.b16 %v2275
          %v3059 = vunpack.c.l.b16 %v2276
          %v3060 = vunpack.c.h.b16 %v2276
          %v3061 = vunpack.c.l.b16 %v2277
          %v3062 = vunpack.c.l.b16 %v2278
          %v3063 = vunpack.c.h.b16 %v2278
          %v3064 = vunpack.c.l.b16 %v2279
          %v3065 = vunpack.c.l.b16 %v2280
          %v3066 = vunpack.c.h.b16 %v2280
          %v3067 = vunpack.c.l.b16 %v2281
          %v3068 = vunpack.c.l.b16 %v2282
          %v3069 = vunpack.c.h.b16 %v2282
          %v3070 = vunpack.c.l.b16 %v2283
          %v3071 = vunpack.c.l.b16 %v2284
          %v3072 = vunpack.c.h.b16 %v2284
          %v3073 = vunpack.c.l.b16 %v2285
          %v3074 = vunpack.c.l.b16 %v2286
          %v3075 = vunpack.c.h.b16 %v2286
          %v3076 = vunpack.c.l.b16 %v2287
          %v3077 = vunpack.c.l.b16 %v2288
          %v3078 = vunpack.c.h.b16 %v2288
          %v3079 = vunpack.c.l.b16 %v2289
          %v3080 = vunpack.c.l.b16 %v2290
          %v3081 = vunpack.c.h.b16 %v2290
          %v3082 = vunpack.c.l.b16 %v2291
          %v3083 = vunpack.c.l.b16 %v2292
          %v3084 = vunpack.c.h.b16 %v2292
          %v3085 = vunpack.c.l.b16 %v2293
          %v3086 = vunpack.c.l.b16 %v2294
          %v3087 = vunpack.c.h.b16 %v2294
          %v3088 = vunpack.c.l.b16 %v2295
          %v3089 = vunpack.c.l.b16 %v2296
          %v3090 = vunpack.c.h.b16 %v2296
          %v3091 = vunpack.c.l.b16 %v2297
          %v3092 = vunpack.c.l.b16 %v2298
          %v3093 = vunpack.c.h.b16 %v2298
          %v3094 = vunpack.c.l.b16 %v2299
          %v3095 = vunpack.c.l.b16 %v2300
          %v3096 = vunpack.c.h.b16 %v2300
          %v3097 = vunpack.c.l.b16 %v2301
          %v3098 = vunpack.c.l.b16 %v2302
          %v3099 = vunpack.c.h.b16 %v2302
          %v3100 = vunpack.c.l.b16 %v2303
          %v3101 = vunpack.c.l.b16 %v2304
          %v3102 = vunpack.c.h.b16 %v2304
          %v3103 = vunpack.c.l.b16 %v2305
          %v3104 = vunpack.c.l.b16 %v2306
          %v3105 = vunpack.c.h.b16 %v2306
          %v3106 = vunpack.c.l.b16 %v2307
          %v3107 = vunpack.c.l.b16 %v2308
          %v3108 = vunpack.c.h.b16 %v2308
          %v3109 = vunpack.c.l.b16 %v2309
          %v3110 = vunpack.c.l.b16 %v2310
          %v3111 = vunpack.c.h.b16 %v2310
          %v3112 = vunpack.c.l.b16 %v2311
          %v3113 = vpack.c.b16 %v2636, %v2633
          %v3114 = vpack.c.b16 %v2637, %v2634
          %v3115 = vpack.c.b16 %v2638, %v2635
          %v3116 = vpack.c.b16 %v2642, %v2639
          %v3117 = vpack.c.b16 %v2643, %v2640
          %v3118 = vpack.c.b16 %v2644, %v2641
          %v3119 = vpack.c.b16 %v2648, %v2645
          %v3120 = vpack.c.b16 %v2649, %v2646
          %v3121 = vpack.c.b16 %v2650, %v2647
          %v3122 = vpack.c.b16 %v2654, %v2651
          %v3123 = vpack.c.b16 %v2655, %v2652
          %v3124 = vpack.c.b16 %v2656, %v2653
          %v3125 = vpack.c.b16 %v2660, %v2657
          %v3126 = vpack.c.b16 %v2661, %v2658
          %v3127 = vpack.c.b16 %v2662, %v2659
          %v3128 = vpack.c.b16 %v2666, %v2663
          %v3129 = vpack.c.b16 %v2667, %v2664
          %v3130 = vpack.c.b16 %v2668, %v2665
          %v3131 = vpack.c.b16 %v2672, %v2669
          %v3132 = vpack.c.b16 %v2673, %v2670
          %v3133 = vpack.c.b16 %v2674, %v2671
          %v3134 = vpack.c.b16 %v2678, %v2675
          %v3135 = vpack.c.b16 %v2679, %v2676
          %v3136 = vpack.c.b16 %v2680, %v2677
          %v3137 = vpack.c.b16 %v2684, %v2681
          %v3138 = vpack.c.b16 %v2685, %v2682
          %v3139 = vpack.c.b16 %v2686, %v2683
          %v3140 = vpack.c.b16 %v2690, %v2687
          %v3141 = vpack.c.b16 %v2691, %v2688
          %v3142 = vpack.c.b16 %v2692, %v2689
          %v3143 = vpack.c.b16 %v2696, %v2693
          %v3144 = vpack.c.b16 %v2697, %v2694
          %v3145 = vpack.c.b16 %v2698, %v2695
          %v3146 = vpack.c.b16 %v2702, %v2699
          %v3147 = vpack.c.b16 %v2703, %v2700
          %v3148 = vpack.c.b16 %v2704, %v2701
          %v3149 = vpack.c.b16 %v2708, %v2705
          %v3150 = vpack.c.b16 %v2709, %v2706
          %v3151 = vpack.c.b16 %v2710, %v2707
          %v3152 = vpack.c.b16 %v2714, %v2711
          %v3153 = vpack.c.b16 %v2715, %v2712
          %v3154 = vpack.c.b16 %v2716, %v2713
          %v3155 = vpack.c.b16 %v2720, %v2717
          %v3156 = vpack.c.b16 %v2721, %v2718
          %v3157 = vpack.c.b16 %v2722, %v2719
          %v3158 = vpack.c.b16 %v2726, %v2723
          %v3159 = vpack.c.b16 %v2727, %v2724
          %v3160 = vpack.c.b16 %v2728, %v2725
          %v3161 = vpack.c.b16 %v2732, %v2729
          %v3162 = vpack.c.b16 %v2733, %v2730
          %v3163 = vpack.c.b16 %v2734, %v2731
          %v3164 = vpack.c.b16 %v2738, %v2735
          %v3165 = vpack.c.b16 %v2739, %v2736
          %v3166 = vpack.c.b16 %v2740, %v2737
          %v3167 = vpack.c.b16 %v2744, %v2741
          %v3168 = vpack.c.b16 %v2745, %v2742
          %v3169 = vpack.c.b16 %v2746, %v2743
          %v3170 = vpack.c.b16 %v2750, %v2747
          %v3171 = vpack.c.b16 %v2751, %v2748
          %v3172 = vpack.c.b16 %v2752, %v2749
          %v3173 = vpack.c.b16 %v2756, %v2753
          %v3174 = vpack.c.b16 %v2757, %v2754
          %v3175 = vpack.c.b16 %v2758, %v2755
          %v3176 = vpack.c.b16 %v2762, %v2759
          %v3177 = vpack.c.b16 %v2763, %v2760
          %v3178 = vpack.c.b16 %v2764, %v2761
          %v3179 = vpack.c.b16 %v2768, %v2765
          %v3180 = vpack.c.b16 %v2769, %v2766
          %v3181 = vpack.c.b16 %v2770, %v2767
          %v3182 = vpack.c.b16 %v2774, %v2771
          %v3183 = vpack.c.b16 %v2775, %v2772
          %v3184 = vpack.c.b16 %v2776, %v2773
          %v3185 = vpack.c.b16 %v2780, %v2777
          %v3186 = vpack.c.b16 %v2781, %v2778
          %v3187 = vpack.c.b16 %v2782, %v2779
          %v3188 = vpack.c.b16 %v2786, %v2783
          %v3189 = vpack.c.b16 %v2787, %v2784
          %v3190 = vpack.c.b16 %v2788, %v2785
          %v3191 = vpack.c.b16 %v2792, %v2789
          %v3192 = vpack.c.b16 %v2793, %v2790
          %v3193 = vpack.c.b16 %v2794, %v2791
          %v3194 = vpack.c.b16 %v2798, %v2795
          %v3195 = vpack.c.b16 %v2799, %v2796
          %v3196 = vpack.c.b16 %v2800, %v2797
          %v3197 = vpack.c.b16 %v2804, %v2801
          %v3198 = vpack.c.b16 %v2805, %v2802
          %v3199 = vpack.c.b16 %v2806, %v2803
          %v3200 = vpack.c.b16 %v2810, %v2807
          %v3201 = vpack.c.b16 %v2811, %v2808
          %v3202 = vpack.c.b16 %v2812, %v2809
          %v3203 = vpack.c.b16 %v2816, %v2813
          %v3204 = vpack.c.b16 %v2817, %v2814
          %v3205 = vpack.c.b16 %v2818, %v2815
          %v3206 = vpack.c.b16 %v2822, %v2819
          %v3207 = vpack.c.b16 %v2823, %v2820
          %v3208 = vpack.c.b16 %v2824, %v2821
          %v3209 = vpack.c.b16 %v2828, %v2825
          %v3210 = vpack.c.b16 %v2829, %v2826
          %v3211 = vpack.c.b16 %v2830, %v2827
          %v3212 = vpack.c.b16 %v2834, %v2831
          %v3213 = vpack.c.b16 %v2835, %v2832
          %v3214 = vpack.c.b16 %v2836, %v2833
          %v3215 = vpack.c.b16 %v2840, %v2837
          %v3216 = vpack.c.b16 %v2841, %v2838
          %v3217 = vpack.c.b16 %v2842, %v2839
          %v3218 = vpack.c.b16 %v2846, %v2843
          %v3219 = vpack.c.b16 %v2847, %v2844
          %v3220 = vpack.c.b16 %v2848, %v2845
          %v3221 = vpack.c.b16 %v2852, %v2849
          %v3222 = vpack.c.b16 %v2853, %v2850
          %v3223 = vpack.c.b16 %v2854, %v2851
          %v3224 = vpack.c.b16 %v2858, %v2855
          %v3225 = vpack.c.b16 %v2859, %v2856
          %v3226 = vpack.c.b16 %v2860, %v2857
          %v3227 = vpack.c.b16 %v2864, %v2861
          %v3228 = vpack.c.b16 %v2865, %v2862
          %v3229 = vpack.c.b16 %v2866, %v2863
          %v3230 = vpack.c.b16 %v2870, %v2867
          %v3231 = vpack.c.b16 %v2871, %v2868
          %v3232 = vpack.c.b16 %v2872, %v2869
          %v3233 = vpack.c.b16 %v2876, %v2873
          %v3234 = vpack.c.b16 %v2877, %v2874
          %v3235 = vpack.c.b16 %v2878, %v2875
          %v3236 = vpack.c.b16 %v2882, %v2879
          %v3237 = vpack.c.b16 %v2883, %v2880
          %v3238 = vpack.c.b16 %v2884, %v2881
          %v3239 = vpack.c.b16 %v2888, %v2885
          %v3240 = vpack.c.b16 %v2889, %v2886
          %v3241 = vpack.c.b16 %v2890, %v2887
          %v3242 = vpack.c.b16 %v2894, %v2891
          %v3243 = vpack.c.b16 %v2895, %v2892
          %v3244 = vpack.c.b16 %v2896, %v2893
          %v3245 = vpack.c.b16 %v2900, %v2897
          %v3246 = vpack.c.b16 %v2901, %v2898
          %v3247 = vpack.c.b16 %v2902, %v2899
          %v3248 = vpack.c.b16 %v2906, %v2903
          %v3249 = vpack.c.b16 %v2907, %v2904
          %v3250 = vpack.c.b16 %v2908, %v2905
          %v3251 = vpack.c.b16 %v2912, %v2909
          %v3252 = vpack.c.b16 %v2913, %v2910
          %v3253 = vpack.c.b16 %v2914, %v2911
          %v3254 = vpack.c.b16 %v2918, %v2915
          %v3255 = vpack.c.b16 %v2919, %v2916
          %v3256 = vpack.c.b16 %v2920, %v2917
          %v3257 = vpack.c.b16 %v2924, %v2921
          %v3258 = vpack.c.b16 %v2925, %v2922
          %v3259 = vpack.c.b16 %v2926, %v2923
          %v3260 = vpack.c.b16 %v2930, %v2927
          %v3261 = vpack.c.b16 %v2931, %v2928
          %v3262 = vpack.c.b16 %v2932, %v2929
          %v3263 = vpack.c.b16 %v2936, %v2933
          %v3264 = vpack.c.b16 %v2937, %v2934
          %v3265 = vpack.c.b16 %v2938, %v2935
          %v3266 = vpack.c.b16 %v2942, %v2939
          %v3267 = vpack.c.b16 %v2943, %v2940
          %v3268 = vpack.c.b16 %v2944, %v2941
          %v3269 = vpack.c.b16 %v2948, %v2945
          %v3270 = vpack.c.b16 %v2949, %v2946
          %v3271 = vpack.c.b16 %v2950, %v2947
          %v3272 = vpack.c.b16 %v2954, %v2951
          %v3273 = vpack.c.b16 %v2955, %v2952
          %v3274 = vpack.c.b16 %v2956, %v2953
          %v3275 = vpack.c.b16 %v2960, %v2957
          %v3276 = vpack.c.b16 %v2961, %v2958
          %v3277 = vpack.c.b16 %v2962, %v2959
          %v3278 = vpack.c.b16 %v2966, %v2963
          %v3279 = vpack.c.b16 %v2967, %v2964
          %v3280 = vpack.c.b16 %v2968, %v2965
          %v3281 = vpack.c.b16 %v2972, %v2969
          %v3282 = vpack.c.b16 %v2973, %v2970
          %v3283 = vpack.c.b16 %v2974, %v2971
          %v3284 = vpack.c.b16 %v2978, %v2975
          %v3285 = vpack.c.b16 %v2979, %v2976
          %v3286 = vpack.c.b16 %v2980, %v2977
          %v3287 = vpack.c.b16 %v2984, %v2981
          %v3288 = vpack.c.b16 %v2985, %v2982
          %v3289 = vpack.c.b16 %v2986, %v2983
          %v3290 = vpack.c.b16 %v2990, %v2987
          %v3291 = vpack.c.b16 %v2991, %v2988
          %v3292 = vpack.c.b16 %v2992, %v2989
          %v3293 = vpack.c.b16 %v2996, %v2993
          %v3294 = vpack.c.b16 %v2997, %v2994
          %v3295 = vpack.c.b16 %v2998, %v2995
          %v3296 = vpack.c.b16 %v3002, %v2999
          %v3297 = vpack.c.b16 %v3003, %v3000
          %v3298 = vpack.c.b16 %v3004, %v3001
          %v3299 = vpack.c.b16 %v3008, %v3005
          %v3300 = vpack.c.b16 %v3009, %v3006
          %v3301 = vpack.c.b16 %v3010, %v3007
          %v3302 = vpack.c.b16 %v3014, %v3011
          %v3303 = vpack.c.b16 %v3015, %v3012
          %v3304 = vpack.c.b16 %v3016, %v3013
          %v3305 = vpack.c.b16 %v3020, %v3017
          %v3306 = vpack.c.b16 %v3021, %v3018
          %v3307 = vpack.c.b16 %v3022, %v3019
          %v3308 = vpack.c.b16 %v3026, %v3023
          %v3309 = vpack.c.b16 %v3027, %v3024
          %v3310 = vpack.c.b16 %v3028, %v3025
          %v3311 = vpack.c.b16 %v3032, %v3029
          %v3312 = vpack.c.b16 %v3033, %v3030
          %v3313 = vpack.c.b16 %v3034, %v3031
          %v3314 = vpack.c.b16 %v3038, %v3035
          %v3315 = vpack.c.b16 %v3039, %v3036
          %v3316 = vpack.c.b16 %v3040, %v3037
          %v3317 = vpack.c.b16 %v3044, %v3041
          %v3318 = vpack.c.b16 %v3045, %v3042
          %v3319 = vpack.c.b16 %v3046, %v3043
          %v3320 = vpack.c.b16 %v3050, %v3047
          %v3321 = vpack.c.b16 %v3051, %v3048
          %v3322 = vpack.c.b16 %v3052, %v3049
          %v3323 = vpack.c.b16 %v3056, %v3053
          %v3324 = vpack.c.b16 %v3057, %v3054
          %v3325 = vpack.c.b16 %v3058, %v3055
          %v3326 = vpack.c.b16 %v3062, %v3059
          %v3327 = vpack.c.b16 %v3063, %v3060
          %v3328 = vpack.c.b16 %v3064, %v3061
          %v3329 = vpack.c.b16 %v3068, %v3065
          %v3330 = vpack.c.b16 %v3069, %v3066
          %v3331 = vpack.c.b16 %v3070, %v3067
          %v3332 = vpack.c.b16 %v3074, %v3071
          %v3333 = vpack.c.b16 %v3075, %v3072
          %v3334 = vpack.c.b16 %v3076, %v3073
          %v3335 = vpack.c.b16 %v3080, %v3077
          %v3336 = vpack.c.b16 %v3081, %v3078
          %v3337 = vpack.c.b16 %v3082, %v3079
          %v3338 = vpack.c.b16 %v3086, %v3083
          %v3339 = vpack.c.b16 %v3087, %v3084
          %v3340 = vpack.c.b16 %v3088, %v3085
          %v3341 = vpack.c.b16 %v3092, %v3089
          %v3342 = vpack.c.b16 %v3093, %v3090
          %v3343 = vpack.c.b16 %v3094, %v3091
          %v3344 = vpack.c.b16 %v3098, %v3095
          %v3345 = vpack.c.b16 %v3099, %v3096
          %v3346 = vpack.c.b16 %v3100, %v3097
          %v3347 = vpack.c.b16 %v3104, %v3101
          %v3348 = vpack.c.b16 %v3105, %v3102
          %v3349 = vpack.c.b16 %v3106, %v3103
          %v3350 = vpack.c.b16 %v3110, %v3107
          %v3351 = vpack.c.b16 %v3111, %v3108
          %v3352 = vpack.c.b16 %v3112, %v3109
          %v3594 = vlaneseq
          %v3595 = vshrl.u32 %v3594, 7
          %v3596 = vsub.s32 0, %v3595
          %v3597 = vrot.slane %v2312, %v3596
          %v3598 = vlaneseq
          %v3599 = vshrl.u32 %v3598, 7
          %v3600 = vsub.s32 1, %v3599
          %v3601 = vrot.slane %v2312, %v3600
          %v3602 = vlaneseq
          %v3603 = vshrl.u32 %v3602, 7
          %v3604 = vsub.s32 2, %v3603
          %v3605 = vrot.slane %v2312, %v3604
          %3609 = vmatprep.subr.bf16.mxu0 %v3114
          %3610 = vmatpush1.bf16.msra.mxu0 %v3113
          %3611 = vmatprep.subr.bf16.mxu0 %v3117
          %3612 = vmatpush1.bf16.msra.mxu0 %v3116
          %3613 = vmatprep.subr.bf16.mxu0 %v3120
          %3614 = vmatpush1.bf16.msra.mxu0 %v3119
          %3615 = vmatprep.subr.bf16.mxu0 %v3123
          %3616 = vmatpush1.bf16.msra.mxu0 %v3122
          %3617 = vmatprep.subr.bf16.mxu0 %v3126
          %3618 = vmatpush1.bf16.msra.mxu0 %v3125
          %3619 = vmatprep.subr.bf16.mxu0 %v3129
          %3620 = vmatpush1.bf16.msra.mxu0 %v3128
          %3621 = vmatprep.subr.bf16.mxu0 %v3132
          %3622 = vmatpush1.bf16.msra.mxu0 %v3131
          %3623 = vmatprep.subr.bf16.mxu0 %v3135
          %3624 = vmatpush1.bf16.msra.mxu0 %v3134
          %3625 = vmatprep.subr.bf16.mxu0 %v3138
          %3626 = vmatpush1.bf16.msra.mxu0 %v3137
          %3627 = vmatprep.subr.bf16.mxu0 %v3141
          %3628 = vmatpush1.bf16.msra.mxu0 %v3140
          %3629 = vmatprep.subr.bf16.mxu0 %v3144
          %3630 = vmatpush1.bf16.msra.mxu0 %v3143
          %3631 = vmatprep.subr.bf16.mxu0 %v3147
          %3632 = vmatpush1.bf16.msra.mxu0 %v3146
          %3633 = vmatprep.subr.bf16.mxu0 %v3150
          %3634 = vmatpush1.bf16.msra.mxu0 %v3149
          %3635 = vmatprep.subr.bf16.mxu0 %v3153
          %3636 = vmatpush1.bf16.msra.mxu0 %v3152
          %3637 = vmatprep.subr.bf16.mxu0 %v3156
          %3638 = vmatpush1.bf16.msra.mxu0 %v3155
          %3639 = vmatprep.subr.bf16.mxu0 %v3159
          %3640 = vmatpush1.bf16.msra.mxu0 %v3158
          %3641 = vmatprep.mubr.bf16.mxu0 %v1983
          %3642 = vmatmul.mubr.bf16.gmra.mrb[0].mxu0 %v1982
          %v3643 = vpop.f32.mrb[0].mxu0
          %v3644 = vadd.f32 %v3597, %v3643
          %v3645 = vpop.f32.mrb[0].mxu0
          %v3646 = vadd.f32 %v3601, %v3645
          %v3647 = vpop.f32.mrb[0].mxu0
          %v3648 = vpop.f32.mrb[0].mxu0
          %3649 = vdwg.mxu0
          %3650 = vmatprep.subr.bf16.mxu0 %v3162
          %3651 = vmatpush1.bf16.msra.mxu0 %v3161
          %3652 = vmatprep.subr.bf16.mxu0 %v3165
          %3653 = vmatpush1.bf16.msra.mxu0 %v3164
          %3654 = vmatprep.subr.bf16.mxu0 %v3168
          %3655 = vmatpush1.bf16.msra.mxu0 %v3167
          %3656 = vmatprep.subr.bf16.mxu0 %v3171
          %3657 = vmatpush1.bf16.msra.mxu0 %v3170
          %3658 = vmatprep.subr.bf16.mxu0 %v3174
          %3659 = vmatpush1.bf16.msra.mxu0 %v3173
          %3660 = vmatprep.subr.bf16.mxu0 %v3177
          %3661 = vmatpush1.bf16.msra.mxu0 %v3176
          %3662 = vmatprep.subr.bf16.mxu0 %v3180
          %3663 = vmatpush1.bf16.msra.mxu0 %v3179
          %3664 = vmatprep.subr.bf16.mxu0 %v3183
          %3665 = vmatpush1.bf16.msra.mxu0 %v3182
          %3666 = vmatprep.subr.bf16.mxu0 %v3186
          %3667 = vmatpush1.bf16.msra.mxu0 %v3185
          %3668 = vmatprep.subr.bf16.mxu0 %v3189
          %3669 = vmatpush1.bf16.msra.mxu0 %v3188
          %3670 = vmatprep.subr.bf16.mxu0 %v3192
          %3671 = vmatpush1.bf16.msra.mxu0 %v3191
          %3672 = vmatprep.subr.bf16.mxu0 %v3195
          %3673 = vmatpush1.bf16.msra.mxu0 %v3194
          %3674 = vmatprep.subr.bf16.mxu0 %v3198
          %3675 = vmatpush1.bf16.msra.mxu0 %v3197
          %3676 = vmatprep.subr.bf16.mxu0 %v3201
          %3677 = vmatpush1.bf16.msra.mxu0 %v3200
          %3678 = vmatprep.subr.bf16.mxu0 %v3204
          %3679 = vmatpush1.bf16.msra.mxu0 %v3203
          %3680 = vmatprep.subr.bf16.mxu0 %v3207
          %3681 = vmatpush1.bf16.msra.mxu0 %v3206
          %3682 = vmatprep.mubr.bf16.mxu0 %v1985
          %3683 = vmatmul.mubr.bf16.gmra.mrb[0].mxu0 %v1984
          %v3684 = vpop.f32.mrb[0].mxu0
          %v3685 = vadd.f32 %v3644, %v3684
          %v3686 = vpop.f32.mrb[0].mxu0
          %v3687 = vadd.f32 %v3646, %v3686
          %v3688 = vpop.f32.mrb[0].mxu0
          %v3689 = vpop.f32.mrb[0].mxu0
          %3690 = vdwg.mxu0
          %3691 = vmatprep.subr.bf16.mxu0 %v3210
          %3692 = vmatpush1.bf16.msra.mxu0 %v3209
          %3693 = vmatprep.subr.bf16.mxu0 %v3213
          %3694 = vmatpush1.bf16.msra.mxu0 %v3212
          %3695 = vmatprep.subr.bf16.mxu0 %v3216
          %3696 = vmatpush1.bf16.msra.mxu0 %v3215
          %3697 = vmatprep.subr.bf16.mxu0 %v3219
          %3698 = vmatpush1.bf16.msra.mxu0 %v3218
          %3699 = vmatprep.subr.bf16.mxu0 %v3222
          %3700 = vmatpush1.bf16.msra.mxu0 %v3221
          %3701 = vmatprep.subr.bf16.mxu0 %v3225
          %3702 = vmatpush1.bf16.msra.mxu0 %v3224
          %3703 = vmatprep.subr.bf16.mxu0 %v3228
          %3704 = vmatpush1.bf16.msra.mxu0 %v3227
          %3705 = vmatprep.subr.bf16.mxu0 %v3231
          %3706 = vmatpush1.bf16.msra.mxu0 %v3230
          %3707 = vmatprep.subr.bf16.mxu0 %v3234
          %3708 = vmatpush1.bf16.msra.mxu0 %v3233
          %3709 = vmatprep.subr.bf16.mxu0 %v3237
          %3710 = vmatpush1.bf16.msra.mxu0 %v3236
          %3711 = vmatprep.subr.bf16.mxu0 %v3240
          %3712 = vmatpush1.bf16.msra.mxu0 %v3239
          %3713 = vmatprep.subr.bf16.mxu0 %v3243
          %3714 = vmatpush1.bf16.msra.mxu0 %v3242
          %3715 = vmatprep.subr.bf16.mxu0 %v3246
          %3716 = vmatpush1.bf16.msra.mxu0 %v3245
          %3717 = vmatprep.subr.bf16.mxu0 %v3249
          %3718 = vmatpush1.bf16.msra.mxu0 %v3248
          %3719 = vmatprep.subr.bf16.mxu0 %v3252
          %3720 = vmatpush1.bf16.msra.mxu0 %v3251
          %3721 = vmatprep.subr.bf16.mxu0 %v3255
          %3722 = vmatpush1.bf16.msra.mxu0 %v3254
          %3723 = vmatprep.mubr.bf16.mxu0 %v1987
          %3724 = vmatmul.mubr.bf16.gmra.mrb[0].mxu0 %v1986
          %v3725 = vpop.f32.mrb[0].mxu0
          %v3726 = vadd.f32 %v3685, %v3725
          %v3727 = vpop.f32.mrb[0].mxu0
          %v3728 = vadd.f32 %v3687, %v3727
          %v3729 = vpop.f32.mrb[0].mxu0
          %v3730 = vpop.f32.mrb[0].mxu0
          %3731 = vdwg.mxu0
          %3732 = vmatprep.subr.bf16.mxu0 %v3258
          %3733 = vmatpush1.bf16.msra.mxu0 %v3257
          %3734 = vmatprep.subr.bf16.mxu0 %v3261
          %3735 = vmatpush1.bf16.msra.mxu0 %v3260
          %3736 = vmatprep.subr.bf16.mxu0 %v3264
          %3737 = vmatpush1.bf16.msra.mxu0 %v3263
          %3738 = vmatprep.subr.bf16.mxu0 %v3267
          %3739 = vmatpush1.bf16.msra.mxu0 %v3266
          %3740 = vmatprep.subr.bf16.mxu0 %v3270
          %3741 = vmatpush1.bf16.msra.mxu0 %v3269
          %3742 = vmatprep.subr.bf16.mxu0 %v3273
          %3743 = vmatpush1.bf16.msra.mxu0 %v3272
          %3744 = vmatprep.subr.bf16.mxu0 %v3276
          %3745 = vmatpush1.bf16.msra.mxu0 %v3275
          %3746 = vmatprep.subr.bf16.mxu0 %v3279
          %3747 = vmatpush1.bf16.msra.mxu0 %v3278
          %3748 = vmatprep.subr.bf16.mxu0 %v3282
          %3749 = vmatpush1.bf16.msra.mxu0 %v3281
          %3750 = vmatprep.subr.bf16.mxu0 %v3285
          %3751 = vmatpush1.bf16.msra.mxu0 %v3284
          %3752 = vmatprep.subr.bf16.mxu0 %v3288
          %3753 = vmatpush1.bf16.msra.mxu0 %v3287
          %3754 = vmatprep.subr.bf16.mxu0 %v3291
          %3755 = vmatpush1.bf16.msra.mxu0 %v3290
          %3756 = vmatprep.subr.bf16.mxu0 %v3294
          %3757 = vmatpush1.bf16.msra.mxu0 %v3293
          %3758 = vmatprep.subr.bf16.mxu0 %v3297
          %3759 = vmatpush1.bf16.msra.mxu0 %v3296
          %3760 = vmatprep.subr.bf16.mxu0 %v3300
          %3761 = vmatpush1.bf16.msra.mxu0 %v3299
          %3762 = vmatprep.subr.bf16.mxu0 %v3303
          %3763 = vmatpush1.bf16.msra.mxu0 %v3302
          %3764 = vmatprep.mubr.bf16.mxu0 %v1989
          %3765 = vmatmul.mubr.bf16.gmra.mrb[0].mxu0 %v1988
          %v3766 = vpop.f32.mrb[0].mxu0
          %v3767 = vadd.f32 %v3726, %v3766
          %v3768 = vpop.f32.mrb[0].mxu0
          %v3769 = vadd.f32 %v3728, %v3768
          %v3770 = vpop.f32.mrb[0].mxu0
          %v3771 = vpop.f32.mrb[0].mxu0
          %3772 = vdwg.mxu0
          %3773 = vmatprep.subr.bf16.mxu0 %v3306
          %3774 = vmatpush1.bf16.msra.mxu0 %v3305
          %3775 = vmatprep.subr.bf16.mxu0 %v3309
          %3776 = vmatpush1.bf16.msra.mxu0 %v3308
          %3777 = vmatprep.subr.bf16.mxu0 %v3312
          %3778 = vmatpush1.bf16.msra.mxu0 %v3311
          %3779 = vmatprep.subr.bf16.mxu0 %v3315
          %3780 = vmatpush1.bf16.msra.mxu0 %v3314
          %3781 = vmatprep.subr.bf16.mxu0 %v3318
          %3782 = vmatpush1.bf16.msra.mxu0 %v3317
          %3783 = vmatprep.subr.bf16.mxu0 %v3321
          %3784 = vmatpush1.bf16.msra.mxu0 %v3320
          %3785 = vmatprep.subr.bf16.mxu0 %v3324
          %3786 = vmatpush1.bf16.msra.mxu0 %v3323
          %3787 = vmatprep.subr.bf16.mxu0 %v3327
          %3788 = vmatpush1.bf16.msra.mxu0 %v3326
          %3789 = vmatprep.subr.bf16.mxu0 %v3330
          %3790 = vmatpush1.bf16.msra.mxu0 %v3329
          %3791 = vmatprep.subr.bf16.mxu0 %v3333
          %3792 = vmatpush1.bf16.msra.mxu0 %v3332
          %3793 = vmatprep.subr.bf16.mxu0 %v3336
          %3794 = vmatpush1.bf16.msra.mxu0 %v3335
          %3795 = vmatprep.subr.bf16.mxu0 %v3339
          %3796 = vmatpush1.bf16.msra.mxu0 %v3338
          %3797 = vmatprep.subr.bf16.mxu0 %v3342
          %3798 = vmatpush1.bf16.msra.mxu0 %v3341
          %3799 = vmatprep.subr.bf16.mxu0 %v3345
          %3800 = vmatpush1.bf16.msra.mxu0 %v3344
          %3801 = vmatprep.subr.bf16.mxu0 %v3348
          %3802 = vmatpush1.bf16.msra.mxu0 %v3347
          %3803 = vmatprep.subr.bf16.mxu0 %v3351
          %3804 = vmatpush1.bf16.msra.mxu0 %v3350
          %3805 = vmatprep.mubr.bf16.mxu0 %v1991
          %3806 = vmatmul.mubr.bf16.gmra.mrb[0].mxu0 %v1990
          %v3807 = vpop.f32.mrb[0].mxu0
          %v3808 = vadd.f32 %v3767, %v3807
          %v3809 = vpop.f32.mrb[0].mxu0
          %v3810 = vadd.f32 %v3769, %v3809
          %v3811 = vpop.f32.mrb[0].mxu0
          %v3812 = vpop.f32.mrb[0].mxu0
          %3813 = vdwg.mxu0
          %3814 = vmatprep.subr.bf16.mxu0 0
          %3815 = vmatpush1.bf16.msra.mxu0 %v3115
          %3816 = vmatprep.subr.bf16.mxu0 0
          %3817 = vmatpush1.bf16.msra.mxu0 %v3118
          %3818 = vmatprep.subr.bf16.mxu0 0
          %3819 = vmatpush1.bf16.msra.mxu0 %v3121
          %3820 = vmatprep.subr.bf16.mxu0 0
          %3821 = vmatpush1.bf16.msra.mxu0 %v3124
          %3822 = vmatprep.subr.bf16.mxu0 0
          %3823 = vmatpush1.bf16.msra.mxu0 %v3127
          %3824 = vmatprep.subr.bf16.mxu0 0
          %3825 = vmatpush1.bf16.msra.mxu0 %v3130
          %3826 = vmatprep.subr.bf16.mxu0 0
          %3827 = vmatpush1.bf16.msra.mxu0 %v3133
          %3828 = vmatprep.subr.bf16.mxu0 0
          %3829 = vmatpush1.bf16.msra.mxu0 %v3136
          %3830 = vmatprep.subr.bf16.mxu0 0
          %3831 = vmatpush1.bf16.msra.mxu0 %v3139
          %3832 = vmatprep.subr.bf16.mxu0 0
          %3833 = vmatpush1.bf16.msra.mxu0 %v3142
          %3834 = vmatprep.subr.bf16.mxu0 0
          %3835 = vmatpush1.bf16.msra.mxu0 %v3145
          %3836 = vmatprep.subr.bf16.mxu0 0
          %3837 = vmatpush1.bf16.msra.mxu0 %v3148
          %3838 = vmatprep.subr.bf16.mxu0 0
          %3839 = vmatpush1.bf16.msra.mxu0 %v3151
          %3840 = vmatprep.subr.bf16.mxu0 0
          %3841 = vmatpush1.bf16.msra.mxu0 %v3154
          %3842 = vmatprep.subr.bf16.mxu0 0
          %3843 = vmatpush1.bf16.msra.mxu0 %v3157
          %3844 = vmatprep.subr.bf16.mxu0 0
          %3845 = vmatpush1.bf16.msra.mxu0 %v3160
          %3846 = vmatprep.mubr.bf16.mxu0 %v1983
          %3847 = vmatmul.mubr.bf16.gmra.mrb[0].mxu0 %v1982
          %v3848 = vpop.f32.mrb[0].mxu0
          %v3849 = vadd.f32 %v3605, %v3848
          %v3850 = vpop.f32.mrb[0].mxu0
          %v3851 = vpop.f32.mrb[0].mxu0
          %v3852 = vpop.f32.mrb[0].mxu0
          %3853 = vdwg.mxu0
          %3854 = vmatprep.subr.bf16.mxu0 0
          %3855 = vmatpush1.bf16.msra.mxu0 %v3163
          %3856 = vmatprep.subr.bf16.mxu0 0
          %3857 = vmatpush1.bf16.msra.mxu0 %v3166
          %3858 = vmatprep.subr.bf16.mxu0 0
          %3859 = vmatpush1.bf16.msra.mxu0 %v3169
          %3860 = vmatprep.subr.bf16.mxu0 0
          %3861 = vmatpush1.bf16.msra.mxu0 %v3172
          %3862 = vmatprep.subr.bf16.mxu0 0
          %3863 = vmatpush1.bf16.msra.mxu0 %v3175
          %3864 = vmatprep.subr.bf16.mxu0 0
          %3865 = vmatpush1.bf16.msra.mxu0 %v3178
          %3866 = vmatprep.subr.bf16.mxu0 0
          %3867 = vmatpush1.bf16.msra.mxu0 %v3181
          %3868 = vmatprep.subr.bf16.mxu0 0
          %3869 = vmatpush1.bf16.msra.mxu0 %v3184
          %3870 = vmatprep.subr.bf16.mxu0 0
          %3871 = vmatpush1.bf16.msra.mxu0 %v3187
          %3872 = vmatprep.subr.bf16.mxu0 0
          %3873 = vmatpush1.bf16.msra.mxu0 %v3190
          %3874 = vmatprep.subr.bf16.mxu0 0
          %3875 = vmatpush1.bf16.msra.mxu0 %v3193
          %3876 = vmatprep.subr.bf16.mxu0 0
          %3877 = vmatpush1.bf16.msra.mxu0 %v3196
          %3878 = vmatprep.subr.bf16.mxu0 0
          %3879 = vmatpush1.bf16.msra.mxu0 %v3199
          %3880 = vmatprep.subr.bf16.mxu0 0
          %3881 = vmatpush1.bf16.msra.mxu0 %v3202
          %3882 = vmatprep.subr.bf16.mxu0 0
          %3883 = vmatpush1.bf16.msra.mxu0 %v3205
          %3884 = vmatprep.subr.bf16.mxu0 0
          %3885 = vmatpush1.bf16.msra.mxu0 %v3208
          %3886 = vmatprep.mubr.bf16.mxu0 %v1985
          %3887 = vmatmul.mubr.bf16.gmra.mrb[0].mxu0 %v1984
          %v3888 = vpop.f32.mrb[0].mxu0
          %v3889 = vadd.f32 %v3849, %v3888
          %v3890 = vpop.f32.mrb[0].mxu0
          %v3891 = vpop.f32.mrb[0].mxu0
          %v3892 = vpop.f32.mrb[0].mxu0
          %3893 = vdwg.mxu0
          %3894 = vmatprep.subr.bf16.mxu0 0
          %3895 = vmatpush1.bf16.msra.mxu0 %v3211
          %3896 = vmatprep.subr.bf16.mxu0 0
          %3897 = vmatpush1.bf16.msra.mxu0 %v3214
          %3898 = vmatprep.subr.bf16.mxu0 0
          %3899 = vmatpush1.bf16.msra.mxu0 %v3217
          %3900 = vmatprep.subr.bf16.mxu0 0
          %3901 = vmatpush1.bf16.msra.mxu0 %v3220
          %3902 = vmatprep.subr.bf16.mxu0 0
          %3903 = vmatpush1.bf16.msra.mxu0 %v3223
          %3904 = vmatprep.subr.bf16.mxu0 0
          %3905 = vmatpush1.bf16.msra.mxu0 %v3226
          %3906 = vmatprep.subr.bf16.mxu0 0
          %3907 = vmatpush1.bf16.msra.mxu0 %v3229
          %3908 = vmatprep.subr.bf16.mxu0 0
          %3909 = vmatpush1.bf16.msra.mxu0 %v3232
          %3910 = vmatprep.subr.bf16.mxu0 0
          %3911 = vmatpush1.bf16.msra.mxu0 %v3235
          %3912 = vmatprep.subr.bf16.mxu0 0
          %3913 = vmatpush1.bf16.msra.mxu0 %v3238
          %3914 = vmatprep.subr.bf16.mxu0 0
          %3915 = vmatpush1.bf16.msra.mxu0 %v3241
          %3916 = vmatprep.subr.bf16.mxu0 0
          %3917 = vmatpush1.bf16.msra.mxu0 %v3244
          %3918 = vmatprep.subr.bf16.mxu0 0
          %3919 = vmatpush1.bf16.msra.mxu0 %v3247
          %3920 = vmatprep.subr.bf16.mxu0 0
          %3921 = vmatpush1.bf16.msra.mxu0 %v3250
          %3922 = vmatprep.subr.bf16.mxu0 0
          %3923 = vmatpush1.bf16.msra.mxu0 %v3253
          %3924 = vmatprep.subr.bf16.mxu0 0
          %3925 = vmatpush1.bf16.msra.mxu0 %v3256
          %3926 = vmatprep.mubr.bf16.mxu0 %v1987
          %3927 = vmatmul.mubr.bf16.gmra.mrb[0].mxu0 %v1986
          %v3928 = vpop.f32.mrb[0].mxu0
          %v3929 = vadd.f32 %v3889, %v3928
          %v3930 = vpop.f32.mrb[0].mxu0
          %v3931 = vpop.f32.mrb[0].mxu0
          %v3932 = vpop.f32.mrb[0].mxu0
          %3933 = vdwg.mxu0
          %3934 = vmatprep.subr.bf16.mxu0 0
          %3935 = vmatpush1.bf16.msra.mxu0 %v3259
          %3936 = vmatprep.subr.bf16.mxu0 0
          %3937 = vmatpush1.bf16.msra.mxu0 %v3262
          %3938 = vmatprep.subr.bf16.mxu0 0
          %3939 = vmatpush1.bf16.msra.mxu0 %v3265
          %3940 = vmatprep.subr.bf16.mxu0 0
          %3941 = vmatpush1.bf16.msra.mxu0 %v3268
          %3942 = vmatprep.subr.bf16.mxu0 0
          %3943 = vmatpush1.bf16.msra.mxu0 %v3271
          %3944 = vmatprep.subr.bf16.mxu0 0
          %3945 = vmatpush1.bf16.msra.mxu0 %v3274
          %3946 = vmatprep.subr.bf16.mxu0 0
          %3947 = vmatpush1.bf16.msra.mxu0 %v3277
          %3948 = vmatprep.subr.bf16.mxu0 0
          %3949 = vmatpush1.bf16.msra.mxu0 %v3280
          %3950 = vmatprep.subr.bf16.mxu0 0
          %3951 = vmatpush1.bf16.msra.mxu0 %v3283
          %3952 = vmatprep.subr.bf16.mxu0 0
          %3953 = vmatpush1.bf16.msra.mxu0 %v3286
          %3954 = vmatprep.subr.bf16.mxu0 0
          %3955 = vmatpush1.bf16.msra.mxu0 %v3289
          %3956 = vmatprep.subr.bf16.mxu0 0
          %3957 = vmatpush1.bf16.msra.mxu0 %v3292
          %3958 = vmatprep.subr.bf16.mxu0 0
          %3959 = vmatpush1.bf16.msra.mxu0 %v3295
          %3960 = vmatprep.subr.bf16.mxu0 0
          %3961 = vmatpush1.bf16.msra.mxu0 %v3298
          %3962 = vmatprep.subr.bf16.mxu0 0
          %3963 = vmatpush1.bf16.msra.mxu0 %v3301
          %3964 = vmatprep.subr.bf16.mxu0 0
          %3965 = vmatpush1.bf16.msra.mxu0 %v3304
          %3966 = vmatprep.mubr.bf16.mxu0 %v1989
          %3967 = vmatmul.mubr.bf16.gmra.mrb[0].mxu0 %v1988
          %v3968 = vpop.f32.mrb[0].mxu0
          %v3969 = vadd.f32 %v3929, %v3968
          %v3970 = vpop.f32.mrb[0].mxu0
          %v3971 = vpop.f32.mrb[0].mxu0
          %v3972 = vpop.f32.mrb[0].mxu0
          %3973 = vdwg.mxu0
          %3974 = vmatprep.subr.bf16.mxu0 0
          %3975 = vmatpush1.bf16.msra.mxu0 %v3307
          %3976 = vmatprep.subr.bf16.mxu0 0
          %3977 = vmatpush1.bf16.msra.mxu0 %v3310
          %3978 = vmatprep.subr.bf16.mxu0 0
          %3979 = vmatpush1.bf16.msra.mxu0 %v3313
          %3980 = vmatprep.subr.bf16.mxu0 0
          %3981 = vmatpush1.bf16.msra.mxu0 %v3316
          %3982 = vmatprep.subr.bf16.mxu0 0
          %3983 = vmatpush1.bf16.msra.mxu0 %v3319
          %3984 = vmatprep.subr.bf16.mxu0 0
          %3985 = vmatpush1.bf16.msra.mxu0 %v3322
          %3986 = vmatprep.subr.bf16.mxu0 0
          %3987 = vmatpush1.bf16.msra.mxu0 %v3325
          %3988 = vmatprep.subr.bf16.mxu0 0
          %3989 = vmatpush1.bf16.msra.mxu0 %v3328
          %3990 = vmatprep.subr.bf16.mxu0 0
          %3991 = vmatpush1.bf16.msra.mxu0 %v3331
          %3992 = vmatprep.subr.bf16.mxu0 0
          %3993 = vmatpush1.bf16.msra.mxu0 %v3334
          %3994 = vmatprep.subr.bf16.mxu0 0
          %3995 = vmatpush1.bf16.msra.mxu0 %v3337
          %3996 = vmatprep.subr.bf16.mxu0 0
          %3997 = vmatpush1.bf16.msra.mxu0 %v3340
          %3998 = vmatprep.subr.bf16.mxu0 0
          %3999 = vmatpush1.bf16.msra.mxu0 %v3343
          %4000 = vmatprep.subr.bf16.mxu0 0
          %4001 = vmatpush1.bf16.msra.mxu0 %v3346
          %4002 = vmatprep.subr.bf16.mxu0 0
          %4003 = vmatpush1.bf16.msra.mxu0 %v3349
          %4004 = vmatprep.subr.bf16.mxu0 0
          %4005 = vmatpush1.bf16.msra.mxu0 %v3352
          %4006 = vmatprep.mubr.bf16.mxu0 %v1991
          %4007 = vmatmul.mubr.bf16.gmra.mrb[0].mxu0 %v1990
          %v4008 = vpop.f32.mrb[0].mxu0
          %v4009 = vadd.f32 %v3969, %v4008
          %v4010 = vpop.f32.mrb[0].mxu0
          %v4011 = vpop.f32.mrb[0].mxu0
          %v4012 = vpop.f32.mrb[0].mxu0
          %4013 = vdwg.mxu0
          %v4017 = vcombine.low %v3808, %v3810
          %v4019 = vunpack.c.l.s4 1966171168
          %v4020 = vunpack.c.0.s8 %v4019
          %v4021 = vlaneseq
          %v4022 = vshrl.u32 %v4021, 7
          %v4023 = vsub.s32 %v4020, %v4022
          %v4024 = vrot.slane %v4017, %v4023
          %v4026 = vunpack.c.l.s4 1966171168
          %v4027 = vunpack.c.0.s8 %v4026
          %v4028 = vlaneseq
          %v4029 = vshrl.u32 %v4028, 7
          %v4030 = vsub.s32 %v4027, %v4029
          %v4031 = vrot.slane %v4009, %v4030
          %v4032 = vcombine.low %v4024, %v4031
          %v4034 = vunpack.c.l.s4 1966171168
          %v4035 = vunpack.c.0.s8 %v4034
          %v4036 = vlaneseq
          %v4037 = vshrl.u32 %v4036, 7
          %v4038 = vsub.s32 %v4035, %v4037
          %v4039 = vrot.slane %v4032, %v4038
          %vm4041 = vcmp.lt.s32.totalorder %v1918, 384
          %vm4042 = vmand %vm1919, %vm4041
          %4043 = vst.msk [vmem:[%s393] sm:$0x7] %vm4042, %v4039
        $region84: #{base_model_forward.1} parent=47 // pred_fallthru
          _
        %s4044 = sand.u32 %s201, 1
        %s4045 = scalar_lea.sflag [#allocation5], %s4044
        %s4046 = sand.u32 %s201, 1
        %s4047 = smul.addr %s4046, 3
        %s4048 = scalar_lea.vmem [#allocation15], %s4047
        // Predicated region
        $region85: #{base_model_forward.1} parent=47 // pred_check
          %p4049 = pneg %p211
        $region86: #{base_model_forward.1} parent=47 // pred_check_branch
          %4051 = sbr.rel (%p4049) target = $region88
        $region87: #{base_model_forward.1} parent=47 // pred_region
          %s4053 = ssub.s32 48, 48
          %4054 = vsyncadd %s4045, %s4053
          %s4055 = smul.addr %s31, 3
          %s4056 = smul.addr %s4055, 16
          %s4057 = scalar_lea.hbm %s7, %s4056
          %s4059 = sshll.u32 %s4048, 4
          %s4060 = int_to_ptr.vmem [resolvable:$true] %s4059
          %4062 = dma.vmem_to_hbm [thread:$0]  %s4060, 48, %s4057, %s4045
        $region88: #{base_model_forward.1} parent=47 // pred_fallthru
          _
      $region48: #{base_model_forward.1} parent=5 // pred_fallthru
        _
      %p4063 = scmp.le.s32.totalorder 2, %s22
      // Predicated region
      $region89: #{base_model_forward.1} parent=5 // pred_check
        %p4064 = pneg %p4063
      $region90: #{base_model_forward.1} parent=5 // pred_check_branch
        %4066 = sbr.rel (%p4064) target = $region92
      $region91: #{base_model_forward.1} parent=5 // pred_region
        %s4067 = ssub.s32 %s22, 2
        // Predicated region
        $region93: #{base_model_forward.1} parent=91 // pred_check
          %p4068 = pneg %p217
        $region94: #{base_model_forward.1} parent=91 // pred_check_branch
          %4070 = sbr.rel (%p4068) target = $region96
        $region95: #{base_model_forward.1} parent=91 // pred_region
          %s4071 = sand.u32 %s202, 1
          %s4072 = scalar_lea.sflag [#allocation5], %s4071
          %s4073 = sand.u32 %s202, 1
          %s4074 = smul.addr %s4073, 3
          %s4075 = scalar_lea.vmem [#allocation15], %s4074
          %4076 = dma.done %s4072, 48
        $region96: #{base_model_forward.1} parent=91 // pred_fallthru
          _
      $region92: #{base_model_forward.1} parent=5 // pred_fallthru
        _
    $region6: #{base_model_forward.1} parent=1 // loop_footer
      %s26 = sadd.s32 1, %s22
    $region7: #{base_model_forward.1} parent=1 // loop_footer_branch
      %21 = sbr.rel target = $region3
    $region8: #{base_model_forward.1} parent=1 // loop_exit
      _
    %4077 = vsyncpa [#allocation4], 1
    %s4078 = scalar_lea.sflag [#allocation4], 1
    %4079 = vsyncpa %s4078, 1
    %4080 = vsyncpa [#allocation7], 1
    %4081 = vsyncpa [#allocation10], 1
    %4082 = vsyncpa [#allocation13], 1
    %4083 = vsyncpa [#allocation5], 1
    %s4084 = scalar_lea.sflag [#allocation5], 1
    %4085 = vsyncpa %s4084, 1

</llo_original>
